<compile_context>
chip_gen: v5e
topology: v5e:2x2
jax: 0.10.0
libtpu: 0.0.40
codegen_flags: <defaults>
</compile_context>

<pallas_src>
import jax
import jax.numpy as jnp
from jax.experimental import pallas as pl
from jax.experimental.pallas import tpu as pltpu

_LANE = 128          # channel tile (lane width)
_SUBLANE = 8
_VREG_BUDGET = 40    # f32 vregs allowed for (accumulator + x window) per tile


def _row_tile(Hz, Ho, Wo, CT):
    """Number of output rows accumulated per in-register tile."""
    vregs_per_row = (-(-Wo // _SUBLANE)) * max(1, CT // _LANE)
    ht = (_VREG_BUDGET // vregs_per_row - (Hz - 1)) // 2
    return max(1, min(Ho, ht))


def _xcorr_depthwise_kernel(z_ref, x_ref, o_ref):
    """Depthwise cross-correlation for one (batch, channel-block) grid step.

    z_ref: (Hz, Wz, CT)  template features
    x_ref: (Hx, Wx, CT)  search features
    o_ref: (Ho, Wo, CT)  with Ho = Hx - Hz + 1, Wo = Wx - Wz + 1
    """
    Hz, Wz, CT = z_ref.shape
    Ho, Wo, _ = o_ref.shape
    HT = _row_tile(Hz, Ho, Wo, CT)

    for r0 in range(0, Ho, HT):                        # output-row tiles
        rows = min(HT, Ho - r0)
        acc = jnp.zeros((rows, Wo, CT), jnp.float32)   # stays in vregs
        for v in range(Wz):                            # template columns
            # One W-window slice per v (hoisted over u): (rows+Hz-1, Wo, CT).
            xw = x_ref[r0:r0 + rows + Hz - 1, v:v + Wo, :]
            for u in range(Hz):                        # template rows
                zuv = z_ref[u, v:v + 1, :]             # (1, CT) tap weights
                # Free leading-axis slice of the in-register window; multiply
                # in the input dtype, accumulate in f32.
                prod = xw[u:u + rows] * zuv
                acc = acc + prod.astype(jnp.float32)
        o_ref[r0:r0 + rows, :, :] = acc.astype(o_ref.dtype)   # one store/tile


def _irca_xcorr_impl(z_f, x_f):
    """Depthwise xcorr head hot path.  Inputs/outputs are NHWC (channels-last).

    z_f: (B, Hz, Wz, C) template features
    x_f: (B, Hx, Wx, C) search features
    returns (B, Ho, Wo, C)
    """
    B, Hz, Wz, C = z_f.shape
    Bx, Hx, Wx, Cx = x_f.shape
    assert B == Bx and C == Cx, "batch / channel mismatch between z_f and x_f"
    Ho, Wo = Hx - Hz + 1, Wx - Wz + 1

    # Lane-dense channel blocks: pad C up to a multiple of 128 and add a
    # channel-block grid axis (also gives the pipeline >1 step at B=1).
    CT = _LANE
    Cp = (-(-C // CT)) * CT
    if Cp != C:
        pad = ((0, 0), (0, 0), (0, 0), (0, Cp - C))
        z_f = jnp.pad(z_f, pad)
        x_f = jnp.pad(x_f, pad)

    out = pl.pallas_call(
        _xcorr_depthwise_kernel,
        out_shape=jax.ShapeDtypeStruct((B, Ho, Wo, Cp), x_f.dtype),
        grid_spec=pltpu.PrefetchScalarGridSpec(
            num_scalar_prefetch=0,
            grid=(B, Cp // CT),
            in_specs=[
                pl.BlockSpec((None, Hz, Wz, CT), lambda b, c: (b, 0, 0, c)),
                pl.BlockSpec((None, Hx, Wx, CT), lambda b, c: (b, 0, 0, c)),
            ],
            out_specs=pl.BlockSpec((None, Ho, Wo, CT), lambda b, c: (b, 0, 0, c)),
        ),
        compiler_params=pltpu.CompilerParams(
            dimension_semantics=("parallel", "parallel")),
    )(z_f, x_f)

    if Cp != C:
        out = out[..., :C]
    return out


irca_forward = jax.jit(_irca_xcorr_impl)


def _reference_xcorr_depthwise(z_f, x_f):
    """Pure-JAX reference (NHWC) for correctness checking."""
    B, Hz, Wz, C = z_f.shape
    _, Hx, Wx, _ = x_f.shape
    Ho, Wo = Hx - Hz + 1, Wx - Wz + 1
    out = jnp.zeros((B, Ho, Wo, C), jnp.float32)
    for u in range(Hz):
        for v in range(Wz):
            out = out + (x_f[:, u:u + Ho, v:v + Wo, :].astype(jnp.float32)
                         * z_f[:, u:u + 1, v:v + 1, :].astype(jnp.float32))
    return out.astype(x_f.dtype)


if __name__ == "__main__":
    key = jax.random.PRNGKey(0)
    kz, kx = jax.random.split(key)

    # Small siamese-head-like shapes: template 8x8, search 16x16, 32 channels.
    B, C = 2, 32
    Hz = Wz = 8
    Hx = Wx = 16

    z_f = jax.random.normal(kz, (B, Hz, Wz, C), dtype=jnp.float32)
    x_f = jax.random.normal(kx, (B, Hx, Wx, C), dtype=jnp.float32)

    out = jax.block_until_ready(irca_forward(z_f, x_f))
    ref = jax.block_until_ready(_reference_xcorr_depthwise(z_f, x_f))

    assert out.shape == (B, Hx - Hz + 1, Wx - Wz + 1, C), out.shape
    assert jnp.allclose(out, ref, atol=1e-4, rtol=1e-4), "mismatch vs reference"

    print("KERNEL_OK")
</pallas_src>

<mosaic_0001>
module attributes {stable_mosaic.version = 11 : i64} {
  func.func @_xcorr_depthwise_kernel(%arg0: i32, %arg1: i32, %arg2: memref<1x8x8x128xf32, #tpu.memory_space<vmem>>, %arg3: memref<1x16x16x128xf32, #tpu.memory_space<vmem>>, %arg4: memref<1x9x9x128xf32, #tpu.memory_space<vmem>>) attributes {dimension_semantics = [#tpu.dimension_semantics<parallel>, #tpu.dimension_semantics<parallel>], iteration_bounds = array<i64: 2, 1>, scalar_prefetch = 0 : i64, scratch_operands = 0 : i64, tpu.core_type = #tpu.core_type<tc>, window_params = [{transform_indices = @transform_0, window_bounds = array<i64: 1, 8, 8, 128>}, {transform_indices = @transform_1, window_bounds = array<i64: 1, 16, 16, 128>}, {transform_indices = @transform_2, window_bounds = array<i64: 1, 9, 9, 128>}]} {
    %cst = arith.constant 0.000000e+00 : f32
    %0 = vector.broadcast %cst : f32 to vector<6x9x128xf32>
    %c0 = arith.constant 0 : index
    %c0_0 = arith.constant 0 : index
    %c0_1 = arith.constant 0 : index
    %c0_2 = arith.constant 0 : index
    %1 = vector.load %arg3[%c0, %c0_0, %c0_1, %c0_2] : memref<1x16x16x128xf32, #tpu.memory_space<vmem>>, vector<1x13x9x128xf32>
    %2 = vector.shape_cast %1 : vector<1x13x9x128xf32> to vector<13x9x128xf32>
    %c0_3 = arith.constant 0 : index
    %c0_4 = arith.constant 0 : index
    %c0_5 = arith.constant 0 : index
    %c0_6 = arith.constant 0 : index
    %3 = vector.load %arg2[%c0_3, %c0_4, %c0_5, %c0_6] : memref<1x8x8x128xf32, #tpu.memory_space<vmem>>, vector<1x1x1x128xf32>
    %4 = vector.shape_cast %3 : vector<1x1x1x128xf32> to vector<1x128xf32>
    %5 = vector.extract_strided_slice %2 {offsets = [0, 0, 0], sizes = [6, 9, 128], strides = [1, 1, 1]} : vector<13x9x128xf32> to vector<6x9x128xf32>
    %6 = vector.shape_cast %4 : vector<1x128xf32> to vector<1x1x128xf32>
    %7 = vector.broadcast %6 : vector<1x1x128xf32> to vector<6x9x128xf32>
    %8 = arith.mulf %5, %7 : vector<6x9x128xf32>
    %9 = arith.addf %0, %8 : vector<6x9x128xf32>
    %c0_7 = arith.constant 0 : index
    %c1 = arith.constant 1 : index
    %c0_8 = arith.constant 0 : index
    %c0_9 = arith.constant 0 : index
    %10 = vector.load %arg2[%c0_7, %c1, %c0_8, %c0_9] : memref<1x8x8x128xf32, #tpu.memory_space<vmem>>, vector<1x1x1x128xf32>
    %11 = vector.shape_cast %10 : vector<1x1x1x128xf32> to vector<1x128xf32>
    %12 = vector.extract_strided_slice %2 {offsets = [1, 0, 0], sizes = [6, 9, 128], strides = [1, 1, 1]} : vector<13x9x128xf32> to vector<6x9x128xf32>
    %13 = vector.shape_cast %11 : vector<1x128xf32> to vector<1x1x128xf32>
    %14 = vector.broadcast %13 : vector<1x1x128xf32> to vector<6x9x128xf32>
    %15 = arith.mulf %12, %14 : vector<6x9x128xf32>
    %16 = arith.addf %9, %15 : vector<6x9x128xf32>
    %c0_10 = arith.constant 0 : index
    %c2 = arith.constant 2 : index
    %c0_11 = arith.constant 0 : index
    %c0_12 = arith.constant 0 : index
    %17 = vector.load %arg2[%c0_10, %c2, %c0_11, %c0_12] : memref<1x8x8x128xf32, #tpu.memory_space<vmem>>, vector<1x1x1x128xf32>
    %18 = vector.shape_cast %17 : vector<1x1x1x128xf32> to vector<1x128xf32>
    %19 = vector.extract_strided_slice %2 {offsets = [2, 0, 0], sizes = [6, 9, 128], strides = [1, 1, 1]} : vector<13x9x128xf32> to vector<6x9x128xf32>
    %20 = vector.shape_cast %18 : vector<1x128xf32> to vector<1x1x128xf32>
    %21 = vector.broadcast %20 : vector<1x1x128xf32> to vector<6x9x128xf32>
    %22 = arith.mulf %19, %21 : vector<6x9x128xf32>
    %23 = arith.addf %16, %22 : vector<6x9x128xf32>
    %c0_13 = arith.constant 0 : index
    %c3 = arith.constant 3 : index
    %c0_14 = arith.constant 0 : index
    %c0_15 = arith.constant 0 : index
    %24 = vector.load %arg2[%c0_13, %c3, %c0_14, %c0_15] : memref<1x8x8x128xf32, #tpu.memory_space<vmem>>, vector<1x1x1x128xf32>
    %25 = vector.shape_cast %24 : vector<1x1x1x128xf32> to vector<1x128xf32>
    %26 = vector.extract_strided_slice %2 {offsets = [3, 0, 0], sizes = [6, 9, 128], strides = [1, 1, 1]} : vector<13x9x128xf32> to vector<6x9x128xf32>
    %27 = vector.shape_cast %25 : vector<1x128xf32> to vector<1x1x128xf32>
    %28 = vector.broadcast %27 : vector<1x1x128xf32> to vector<6x9x128xf32>
    %29 = arith.mulf %26, %28 : vector<6x9x128xf32>
    %30 = arith.addf %23, %29 : vector<6x9x128xf32>
    %c0_16 = arith.constant 0 : index
    %c4 = arith.constant 4 : index
    %c0_17 = arith.constant 0 : index
    %c0_18 = arith.constant 0 : index
    %31 = vector.load %arg2[%c0_16, %c4, %c0_17, %c0_18] : memref<1x8x8x128xf32, #tpu.memory_space<vmem>>, vector<1x1x1x128xf32>
    %32 = vector.shape_cast %31 : vector<1x1x1x128xf32> to vector<1x128xf32>
    %33 = vector.extract_strided_slice %2 {offsets = [4, 0, 0], sizes = [6, 9, 128], strides = [1, 1, 1]} : vector<13x9x128xf32> to vector<6x9x128xf32>
    %34 = vector.shape_cast %32 : vector<1x128xf32> to vector<1x1x128xf32>
    %35 = vector.broadcast %34 : vector<1x1x128xf32> to vector<6x9x128xf32>
    %36 = arith.mulf %33, %35 : vector<6x9x128xf32>
    %37 = arith.addf %30, %36 : vector<6x9x128xf32>
    %c0_19 = arith.constant 0 : index
    %c5 = arith.constant 5 : index
    %c0_20 = arith.constant 0 : index
    %c0_21 = arith.constant 0 : index
    %38 = vector.load %arg2[%c0_19, %c5, %c0_20, %c0_21] : memref<1x8x8x128xf32, #tpu.memory_space<vmem>>, vector<1x1x1x128xf32>
    %39 = vector.shape_cast %38 : vector<1x1x1x128xf32> to vector<1x128xf32>
    %40 = vector.extract_strided_slice %2 {offsets = [5, 0, 0], sizes = [6, 9, 128], strides = [1, 1, 1]} : vector<13x9x128xf32> to vector<6x9x128xf32>
    %41 = vector.shape_cast %39 : vector<1x128xf32> to vector<1x1x128xf32>
    %42 = vector.broadcast %41 : vector<1x1x128xf32> to vector<6x9x128xf32>
    %43 = arith.mulf %40, %42 : vector<6x9x128xf32>
    %44 = arith.addf %37, %43 : vector<6x9x128xf32>
    %c0_22 = arith.constant 0 : index
    %c6 = arith.constant 6 : index
    %c0_23 = arith.constant 0 : index
    %c0_24 = arith.constant 0 : index
    %45 = vector.load %arg2[%c0_22, %c6, %c0_23, %c0_24] : memref<1x8x8x128xf32, #tpu.memory_space<vmem>>, vector<1x1x1x128xf32>
    %46 = vector.shape_cast %45 : vector<1x1x1x128xf32> to vector<1x128xf32>
    %47 = vector.extract_strided_slice %2 {offsets = [6, 0, 0], sizes = [6, 9, 128], strides = [1, 1, 1]} : vector<13x9x128xf32> to vector<6x9x128xf32>
    %48 = vector.shape_cast %46 : vector<1x128xf32> to vector<1x1x128xf32>
    %49 = vector.broadcast %48 : vector<1x1x128xf32> to vector<6x9x128xf32>
    %50 = arith.mulf %47, %49 : vector<6x9x128xf32>
    %51 = arith.addf %44, %50 : vector<6x9x128xf32>
    %c0_25 = arith.constant 0 : index
    %c7 = arith.constant 7 : index
    %c0_26 = arith.constant 0 : index
    %c0_27 = arith.constant 0 : index
    %52 = vector.load %arg2[%c0_25, %c7, %c0_26, %c0_27] : memref<1x8x8x128xf32, #tpu.memory_space<vmem>>, vector<1x1x1x128xf32>
    %53 = vector.shape_cast %52 : vector<1x1x1x128xf32> to vector<1x128xf32>
    %54 = vector.extract_strided_slice %2 {offsets = [7, 0, 0], sizes = [6, 9, 128], strides = [1, 1, 1]} : vector<13x9x128xf32> to vector<6x9x128xf32>
    %55 = vector.shape_cast %53 : vector<1x128xf32> to vector<1x1x128xf32>
    %56 = vector.broadcast %55 : vector<1x1x128xf32> to vector<6x9x128xf32>
    %57 = arith.mulf %54, %56 : vector<6x9x128xf32>
    %58 = arith.addf %51, %57 : vector<6x9x128xf32>
    %c0_28 = arith.constant 0 : index
    %c0_29 = arith.constant 0 : index
    %c1_30 = arith.constant 1 : index
    %c0_31 = arith.constant 0 : index
    %59 = vector.load %arg3[%c0_28, %c0_29, %c1_30, %c0_31] : memref<1x16x16x128xf32, #tpu.memory_space<vmem>>, vector<1x13x9x128xf32>
    %60 = vector.shape_cast %59 : vector<1x13x9x128xf32> to vector<13x9x128xf32>
    %c0_32 = arith.constant 0 : index
    %c0_33 = arith.constant 0 : index
    %c1_34 = arith.constant 1 : index
    %c0_35 = arith.constant 0 : index
    %61 = vector.load %arg2[%c0_32, %c0_33, %c1_34, %c0_35] : memref<1x8x8x128xf32, #tpu.memory_space<vmem>>, vector<1x1x1x128xf32>
    %62 = vector.shape_cast %61 : vector<1x1x1x128xf32> to vector<1x128xf32>
    %63 = vector.extract_strided_slice %60 {offsets = [0, 0, 0], sizes = [6, 9, 128], strides = [1, 1, 1]} : vector<13x9x128xf32> to vector<6x9x128xf32>
    %64 = vector.shape_cast %62 : vector<1x128xf32> to vector<1x1x128xf32>
    %65 = vector.broadcast %64 : vector<1x1x128xf32> to vector<6x9x128xf32>
    %66 = arith.mulf %63, %65 : vector<6x9x128xf32>
    %67 = arith.addf %58, %66 : vector<6x9x128xf32>
    %c0_36 = arith.constant 0 : index
    %c1_37 = arith.constant 1 : index
    %c1_38 = arith.constant 1 : index
    %c0_39 = arith.constant 0 : index
    %68 = vector.load %arg2[%c0_36, %c1_37, %c1_38, %c0_39] : memref<1x8x8x128xf32, #tpu.memory_space<vmem>>, vector<1x1x1x128xf32>
    %69 = vector.shape_cast %68 : vector<1x1x1x128xf32> to vector<1x128xf32>
    %70 = vector.extract_strided_slice %60 {offsets = [1, 0, 0], sizes = [6, 9, 128], strides = [1, 1, 1]} : vector<13x9x128xf32> to vector<6x9x128xf32>
    %71 = vector.shape_cast %69 : vector<1x128xf32> to vector<1x1x128xf32>
    %72 = vector.broadcast %71 : vector<1x1x128xf32> to vector<6x9x128xf32>
    %73 = arith.mulf %70, %72 : vector<6x9x128xf32>
    %74 = arith.addf %67, %73 : vector<6x9x128xf32>
    %c0_40 = arith.constant 0 : index
    %c2_41 = arith.constant 2 : index
    %c1_42 = arith.constant 1 : index
    %c0_43 = arith.constant 0 : index
    %75 = vector.load %arg2[%c0_40, %c2_41, %c1_42, %c0_43] : memref<1x8x8x128xf32, #tpu.memory_space<vmem>>, vector<1x1x1x128xf32>
    %76 = vector.shape_cast %75 : vector<1x1x1x128xf32> to vector<1x128xf32>
    %77 = vector.extract_strided_slice %60 {offsets = [2, 0, 0], sizes = [6, 9, 128], strides = [1, 1, 1]} : vector<13x9x128xf32> to vector<6x9x128xf32>
    %78 = vector.shape_cast %76 : vector<1x128xf32> to vector<1x1x128xf32>
    %79 = vector.broadcast %78 : vector<1x1x128xf32> to vector<6x9x128xf32>
    %80 = arith.mulf %77, %79 : vector<6x9x128xf32>
    %81 = arith.addf %74, %80 : vector<6x9x128xf32>
    %c0_44 = arith.constant 0 : index
    %c3_45 = arith.constant 3 : index
    %c1_46 = arith.constant 1 : index
    %c0_47 = arith.constant 0 : index
    %82 = vector.load %arg2[%c0_44, %c3_45, %c1_46, %c0_47] : memref<1x8x8x128xf32, #tpu.memory_space<vmem>>, vector<1x1x1x128xf32>
    %83 = vector.shape_cast %82 : vector<1x1x1x128xf32> to vector<1x128xf32>
    %84 = vector.extract_strided_slice %60 {offsets = [3, 0, 0], sizes = [6, 9, 128], strides = [1, 1, 1]} : vector<13x9x128xf32> to vector<6x9x128xf32>
    %85 = vector.shape_cast %83 : vector<1x128xf32> to vector<1x1x128xf32>
    %86 = vector.broadcast %85 : vector<1x1x128xf32> to vector<6x9x128xf32>
    %87 = arith.mulf %84, %86 : vector<6x9x128xf32>
    %88 = arith.addf %81, %87 : vector<6x9x128xf32>
    %c0_48 = arith.constant 0 : index
    %c4_49 = arith.constant 4 : index
    %c1_50 = arith.constant 1 : index
    %c0_51 = arith.constant 0 : index
    %89 = vector.load %arg2[%c0_48, %c4_49, %c1_50, %c0_51] : memref<1x8x8x128xf32, #tpu.memory_space<vmem>>, vector<1x1x1x128xf32>
    %90 = vector.shape_cast %89 : vector<1x1x1x128xf32> to vector<1x128xf32>
    %91 = vector.extract_strided_slice %60 {offsets = [4, 0, 0], sizes = [6, 9, 128], strides = [1, 1, 1]} : vector<13x9x128xf32> to vector<6x9x128xf32>
    %92 = vector.shape_cast %90 : vector<1x128xf32> to vector<1x1x128xf32>
    %93 = vector.broadcast %92 : vector<1x1x128xf32> to vector<6x9x128xf32>
    %94 = arith.mulf %91, %93 : vector<6x9x128xf32>
    %95 = arith.addf %88, %94 : vector<6x9x128xf32>
    %c0_52 = arith.constant 0 : index
    %c5_53 = arith.constant 5 : index
    %c1_54 = arith.constant 1 : index
    %c0_55 = arith.constant 0 : index
    %96 = vector.load %arg2[%c0_52, %c5_53, %c1_54, %c0_55] : memref<1x8x8x128xf32, #tpu.memory_space<vmem>>, vector<1x1x1x128xf32>
    %97 = vector.shape_cast %96 : vector<1x1x1x128xf32> to vector<1x128xf32>
    %98 = vector.extract_strided_slice %60 {offsets = [5, 0, 0], sizes = [6, 9, 128], strides = [1, 1, 1]} : vector<13x9x128xf32> to vector<6x9x128xf32>
    %99 = vector.shape_cast %97 : vector<1x128xf32> to vector<1x1x128xf32>
    %100 = vector.broadcast %99 : vector<1x1x128xf32> to vector<6x9x128xf32>
    %101 = arith.mulf %98, %100 : vector<6x9x128xf32>
    %102 = arith.addf %95, %101 : vector<6x9x128xf32>
    %c0_56 = arith.constant 0 : index
    %c6_57 = arith.constant 6 : index
    %c1_58 = arith.constant 1 : index
    %c0_59 = arith.constant 0 : index
    %103 = vector.load %arg2[%c0_56, %c6_57, %c1_58, %c0_59] : memref<1x8x8x128xf32, #tpu.memory_space<vmem>>, vector<1x1x1x128xf32>
    %104 = vector.shape_cast %103 : vector<1x1x1x128xf32> to vector<1x128xf32>
    %105 = vector.extract_strided_slice %60 {offsets = [6, 0, 0], sizes = [6, 9, 128], strides = [1, 1, 1]} : vector<13x9x128xf32> to vector<6x9x128xf32>
    %106 = vector.shape_cast %104 : vector<1x128xf32> to vector<1x1x128xf32>
    %107 = vector.broadcast %106 : vector<1x1x128xf32> to vector<6x9x128xf32>
    %108 = arith.mulf %105, %107 : vector<6x9x128xf32>
    %109 = arith.addf %102, %108 : vector<6x9x128xf32>
    %c0_60 = arith.constant 0 : index
    %c7_61 = arith.constant 7 : index
    %c1_62 = arith.constant 1 : index
    %c0_63 = arith.constant 0 : index
    %110 = vector.load %arg2[%c0_60, %c7_61, %c1_62, %c0_63] : memref<1x8x8x128xf32, #tpu.memory_space<vmem>>, vector<1x1x1x128xf32>
    %111 = vector.shape_cast %110 : vector<1x1x1x128xf32> to vector<1x128xf32>
    %112 = vector.extract_strided_slice %60 {offsets = [7, 0, 0], sizes = [6, 9, 128], strides = [1, 1, 1]} : vector<13x9x128xf32> to vector<6x9x128xf32>
    %113 = vector.shape_cast %111 : vector<1x128xf32> to vector<1x1x128xf32>
    %114 = vector.broadcast %113 : vector<1x1x128xf32> to vector<6x9x128xf32>
    %115 = arith.mulf %112, %114 : vector<6x9x128xf32>
    %116 = arith.addf %109, %115 : vector<6x9x128xf32>
    %c0_64 = arith.constant 0 : index
    %c0_65 = arith.constant 0 : index
    %c2_66 = arith.constant 2 : index
    %c0_67 = arith.constant 0 : index
    %117 = vector.load %arg3[%c0_64, %c0_65, %c2_66, %c0_67] : memref<1x16x16x128xf32, #tpu.memory_space<vmem>>, vector<1x13x9x128xf32>
    %118 = vector.shape_cast %117 : vector<1x13x9x128xf32> to vector<13x9x128xf32>
    %c0_68 = arith.constant 0 : index
    %c0_69 = arith.constant 0 : index
    %c2_70 = arith.constant 2 : index
    %c0_71 = arith.constant 0 : index
    %119 = vector.load %arg2[%c0_68, %c0_69, %c2_70, %c0_71] : memref<1x8x8x128xf32, #tpu.memory_space<vmem>>, vector<1x1x1x128xf32>
    %120 = vector.shape_cast %119 : vector<1x1x1x128xf32> to vector<1x128xf32>
    %121 = vector.extract_strided_slice %118 {offsets = [0, 0, 0], sizes = [6, 9, 128], strides = [1, 1, 1]} : vector<13x9x128xf32> to vector<6x9x128xf32>
    %122 = vector.shape_cast %120 : vector<1x128xf32> to vector<1x1x128xf32>
    %123 = vector.broadcast %122 : vector<1x1x128xf32> to vector<6x9x128xf32>
    %124 = arith.mulf %121, %123 : vector<6x9x128xf32>
    %125 = arith.addf %116, %124 : vector<6x9x128xf32>
    %c0_72 = arith.constant 0 : index
    %c1_73 = arith.constant 1 : index
    %c2_74 = arith.constant 2 : index
    %c0_75 = arith.constant 0 : index
    %126 = vector.load %arg2[%c0_72, %c1_73, %c2_74, %c0_75] : memref<1x8x8x128xf32, #tpu.memory_space<vmem>>, vector<1x1x1x128xf32>
    %127 = vector.shape_cast %126 : vector<1x1x1x128xf32> to vector<1x128xf32>
    %128 = vector.extract_strided_slice %118 {offsets = [1, 0, 0], sizes = [6, 9, 128], strides = [1, 1, 1]} : vector<13x9x128xf32> to vector<6x9x128xf32>
    %129 = vector.shape_cast %127 : vector<1x128xf32> to vector<1x1x128xf32>
    %130 = vector.broadcast %129 : vector<1x1x128xf32> to vector<6x9x128xf32>
    %131 = arith.mulf %128, %130 : vector<6x9x128xf32>
    %132 = arith.addf %125, %131 : vector<6x9x128xf32>
    %c0_76 = arith.constant 0 : index
    %c2_77 = arith.constant 2 : index
    %c2_78 = arith.constant 2 : index
    %c0_79 = arith.constant 0 : index
    %133 = vector.load %arg2[%c0_76, %c2_77, %c2_78, %c0_79] : memref<1x8x8x128xf32, #tpu.memory_space<vmem>>, vector<1x1x1x128xf32>
    %134 = vector.shape_cast %133 : vector<1x1x1x128xf32> to vector<1x128xf32>
    %135 = vector.extract_strided_slice %118 {offsets = [2, 0, 0], sizes = [6, 9, 128], strides = [1, 1, 1]} : vector<13x9x128xf32> to vector<6x9x128xf32>
    %136 = vector.shape_cast %134 : vector<1x128xf32> to vector<1x1x128xf32>
    %137 = vector.broadcast %136 : vector<1x1x128xf32> to vector<6x9x128xf32>
    %138 = arith.mulf %135, %137 : vector<6x9x128xf32>
    %139 = arith.addf %132, %138 : vector<6x9x128xf32>
    %c0_80 = arith.constant 0 : index
    %c3_81 = arith.constant 3 : index
    %c2_82 = arith.constant 2 : index
    %c0_83 = arith.constant 0 : index
    %140 = vector.load %arg2[%c0_80, %c3_81, %c2_82, %c0_83] : memref<1x8x8x128xf32, #tpu.memory_space<vmem>>, vector<1x1x1x128xf32>
    %141 = vector.shape_cast %140 : vector<1x1x1x128xf32> to vector<1x128xf32>
    %142 = vector.extract_strided_slice %118 {offsets = [3, 0, 0], sizes = [6, 9, 128], strides = [1, 1, 1]} : vector<13x9x128xf32> to vector<6x9x128xf32>
    %143 = vector.shape_cast %141 : vector<1x128xf32> to vector<1x1x128xf32>
    %144 = vector.broadcast %143 : vector<1x1x128xf32> to vector<6x9x128xf32>
    %145 = arith.mulf %142, %144 : vector<6x9x128xf32>
    %146 = arith.addf %139, %145 : vector<6x9x128xf32>
    %c0_84 = arith.constant 0 : index
    %c4_85 = arith.constant 4 : index
    %c2_86 = arith.constant 2 : index
    %c0_87 = arith.constant 0 : index
    %147 = vector.load %arg2[%c0_84, %c4_85, %c2_86, %c0_87] : memref<1x8x8x128xf32, #tpu.memory_space<vmem>>, vector<1x1x1x128xf32>
    %148 = vector.shape_cast %147 : vector<1x1x1x128xf32> to vector<1x128xf32>
    %149 = vector.extract_strided_slice %118 {offsets = [4, 0, 0], sizes = [6, 9, 128], strides = [1, 1, 1]} : vector<13x9x128xf32> to vector<6x9x128xf32>
    %150 = vector.shape_cast %148 : vector<1x128xf32> to vector<1x1x128xf32>
    %151 = vector.broadcast %150 : vector<1x1x128xf32> to vector<6x9x128xf32>
    %152 = arith.mulf %149, %151 : vector<6x9x128xf32>
    %153 = arith.addf %146, %152 : vector<6x9x128xf32>
    %c0_88 = arith.constant 0 : index
    %c5_89 = arith.constant 5 : index
    %c2_90 = arith.constant 2 : index
    %c0_91 = arith.constant 0 : index
    %154 = vector.load %arg2[%c0_88, %c5_89, %c2_90, %c0_91] : memref<1x8x8x128xf32, #tpu.memory_space<vmem>>, vector<1x1x1x128xf32>
    %155 = vector.shape_cast %154 : vector<1x1x1x128xf32> to vector<1x128xf32>
    %156 = vector.extract_strided_slice %118 {offsets = [5, 0, 0], sizes = [6, 9, 128], strides = [1, 1, 1]} : vector<13x9x128xf32> to vector<6x9x128xf32>
    %157 = vector.shape_cast %155 : vector<1x128xf32> to vector<1x1x128xf32>
    %158 = vector.broadcast %157 : vector<1x1x128xf32> to vector<6x9x128xf32>
    %159 = arith.mulf %156, %158 : vector<6x9x128xf32>
    %160 = arith.addf %153, %159 : vector<6x9x128xf32>
    %c0_92 = arith.constant 0 : index
    %c6_93 = arith.constant 6 : index
    %c2_94 = arith.constant 2 : index
    %c0_95 = arith.constant 0 : index
    %161 = vector.load %arg2[%c0_92, %c6_93, %c2_94, %c0_95] : memref<1x8x8x128xf32, #tpu.memory_space<vmem>>, vector<1x1x1x128xf32>
    %162 = vector.shape_cast %161 : vector<1x1x1x128xf32> to vector<1x128xf32>
    %163 = vector.extract_strided_slice %118 {offsets = [6, 0, 0], sizes = [6, 9, 128], strides = [1, 1, 1]} : vector<13x9x128xf32> to vector<6x9x128xf32>
    %164 = vector.shape_cast %162 : vector<1x128xf32> to vector<1x1x128xf32>
    %165 = vector.broadcast %164 : vector<1x1x128xf32> to vector<6x9x128xf32>
    %166 = arith.mulf %163, %165 : vector<6x9x128xf32>
    %167 = arith.addf %160, %166 : vector<6x9x128xf32>
    %c0_96 = arith.constant 0 : index
    %c7_97 = arith.constant 7 : index
    %c2_98 = arith.constant 2 : index
    %c0_99 = arith.constant 0 : index
    %168 = vector.load %arg2[%c0_96, %c7_97, %c2_98, %c0_99] : memref<1x8x8x128xf32, #tpu.memory_space<vmem>>, vector<1x1x1x128xf32>
    %169 = vector.shape_cast %168 : vector<1x1x1x128xf32> to vector<1x128xf32>
    %170 = vector.extract_strided_slice %118 {offsets = [7, 0, 0], sizes = [6, 9, 128], strides = [1, 1, 1]} : vector<13x9x128xf32> to vector<6x9x128xf32>
    %171 = vector.shape_cast %169 : vector<1x128xf32> to vector<1x1x128xf32>
    %172 = vector.broadcast %171 : vector<1x1x128xf32> to vector<6x9x128xf32>
    %173 = arith.mulf %170, %172 : vector<6x9x128xf32>
    %174 = arith.addf %167, %173 : vector<6x9x128xf32>
    %c0_100 = arith.constant 0 : index
    %c0_101 = arith.constant 0 : index
    %c3_102 = arith.constant 3 : index
    %c0_103 = arith.constant 0 : index
    %175 = vector.load %arg3[%c0_100, %c0_101, %c3_102, %c0_103] : memref<1x16x16x128xf32, #tpu.memory_space<vmem>>, vector<1x13x9x128xf32>
    %176 = vector.shape_cast %175 : vector<1x13x9x128xf32> to vector<13x9x128xf32>
    %c0_104 = arith.constant 0 : index
    %c0_105 = arith.constant 0 : index
    %c3_106 = arith.constant 3 : index
    %c0_107 = arith.constant 0 : index
    %177 = vector.load %arg2[%c0_104, %c0_105, %c3_106, %c0_107] : memref<1x8x8x128xf32, #tpu.memory_space<vmem>>, vector<1x1x1x128xf32>
    %178 = vector.shape_cast %177 : vector<1x1x1x128xf32> to vector<1x128xf32>
    %179 = vector.extract_strided_slice %176 {offsets = [0, 0, 0], sizes = [6, 9, 128], strides = [1, 1, 1]} : vector<13x9x128xf32> to vector<6x9x128xf32>
    %180 = vector.shape_cast %178 : vector<1x128xf32> to vector<1x1x128xf32>
    %181 = vector.broadcast %180 : vector<1x1x128xf32> to vector<6x9x128xf32>
    %182 = arith.mulf %179, %181 : vector<6x9x128xf32>
    %183 = arith.addf %174, %182 : vector<6x9x128xf32>
    %c0_108 = arith.constant 0 : index
    %c1_109 = arith.constant 1 : index
    %c3_110 = arith.constant 3 : index
    %c0_111 = arith.constant 0 : index
    %184 = vector.load %arg2[%c0_108, %c1_109, %c3_110, %c0_111] : memref<1x8x8x128xf32, #tpu.memory_space<vmem>>, vector<1x1x1x128xf32>
    %185 = vector.shape_cast %184 : vector<1x1x1x128xf32> to vector<1x128xf32>
    %186 = vector.extract_strided_slice %176 {offsets = [1, 0, 0], sizes = [6, 9, 128], strides = [1, 1, 1]} : vector<13x9x128xf32> to vector<6x9x128xf32>
    %187 = vector.shape_cast %185 : vector<1x128xf32> to vector<1x1x128xf32>
    %188 = vector.broadcast %187 : vector<1x1x128xf32> to vector<6x9x128xf32>
    %189 = arith.mulf %186, %188 : vector<6x9x128xf32>
    %190 = arith.addf %183, %189 : vector<6x9x128xf32>
    %c0_112 = arith.constant 0 : index
    %c2_113 = arith.constant 2 : index
    %c3_114 = arith.constant 3 : index
    %c0_115 = arith.constant 0 : index
    %191 = vector.load %arg2[%c0_112, %c2_113, %c3_114, %c0_115] : memref<1x8x8x128xf32, #tpu.memory_space<vmem>>, vector<1x1x1x128xf32>
    %192 = vector.shape_cast %191 : vector<1x1x1x128xf32> to vector<1x128xf32>
    %193 = vector.extract_strided_slice %176 {offsets = [2, 0, 0], sizes = [6, 9, 128], strides = [1, 1, 1]} : vector<13x9x128xf32> to vector<6x9x128xf32>
    %194 = vector.shape_cast %192 : vector<1x128xf32> to vector<1x1x128xf32>
    %195 = vector.broadcast %194 : vector<1x1x128xf32> to vector<6x9x128xf32>
    %196 = arith.mulf %193, %195 : vector<6x9x128xf32>
    %197 = arith.addf %190, %196 : vector<6x9x128xf32>
    %c0_116 = arith.constant 0 : index
    %c3_117 = arith.constant 3 : index
    %c3_118 = arith.constant 3 : index
    %c0_119 = arith.constant 0 : index
    %198 = vector.load %arg2[%c0_116, %c3_117, %c3_118, %c0_119] : memref<1x8x8x128xf32, #tpu.memory_space<vmem>>, vector<1x1x1x128xf32>
    %199 = vector.shape_cast %198 : vector<1x1x1x128xf32> to vector<1x128xf32>
    %200 = vector.extract_strided_slice %176 {offsets = [3, 0, 0], sizes = [6, 9, 128], strides = [1, 1, 1]} : vector<13x9x128xf32> to vector<6x9x128xf32>
    %201 = vector.shape_cast %199 : vector<1x128xf32> to vector<1x1x128xf32>
    %202 = vector.broadcast %201 : vector<1x1x128xf32> to vector<6x9x128xf32>
    %203 = arith.mulf %200, %202 : vector<6x9x128xf32>
    %204 = arith.addf %197, %203 : vector<6x9x128xf32>
    %c0_120 = arith.constant 0 : index
    %c4_121 = arith.constant 4 : index
    %c3_122 = arith.constant 3 : index
    %c0_123 = arith.constant 0 : index
    %205 = vector.load %arg2[%c0_120, %c4_121, %c3_122, %c0_123] : memref<1x8x8x128xf32, #tpu.memory_space<vmem>>, vector<1x1x1x128xf32>
    %206 = vector.shape_cast %205 : vector<1x1x1x128xf32> to vector<1x128xf32>
    %207 = vector.extract_strided_slice %176 {offsets = [4, 0, 0], sizes = [6, 9, 128], strides = [1, 1, 1]} : vector<13x9x128xf32> to vector<6x9x128xf32>
    %208 = vector.shape_cast %206 : vector<1x128xf32> to vector<1x1x128xf32>
    %209 = vector.broadcast %208 : vector<1x1x128xf32> to vector<6x9x128xf32>
    %210 = arith.mulf %207, %209 : vector<6x9x128xf32>
    %211 = arith.addf %204, %210 : vector<6x9x128xf32>
    %c0_124 = arith.constant 0 : index
    %c5_125 = arith.constant 5 : index
    %c3_126 = arith.constant 3 : index
    %c0_127 = arith.constant 0 : index
    %212 = vector.load %arg2[%c0_124, %c5_125, %c3_126, %c0_127] : memref<1x8x8x128xf32, #tpu.memory_space<vmem>>, vector<1x1x1x128xf32>
    %213 = vector.shape_cast %212 : vector<1x1x1x128xf32> to vector<1x128xf32>
    %214 = vector.extract_strided_slice %176 {offsets = [5, 0, 0], sizes = [6, 9, 128], strides = [1, 1, 1]} : vector<13x9x128xf32> to vector<6x9x128xf32>
    %215 = vector.shape_cast %213 : vector<1x128xf32> to vector<1x1x128xf32>
    %216 = vector.broadcast %215 : vector<1x1x128xf32> to vector<6x9x128xf32>
    %217 = arith.mulf %214, %216 : vector<6x9x128xf32>
    %218 = arith.addf %211, %217 : vector<6x9x128xf32>
    %c0_128 = arith.constant 0 : index
    %c6_129 = arith.constant 6 : index
    %c3_130 = arith.constant 3 : index
    %c0_131 = arith.constant 0 : index
    %219 = vector.load %arg2[%c0_128, %c6_129, %c3_130, %c0_131] : memref<1x8x8x128xf32, #tpu.memory_space<vmem>>, vector<1x1x1x128xf32>
    %220 = vector.shape_cast %219 : vector<1x1x1x128xf32> to vector<1x128xf32>
    %221 = vector.extract_strided_slice %176 {offsets = [6, 0, 0], sizes = [6, 9, 128], strides = [1, 1, 1]} : vector<13x9x128xf32> to vector<6x9x128xf32>
    %222 = vector.shape_cast %220 : vector<1x128xf32> to vector<1x1x128xf32>
    %223 = vector.broadcast %222 : vector<1x1x128xf32> to vector<6x9x128xf32>
    %224 = arith.mulf %221, %223 : vector<6x9x128xf32>
    %225 = arith.addf %218, %224 : vector<6x9x128xf32>
    %c0_132 = arith.constant 0 : index
    %c7_133 = arith.constant 7 : index
    %c3_134 = arith.constant 3 : index
    %c0_135 = arith.constant 0 : index
    %226 = vector.load %arg2[%c0_132, %c7_133, %c3_134, %c0_135] : memref<1x8x8x128xf32, #tpu.memory_space<vmem>>, vector<1x1x1x128xf32>
    %227 = vector.shape_cast %226 : vector<1x1x1x128xf32> to vector<1x128xf32>
    %228 = vector.extract_strided_slice %176 {offsets = [7, 0, 0], sizes = [6, 9, 128], strides = [1, 1, 1]} : vector<13x9x128xf32> to vector<6x9x128xf32>
    %229 = vector.shape_cast %227 : vector<1x128xf32> to vector<1x1x128xf32>
    %230 = vector.broadcast %229 : vector<1x1x128xf32> to vector<6x9x128xf32>
    %231 = arith.mulf %228, %230 : vector<6x9x128xf32>
    %232 = arith.addf %225, %231 : vector<6x9x128xf32>
    %c0_136 = arith.constant 0 : index
    %c0_137 = arith.constant 0 : index
    %c4_138 = arith.constant 4 : index
    %c0_139 = arith.constant 0 : index
    %233 = vector.load %arg3[%c0_136, %c0_137, %c4_138, %c0_139] : memref<1x16x16x128xf32, #tpu.memory_space<vmem>>, vector<1x13x9x128xf32>
    %234 = vector.shape_cast %233 : vector<1x13x9x128xf32> to vector<13x9x128xf32>
    %c0_140 = arith.constant 0 : index
    %c0_141 = arith.constant 0 : index
    %c4_142 = arith.constant 4 : index
    %c0_143 = arith.constant 0 : index
    %235 = vector.load %arg2[%c0_140, %c0_141, %c4_142, %c0_143] : memref<1x8x8x128xf32, #tpu.memory_space<vmem>>, vector<1x1x1x128xf32>
    %236 = vector.shape_cast %235 : vector<1x1x1x128xf32> to vector<1x128xf32>
    %237 = vector.extract_strided_slice %234 {offsets = [0, 0, 0], sizes = [6, 9, 128], strides = [1, 1, 1]} : vector<13x9x128xf32> to vector<6x9x128xf32>
    %238 = vector.shape_cast %236 : vector<1x128xf32> to vector<1x1x128xf32>
    %239 = vector.broadcast %238 : vector<1x1x128xf32> to vector<6x9x128xf32>
    %240 = arith.mulf %237, %239 : vector<6x9x128xf32>
    %241 = arith.addf %232, %240 : vector<6x9x128xf32>
    %c0_144 = arith.constant 0 : index
    %c1_145 = arith.constant 1 : index
    %c4_146 = arith.constant 4 : index
    %c0_147 = arith.constant 0 : index
    %242 = vector.load %arg2[%c0_144, %c1_145, %c4_146, %c0_147] : memref<1x8x8x128xf32, #tpu.memory_space<vmem>>, vector<1x1x1x128xf32>
    %243 = vector.shape_cast %242 : vector<1x1x1x128xf32> to vector<1x128xf32>
    %244 = vector.extract_strided_slice %234 {offsets = [1, 0, 0], sizes = [6, 9, 128], strides = [1, 1, 1]} : vector<13x9x128xf32> to vector<6x9x128xf32>
    %245 = vector.shape_cast %243 : vector<1x128xf32> to vector<1x1x128xf32>
    %246 = vector.broadcast %245 : vector<1x1x128xf32> to vector<6x9x128xf32>
    %247 = arith.mulf %244, %246 : vector<6x9x128xf32>
    %248 = arith.addf %241, %247 : vector<6x9x128xf32>
    %c0_148 = arith.constant 0 : index
    %c2_149 = arith.constant 2 : index
    %c4_150 = arith.constant 4 : index
    %c0_151 = arith.constant 0 : index
    %249 = vector.load %arg2[%c0_148, %c2_149, %c4_150, %c0_151] : memref<1x8x8x128xf32, #tpu.memory_space<vmem>>, vector<1x1x1x128xf32>
    %250 = vector.shape_cast %249 : vector<1x1x1x128xf32> to vector<1x128xf32>
    %251 = vector.extract_strided_slice %234 {offsets = [2, 0, 0], sizes = [6, 9, 128], strides = [1, 1, 1]} : vector<13x9x128xf32> to vector<6x9x128xf32>
    %252 = vector.shape_cast %250 : vector<1x128xf32> to vector<1x1x128xf32>
    %253 = vector.broadcast %252 : vector<1x1x128xf32> to vector<6x9x128xf32>
    %254 = arith.mulf %251, %253 : vector<6x9x128xf32>
    %255 = arith.addf %248, %254 : vector<6x9x128xf32>
    %c0_152 = arith.constant 0 : index
    %c3_153 = arith.constant 3 : index
    %c4_154 = arith.constant 4 : index
    %c0_155 = arith.constant 0 : index
    %256 = vector.load %arg2[%c0_152, %c3_153, %c4_154, %c0_155] : memref<1x8x8x128xf32, #tpu.memory_space<vmem>>, vector<1x1x1x128xf32>
    %257 = vector.shape_cast %256 : vector<1x1x1x128xf32> to vector<1x128xf32>
    %258 = vector.extract_strided_slice %234 {offsets = [3, 0, 0], sizes = [6, 9, 128], strides = [1, 1, 1]} : vector<13x9x128xf32> to vector<6x9x128xf32>
    %259 = vector.shape_cast %257 : vector<1x128xf32> to vector<1x1x128xf32>
    %260 = vector.broadcast %259 : vector<1x1x128xf32> to vector<6x9x128xf32>
    %261 = arith.mulf %258, %260 : vector<6x9x128xf32>
    %262 = arith.addf %255, %261 : vector<6x9x128xf32>
    %c0_156 = arith.constant 0 : index
    %c4_157 = arith.constant 4 : index
    %c4_158 = arith.constant 4 : index
    %c0_159 = arith.constant 0 : index
    %263 = vector.load %arg2[%c0_156, %c4_157, %c4_158, %c0_159] : memref<1x8x8x128xf32, #tpu.memory_space<vmem>>, vector<1x1x1x128xf32>
    %264 = vector.shape_cast %263 : vector<1x1x1x128xf32> to vector<1x128xf32>
    %265 = vector.extract_strided_slice %234 {offsets = [4, 0, 0], sizes = [6, 9, 128], strides = [1, 1, 1]} : vector<13x9x128xf32> to vector<6x9x128xf32>
    %266 = vector.shape_cast %264 : vector<1x128xf32> to vector<1x1x128xf32>
    %267 = vector.broadcast %266 : vector<1x1x128xf32> to vector<6x9x128xf32>
    %268 = arith.mulf %265, %267 : vector<6x9x128xf32>
    %269 = arith.addf %262, %268 : vector<6x9x128xf32>
    %c0_160 = arith.constant 0 : index
    %c5_161 = arith.constant 5 : index
    %c4_162 = arith.constant 4 : index
    %c0_163 = arith.constant 0 : index
    %270 = vector.load %arg2[%c0_160, %c5_161, %c4_162, %c0_163] : memref<1x8x8x128xf32, #tpu.memory_space<vmem>>, vector<1x1x1x128xf32>
    %271 = vector.shape_cast %270 : vector<1x1x1x128xf32> to vector<1x128xf32>
    %272 = vector.extract_strided_slice %234 {offsets = [5, 0, 0], sizes = [6, 9, 128], strides = [1, 1, 1]} : vector<13x9x128xf32> to vector<6x9x128xf32>
    %273 = vector.shape_cast %271 : vector<1x128xf32> to vector<1x1x128xf32>
    %274 = vector.broadcast %273 : vector<1x1x128xf32> to vector<6x9x128xf32>
    %275 = arith.mulf %272, %274 : vector<6x9x128xf32>
    %276 = arith.addf %269, %275 : vector<6x9x128xf32>
    %c0_164 = arith.constant 0 : index
    %c6_165 = arith.constant 6 : index
    %c4_166 = arith.constant 4 : index
    %c0_167 = arith.constant 0 : index
    %277 = vector.load %arg2[%c0_164, %c6_165, %c4_166, %c0_167] : memref<1x8x8x128xf32, #tpu.memory_space<vmem>>, vector<1x1x1x128xf32>
    %278 = vector.shape_cast %277 : vector<1x1x1x128xf32> to vector<1x128xf32>
    %279 = vector.extract_strided_slice %234 {offsets = [6, 0, 0], sizes = [6, 9, 128], strides = [1, 1, 1]} : vector<13x9x128xf32> to vector<6x9x128xf32>
    %280 = vector.shape_cast %278 : vector<1x128xf32> to vector<1x1x128xf32>
    %281 = vector.broadcast %280 : vector<1x1x128xf32> to vector<6x9x128xf32>
    %282 = arith.mulf %279, %281 : vector<6x9x128xf32>
    %283 = arith.addf %276, %282 : vector<6x9x128xf32>
    %c0_168 = arith.constant 0 : index
    %c7_169 = arith.constant 7 : index
    %c4_170 = arith.constant 4 : index
    %c0_171 = arith.constant 0 : index
    %284 = vector.load %arg2[%c0_168, %c7_169, %c4_170, %c0_171] : memref<1x8x8x128xf32, #tpu.memory_space<vmem>>, vector<1x1x1x128xf32>
    %285 = vector.shape_cast %284 : vector<1x1x1x128xf32> to vector<1x128xf32>
    %286 = vector.extract_strided_slice %234 {offsets = [7, 0, 0], sizes = [6, 9, 128], strides = [1, 1, 1]} : vector<13x9x128xf32> to vector<6x9x128xf32>
    %287 = vector.shape_cast %285 : vector<1x128xf32> to vector<1x1x128xf32>
    %288 = vector.broadcast %287 : vector<1x1x128xf32> to vector<6x9x128xf32>
    %289 = arith.mulf %286, %288 : vector<6x9x128xf32>
    %290 = arith.addf %283, %289 : vector<6x9x128xf32>
    %c0_172 = arith.constant 0 : index
    %c0_173 = arith.constant 0 : index
    %c5_174 = arith.constant 5 : index
    %c0_175 = arith.constant 0 : index
    %291 = vector.load %arg3[%c0_172, %c0_173, %c5_174, %c0_175] : memref<1x16x16x128xf32, #tpu.memory_space<vmem>>, vector<1x13x9x128xf32>
    %292 = vector.shape_cast %291 : vector<1x13x9x128xf32> to vector<13x9x128xf32>
    %c0_176 = arith.constant 0 : index
    %c0_177 = arith.constant 0 : index
    %c5_178 = arith.constant 5 : index
    %c0_179 = arith.constant 0 : index
    %293 = vector.load %arg2[%c0_176, %c0_177, %c5_178, %c0_179] : memref<1x8x8x128xf32, #tpu.memory_space<vmem>>, vector<1x1x1x128xf32>
    %294 = vector.shape_cast %293 : vector<1x1x1x128xf32> to vector<1x128xf32>
    %295 = vector.extract_strided_slice %292 {offsets = [0, 0, 0], sizes = [6, 9, 128], strides = [1, 1, 1]} : vector<13x9x128xf32> to vector<6x9x128xf32>
    %296 = vector.shape_cast %294 : vector<1x128xf32> to vector<1x1x128xf32>
    %297 = vector.broadcast %296 : vector<1x1x128xf32> to vector<6x9x128xf32>
    %298 = arith.mulf %295, %297 : vector<6x9x128xf32>
    %299 = arith.addf %290, %298 : vector<6x9x128xf32>
    %c0_180 = arith.constant 0 : index
    %c1_181 = arith.constant 1 : index
    %c5_182 = arith.constant 5 : index
    %c0_183 = arith.constant 0 : index
    %300 = vector.load %arg2[%c0_180, %c1_181, %c5_182, %c0_183] : memref<1x8x8x128xf32, #tpu.memory_space<vmem>>, vector<1x1x1x128xf32>
    %301 = vector.shape_cast %300 : vector<1x1x1x128xf32> to vector<1x128xf32>
    %302 = vector.extract_strided_slice %292 {offsets = [1, 0, 0], sizes = [6, 9, 128], strides = [1, 1, 1]} : vector<13x9x128xf32> to vector<6x9x128xf32>
    %303 = vector.shape_cast %301 : vector<1x128xf32> to vector<1x1x128xf32>
    %304 = vector.broadcast %303 : vector<1x1x128xf32> to vector<6x9x128xf32>
    %305 = arith.mulf %302, %304 : vector<6x9x128xf32>
    %306 = arith.addf %299, %305 : vector<6x9x128xf32>
    %c0_184 = arith.constant 0 : index
    %c2_185 = arith.constant 2 : index
    %c5_186 = arith.constant 5 : index
    %c0_187 = arith.constant 0 : index
    %307 = vector.load %arg2[%c0_184, %c2_185, %c5_186, %c0_187] : memref<1x8x8x128xf32, #tpu.memory_space<vmem>>, vector<1x1x1x128xf32>
    %308 = vector.shape_cast %307 : vector<1x1x1x128xf32> to vector<1x128xf32>
    %309 = vector.extract_strided_slice %292 {offsets = [2, 0, 0], sizes = [6, 9, 128], strides = [1, 1, 1]} : vector<13x9x128xf32> to vector<6x9x128xf32>
    %310 = vector.shape_cast %308 : vector<1x128xf32> to vector<1x1x128xf32>
    %311 = vector.broadcast %310 : vector<1x1x128xf32> to vector<6x9x128xf32>
    %312 = arith.mulf %309, %311 : vector<6x9x128xf32>
    %313 = arith.addf %306, %312 : vector<6x9x128xf32>
    %c0_188 = arith.constant 0 : index
    %c3_189 = arith.constant 3 : index
    %c5_190 = arith.constant 5 : index
    %c0_191 = arith.constant 0 : index
    %314 = vector.load %arg2[%c0_188, %c3_189, %c5_190, %c0_191] : memref<1x8x8x128xf32, #tpu.memory_space<vmem>>, vector<1x1x1x128xf32>
    %315 = vector.shape_cast %314 : vector<1x1x1x128xf32> to vector<1x128xf32>
    %316 = vector.extract_strided_slice %292 {offsets = [3, 0, 0], sizes = [6, 9, 128], strides = [1, 1, 1]} : vector<13x9x128xf32> to vector<6x9x128xf32>
    %317 = vector.shape_cast %315 : vector<1x128xf32> to vector<1x1x128xf32>
    %318 = vector.broadcast %317 : vector<1x1x128xf32> to vector<6x9x128xf32>
    %319 = arith.mulf %316, %318 : vector<6x9x128xf32>
    %320 = arith.addf %313, %319 : vector<6x9x128xf32>
    %c0_192 = arith.constant 0 : index
    %c4_193 = arith.constant 4 : index
    %c5_194 = arith.constant 5 : index
    %c0_195 = arith.constant 0 : index
    %321 = vector.load %arg2[%c0_192, %c4_193, %c5_194, %c0_195] : memref<1x8x8x128xf32, #tpu.memory_space<vmem>>, vector<1x1x1x128xf32>
    %322 = vector.shape_cast %321 : vector<1x1x1x128xf32> to vector<1x128xf32>
    %323 = vector.extract_strided_slice %292 {offsets = [4, 0, 0], sizes = [6, 9, 128], strides = [1, 1, 1]} : vector<13x9x128xf32> to vector<6x9x128xf32>
    %324 = vector.shape_cast %322 : vector<1x128xf32> to vector<1x1x128xf32>
    %325 = vector.broadcast %324 : vector<1x1x128xf32> to vector<6x9x128xf32>
    %326 = arith.mulf %323, %325 : vector<6x9x128xf32>
    %327 = arith.addf %320, %326 : vector<6x9x128xf32>
    %c0_196 = arith.constant 0 : index
    %c5_197 = arith.constant 5 : index
    %c5_198 = arith.constant 5 : index
    %c0_199 = arith.constant 0 : index
    %328 = vector.load %arg2[%c0_196, %c5_197, %c5_198, %c0_199] : memref<1x8x8x128xf32, #tpu.memory_space<vmem>>, vector<1x1x1x128xf32>
    %329 = vector.shape_cast %328 : vector<1x1x1x128xf32> to vector<1x128xf32>
    %330 = vector.extract_strided_slice %292 {offsets = [5, 0, 0], sizes = [6, 9, 128], strides = [1, 1, 1]} : vector<13x9x128xf32> to vector<6x9x128xf32>
    %331 = vector.shape_cast %329 : vector<1x128xf32> to vector<1x1x128xf32>
    %332 = vector.broadcast %331 : vector<1x1x128xf32> to vector<6x9x128xf32>
    %333 = arith.mulf %330, %332 : vector<6x9x128xf32>
    %334 = arith.addf %327, %333 : vector<6x9x128xf32>
    %c0_200 = arith.constant 0 : index
    %c6_201 = arith.constant 6 : index
    %c5_202 = arith.constant 5 : index
    %c0_203 = arith.constant 0 : index
    %335 = vector.load %arg2[%c0_200, %c6_201, %c5_202, %c0_203] : memref<1x8x8x128xf32, #tpu.memory_space<vmem>>, vector<1x1x1x128xf32>
    %336 = vector.shape_cast %335 : vector<1x1x1x128xf32> to vector<1x128xf32>
    %337 = vector.extract_strided_slice %292 {offsets = [6, 0, 0], sizes = [6, 9, 128], strides = [1, 1, 1]} : vector<13x9x128xf32> to vector<6x9x128xf32>
    %338 = vector.shape_cast %336 : vector<1x128xf32> to vector<1x1x128xf32>
    %339 = vector.broadcast %338 : vector<1x1x128xf32> to vector<6x9x128xf32>
    %340 = arith.mulf %337, %339 : vector<6x9x128xf32>
    %341 = arith.addf %334, %340 : vector<6x9x128xf32>
    %c0_204 = arith.constant 0 : index
    %c7_205 = arith.constant 7 : index
    %c5_206 = arith.constant 5 : index
    %c0_207 = arith.constant 0 : index
    %342 = vector.load %arg2[%c0_204, %c7_205, %c5_206, %c0_207] : memref<1x8x8x128xf32, #tpu.memory_space<vmem>>, vector<1x1x1x128xf32>
    %343 = vector.shape_cast %342 : vector<1x1x1x128xf32> to vector<1x128xf32>
    %344 = vector.extract_strided_slice %292 {offsets = [7, 0, 0], sizes = [6, 9, 128], strides = [1, 1, 1]} : vector<13x9x128xf32> to vector<6x9x128xf32>
    %345 = vector.shape_cast %343 : vector<1x128xf32> to vector<1x1x128xf32>
    %346 = vector.broadcast %345 : vector<1x1x128xf32> to vector<6x9x128xf32>
    %347 = arith.mulf %344, %346 : vector<6x9x128xf32>
    %348 = arith.addf %341, %347 : vector<6x9x128xf32>
    %c0_208 = arith.constant 0 : index
    %c0_209 = arith.constant 0 : index
    %c6_210 = arith.constant 6 : index
    %c0_211 = arith.constant 0 : index
    %349 = vector.load %arg3[%c0_208, %c0_209, %c6_210, %c0_211] : memref<1x16x16x128xf32, #tpu.memory_space<vmem>>, vector<1x13x9x128xf32>
    %350 = vector.shape_cast %349 : vector<1x13x9x128xf32> to vector<13x9x128xf32>
    %c0_212 = arith.constant 0 : index
    %c0_213 = arith.constant 0 : index
    %c6_214 = arith.constant 6 : index
    %c0_215 = arith.constant 0 : index
    %351 = vector.load %arg2[%c0_212, %c0_213, %c6_214, %c0_215] : memref<1x8x8x128xf32, #tpu.memory_space<vmem>>, vector<1x1x1x128xf32>
    %352 = vector.shape_cast %351 : vector<1x1x1x128xf32> to vector<1x128xf32>
    %353 = vector.extract_strided_slice %350 {offsets = [0, 0, 0], sizes = [6, 9, 128], strides = [1, 1, 1]} : vector<13x9x128xf32> to vector<6x9x128xf32>
    %354 = vector.shape_cast %352 : vector<1x128xf32> to vector<1x1x128xf32>
    %355 = vector.broadcast %354 : vector<1x1x128xf32> to vector<6x9x128xf32>
    %356 = arith.mulf %353, %355 : vector<6x9x128xf32>
    %357 = arith.addf %348, %356 : vector<6x9x128xf32>
    %c0_216 = arith.constant 0 : index
    %c1_217 = arith.constant 1 : index
    %c6_218 = arith.constant 6 : index
    %c0_219 = arith.constant 0 : index
    %358 = vector.load %arg2[%c0_216, %c1_217, %c6_218, %c0_219] : memref<1x8x8x128xf32, #tpu.memory_space<vmem>>, vector<1x1x1x128xf32>
    %359 = vector.shape_cast %358 : vector<1x1x1x128xf32> to vector<1x128xf32>
    %360 = vector.extract_strided_slice %350 {offsets = [1, 0, 0], sizes = [6, 9, 128], strides = [1, 1, 1]} : vector<13x9x128xf32> to vector<6x9x128xf32>
    %361 = vector.shape_cast %359 : vector<1x128xf32> to vector<1x1x128xf32>
    %362 = vector.broadcast %361 : vector<1x1x128xf32> to vector<6x9x128xf32>
    %363 = arith.mulf %360, %362 : vector<6x9x128xf32>
    %364 = arith.addf %357, %363 : vector<6x9x128xf32>
    %c0_220 = arith.constant 0 : index
    %c2_221 = arith.constant 2 : index
    %c6_222 = arith.constant 6 : index
    %c0_223 = arith.constant 0 : index
    %365 = vector.load %arg2[%c0_220, %c2_221, %c6_222, %c0_223] : memref<1x8x8x128xf32, #tpu.memory_space<vmem>>, vector<1x1x1x128xf32>
    %366 = vector.shape_cast %365 : vector<1x1x1x128xf32> to vector<1x128xf32>
    %367 = vector.extract_strided_slice %350 {offsets = [2, 0, 0], sizes = [6, 9, 128], strides = [1, 1, 1]} : vector<13x9x128xf32> to vector<6x9x128xf32>
    %368 = vector.shape_cast %366 : vector<1x128xf32> to vector<1x1x128xf32>
    %369 = vector.broadcast %368 : vector<1x1x128xf32> to vector<6x9x128xf32>
    %370 = arith.mulf %367, %369 : vector<6x9x128xf32>
    %371 = arith.addf %364, %370 : vector<6x9x128xf32>
    %c0_224 = arith.constant 0 : index
    %c3_225 = arith.constant 3 : index
    %c6_226 = arith.constant 6 : index
    %c0_227 = arith.constant 0 : index
    %372 = vector.load %arg2[%c0_224, %c3_225, %c6_226, %c0_227] : memref<1x8x8x128xf32, #tpu.memory_space<vmem>>, vector<1x1x1x128xf32>
    %373 = vector.shape_cast %372 : vector<1x1x1x128xf32> to vector<1x128xf32>
    %374 = vector.extract_strided_slice %350 {offsets = [3, 0, 0], sizes = [6, 9, 128], strides = [1, 1, 1]} : vector<13x9x128xf32> to vector<6x9x128xf32>
    %375 = vector.shape_cast %373 : vector<1x128xf32> to vector<1x1x128xf32>
    %376 = vector.broadcast %375 : vector<1x1x128xf32> to vector<6x9x128xf32>
    %377 = arith.mulf %374, %376 : vector<6x9x128xf32>
    %378 = arith.addf %371, %377 : vector<6x9x128xf32>
    %c0_228 = arith.constant 0 : index
    %c4_229 = arith.constant 4 : index
    %c6_230 = arith.constant 6 : index
    %c0_231 = arith.constant 0 : index
    %379 = vector.load %arg2[%c0_228, %c4_229, %c6_230, %c0_231] : memref<1x8x8x128xf32, #tpu.memory_space<vmem>>, vector<1x1x1x128xf32>
    %380 = vector.shape_cast %379 : vector<1x1x1x128xf32> to vector<1x128xf32>
    %381 = vector.extract_strided_slice %350 {offsets = [4, 0, 0], sizes = [6, 9, 128], strides = [1, 1, 1]} : vector<13x9x128xf32> to vector<6x9x128xf32>
    %382 = vector.shape_cast %380 : vector<1x128xf32> to vector<1x1x128xf32>
    %383 = vector.broadcast %382 : vector<1x1x128xf32> to vector<6x9x128xf32>
    %384 = arith.mulf %381, %383 : vector<6x9x128xf32>
    %385 = arith.addf %378, %384 : vector<6x9x128xf32>
    %c0_232 = arith.constant 0 : index
    %c5_233 = arith.constant 5 : index
    %c6_234 = arith.constant 6 : index
    %c0_235 = arith.constant 0 : index
    %386 = vector.load %arg2[%c0_232, %c5_233, %c6_234, %c0_235] : memref<1x8x8x128xf32, #tpu.memory_space<vmem>>, vector<1x1x1x128xf32>
    %387 = vector.shape_cast %386 : vector<1x1x1x128xf32> to vector<1x128xf32>
    %388 = vector.extract_strided_slice %350 {offsets = [5, 0, 0], sizes = [6, 9, 128], strides = [1, 1, 1]} : vector<13x9x128xf32> to vector<6x9x128xf32>
    %389 = vector.shape_cast %387 : vector<1x128xf32> to vector<1x1x128xf32>
    %390 = vector.broadcast %389 : vector<1x1x128xf32> to vector<6x9x128xf32>
    %391 = arith.mulf %388, %390 : vector<6x9x128xf32>
    %392 = arith.addf %385, %391 : vector<6x9x128xf32>
    %c0_236 = arith.constant 0 : index
    %c6_237 = arith.constant 6 : index
    %c6_238 = arith.constant 6 : index
    %c0_239 = arith.constant 0 : index
    %393 = vector.load %arg2[%c0_236, %c6_237, %c6_238, %c0_239] : memref<1x8x8x128xf32, #tpu.memory_space<vmem>>, vector<1x1x1x128xf32>
    %394 = vector.shape_cast %393 : vector<1x1x1x128xf32> to vector<1x128xf32>
    %395 = vector.extract_strided_slice %350 {offsets = [6, 0, 0], sizes = [6, 9, 128], strides = [1, 1, 1]} : vector<13x9x128xf32> to vector<6x9x128xf32>
    %396 = vector.shape_cast %394 : vector<1x128xf32> to vector<1x1x128xf32>
    %397 = vector.broadcast %396 : vector<1x1x128xf32> to vector<6x9x128xf32>
    %398 = arith.mulf %395, %397 : vector<6x9x128xf32>
    %399 = arith.addf %392, %398 : vector<6x9x128xf32>
    %c0_240 = arith.constant 0 : index
    %c7_241 = arith.constant 7 : index
    %c6_242 = arith.constant 6 : index
    %c0_243 = arith.constant 0 : index
    %400 = vector.load %arg2[%c0_240, %c7_241, %c6_242, %c0_243] : memref<1x8x8x128xf32, #tpu.memory_space<vmem>>, vector<1x1x1x128xf32>
    %401 = vector.shape_cast %400 : vector<1x1x1x128xf32> to vector<1x128xf32>
    %402 = vector.extract_strided_slice %350 {offsets = [7, 0, 0], sizes = [6, 9, 128], strides = [1, 1, 1]} : vector<13x9x128xf32> to vector<6x9x128xf32>
    %403 = vector.shape_cast %401 : vector<1x128xf32> to vector<1x1x128xf32>
    %404 = vector.broadcast %403 : vector<1x1x128xf32> to vector<6x9x128xf32>
    %405 = arith.mulf %402, %404 : vector<6x9x128xf32>
    %406 = arith.addf %399, %405 : vector<6x9x128xf32>
    %c0_244 = arith.constant 0 : index
    %c0_245 = arith.constant 0 : index
    %c7_246 = arith.constant 7 : index
    %c0_247 = arith.constant 0 : index
    %407 = vector.load %arg3[%c0_244, %c0_245, %c7_246, %c0_247] : memref<1x16x16x128xf32, #tpu.memory_space<vmem>>, vector<1x13x9x128xf32>
    %408 = vector.shape_cast %407 : vector<1x13x9x128xf32> to vector<13x9x128xf32>
    %c0_248 = arith.constant 0 : index
    %c0_249 = arith.constant 0 : index
    %c7_250 = arith.constant 7 : index
    %c0_251 = arith.constant 0 : index
    %409 = vector.load %arg2[%c0_248, %c0_249, %c7_250, %c0_251] : memref<1x8x8x128xf32, #tpu.memory_space<vmem>>, vector<1x1x1x128xf32>
    %410 = vector.shape_cast %409 : vector<1x1x1x128xf32> to vector<1x128xf32>
    %411 = vector.extract_strided_slice %408 {offsets = [0, 0, 0], sizes = [6, 9, 128], strides = [1, 1, 1]} : vector<13x9x128xf32> to vector<6x9x128xf32>
    %412 = vector.shape_cast %410 : vector<1x128xf32> to vector<1x1x128xf32>
    %413 = vector.broadcast %412 : vector<1x1x128xf32> to vector<6x9x128xf32>
    %414 = arith.mulf %411, %413 : vector<6x9x128xf32>
    %415 = arith.addf %406, %414 : vector<6x9x128xf32>
    %c0_252 = arith.constant 0 : index
    %c1_253 = arith.constant 1 : index
    %c7_254 = arith.constant 7 : index
    %c0_255 = arith.constant 0 : index
    %416 = vector.load %arg2[%c0_252, %c1_253, %c7_254, %c0_255] : memref<1x8x8x128xf32, #tpu.memory_space<vmem>>, vector<1x1x1x128xf32>
    %417 = vector.shape_cast %416 : vector<1x1x1x128xf32> to vector<1x128xf32>
    %418 = vector.extract_strided_slice %408 {offsets = [1, 0, 0], sizes = [6, 9, 128], strides = [1, 1, 1]} : vector<13x9x128xf32> to vector<6x9x128xf32>
    %419 = vector.shape_cast %417 : vector<1x128xf32> to vector<1x1x128xf32>
    %420 = vector.broadcast %419 : vector<1x1x128xf32> to vector<6x9x128xf32>
    %421 = arith.mulf %418, %420 : vector<6x9x128xf32>
    %422 = arith.addf %415, %421 : vector<6x9x128xf32>
    %c0_256 = arith.constant 0 : index
    %c2_257 = arith.constant 2 : index
    %c7_258 = arith.constant 7 : index
    %c0_259 = arith.constant 0 : index
    %423 = vector.load %arg2[%c0_256, %c2_257, %c7_258, %c0_259] : memref<1x8x8x128xf32, #tpu.memory_space<vmem>>, vector<1x1x1x128xf32>
    %424 = vector.shape_cast %423 : vector<1x1x1x128xf32> to vector<1x128xf32>
    %425 = vector.extract_strided_slice %408 {offsets = [2, 0, 0], sizes = [6, 9, 128], strides = [1, 1, 1]} : vector<13x9x128xf32> to vector<6x9x128xf32>
    %426 = vector.shape_cast %424 : vector<1x128xf32> to vector<1x1x128xf32>
    %427 = vector.broadcast %426 : vector<1x1x128xf32> to vector<6x9x128xf32>
    %428 = arith.mulf %425, %427 : vector<6x9x128xf32>
    %429 = arith.addf %422, %428 : vector<6x9x128xf32>
    %c0_260 = arith.constant 0 : index
    %c3_261 = arith.constant 3 : index
    %c7_262 = arith.constant 7 : index
    %c0_263 = arith.constant 0 : index
    %430 = vector.load %arg2[%c0_260, %c3_261, %c7_262, %c0_263] : memref<1x8x8x128xf32, #tpu.memory_space<vmem>>, vector<1x1x1x128xf32>
    %431 = vector.shape_cast %430 : vector<1x1x1x128xf32> to vector<1x128xf32>
    %432 = vector.extract_strided_slice %408 {offsets = [3, 0, 0], sizes = [6, 9, 128], strides = [1, 1, 1]} : vector<13x9x128xf32> to vector<6x9x128xf32>
    %433 = vector.shape_cast %431 : vector<1x128xf32> to vector<1x1x128xf32>
    %434 = vector.broadcast %433 : vector<1x1x128xf32> to vector<6x9x128xf32>
    %435 = arith.mulf %432, %434 : vector<6x9x128xf32>
    %436 = arith.addf %429, %435 : vector<6x9x128xf32>
    %c0_264 = arith.constant 0 : index
    %c4_265 = arith.constant 4 : index
    %c7_266 = arith.constant 7 : index
    %c0_267 = arith.constant 0 : index
    %437 = vector.load %arg2[%c0_264, %c4_265, %c7_266, %c0_267] : memref<1x8x8x128xf32, #tpu.memory_space<vmem>>, vector<1x1x1x128xf32>
    %438 = vector.shape_cast %437 : vector<1x1x1x128xf32> to vector<1x128xf32>
    %439 = vector.extract_strided_slice %408 {offsets = [4, 0, 0], sizes = [6, 9, 128], strides = [1, 1, 1]} : vector<13x9x128xf32> to vector<6x9x128xf32>
    %440 = vector.shape_cast %438 : vector<1x128xf32> to vector<1x1x128xf32>
    %441 = vector.broadcast %440 : vector<1x1x128xf32> to vector<6x9x128xf32>
    %442 = arith.mulf %439, %441 : vector<6x9x128xf32>
    %443 = arith.addf %436, %442 : vector<6x9x128xf32>
    %c0_268 = arith.constant 0 : index
    %c5_269 = arith.constant 5 : index
    %c7_270 = arith.constant 7 : index
    %c0_271 = arith.constant 0 : index
    %444 = vector.load %arg2[%c0_268, %c5_269, %c7_270, %c0_271] : memref<1x8x8x128xf32, #tpu.memory_space<vmem>>, vector<1x1x1x128xf32>
    %445 = vector.shape_cast %444 : vector<1x1x1x128xf32> to vector<1x128xf32>
    %446 = vector.extract_strided_slice %408 {offsets = [5, 0, 0], sizes = [6, 9, 128], strides = [1, 1, 1]} : vector<13x9x128xf32> to vector<6x9x128xf32>
    %447 = vector.shape_cast %445 : vector<1x128xf32> to vector<1x1x128xf32>
    %448 = vector.broadcast %447 : vector<1x1x128xf32> to vector<6x9x128xf32>
    %449 = arith.mulf %446, %448 : vector<6x9x128xf32>
    %450 = arith.addf %443, %449 : vector<6x9x128xf32>
    %c0_272 = arith.constant 0 : index
    %c6_273 = arith.constant 6 : index
    %c7_274 = arith.constant 7 : index
    %c0_275 = arith.constant 0 : index
    %451 = vector.load %arg2[%c0_272, %c6_273, %c7_274, %c0_275] : memref<1x8x8x128xf32, #tpu.memory_space<vmem>>, vector<1x1x1x128xf32>
    %452 = vector.shape_cast %451 : vector<1x1x1x128xf32> to vector<1x128xf32>
    %453 = vector.extract_strided_slice %408 {offsets = [6, 0, 0], sizes = [6, 9, 128], strides = [1, 1, 1]} : vector<13x9x128xf32> to vector<6x9x128xf32>
    %454 = vector.shape_cast %452 : vector<1x128xf32> to vector<1x1x128xf32>
    %455 = vector.broadcast %454 : vector<1x1x128xf32> to vector<6x9x128xf32>
    %456 = arith.mulf %453, %455 : vector<6x9x128xf32>
    %457 = arith.addf %450, %456 : vector<6x9x128xf32>
    %c0_276 = arith.constant 0 : index
    %c7_277 = arith.constant 7 : index
    %c7_278 = arith.constant 7 : index
    %c0_279 = arith.constant 0 : index
    %458 = vector.load %arg2[%c0_276, %c7_277, %c7_278, %c0_279] : memref<1x8x8x128xf32, #tpu.memory_space<vmem>>, vector<1x1x1x128xf32>
    %459 = vector.shape_cast %458 : vector<1x1x1x128xf32> to vector<1x128xf32>
    %460 = vector.extract_strided_slice %408 {offsets = [7, 0, 0], sizes = [6, 9, 128], strides = [1, 1, 1]} : vector<13x9x128xf32> to vector<6x9x128xf32>
    %461 = vector.shape_cast %459 : vector<1x128xf32> to vector<1x1x128xf32>
    %462 = vector.broadcast %461 : vector<1x1x128xf32> to vector<6x9x128xf32>
    %463 = arith.mulf %460, %462 : vector<6x9x128xf32>
    %464 = arith.addf %457, %463 : vector<6x9x128xf32>
    %c0_280 = arith.constant 0 : index
    %c0_281 = arith.constant 0 : index
    %c0_282 = arith.constant 0 : index
    %c0_283 = arith.constant 0 : index
    %465 = vector.load %arg4[%c0_280, %c0_281, %c0_282, %c0_283] : memref<1x9x9x128xf32, #tpu.memory_space<vmem>>, vector<1x6x9x128xf32>
    %466 = vector.shape_cast %465 : vector<1x6x9x128xf32> to vector<6x9x128xf32>
    %467 = vector.shape_cast %464 : vector<6x9x128xf32> to vector<1x6x9x128xf32>
    tpu.vector_store %arg4[%c0_280, %c0_281, %c0_282, %c0_283], %467 {strides = array<i32>} : memref<1x9x9x128xf32, #tpu.memory_space<vmem>>, vector<1x6x9x128xf32>,
    %cst_284 = arith.constant 0.000000e+00 : f32
    %468 = vector.broadcast %cst_284 : f32 to vector<3x9x128xf32>
    %c0_285 = arith.constant 0 : index
    %c6_286 = arith.constant 6 : index
    %c0_287 = arith.constant 0 : index
    %c0_288 = arith.constant 0 : index
    %469 = vector.load %arg3[%c0_285, %c6_286, %c0_287, %c0_288] : memref<1x16x16x128xf32, #tpu.memory_space<vmem>>, vector<1x10x9x128xf32>
    %470 = vector.shape_cast %469 : vector<1x10x9x128xf32> to vector<10x9x128xf32>
    %c0_289 = arith.constant 0 : index
    %c0_290 = arith.constant 0 : index
    %c0_291 = arith.constant 0 : index
    %c0_292 = arith.constant 0 : index
    %471 = vector.load %arg2[%c0_289, %c0_290, %c0_291, %c0_292] : memref<1x8x8x128xf32, #tpu.memory_space<vmem>>, vector<1x1x1x128xf32>
    %472 = vector.shape_cast %471 : vector<1x1x1x128xf32> to vector<1x128xf32>
    %473 = vector.extract_strided_slice %470 {offsets = [0, 0, 0], sizes = [3, 9, 128], strides = [1, 1, 1]} : vector<10x9x128xf32> to vector<3x9x128xf32>
    %474 = vector.shape_cast %472 : vector<1x128xf32> to vector<1x1x128xf32>
    %475 = vector.broadcast %474 : vector<1x1x128xf32> to vector<3x9x128xf32>
    %476 = arith.mulf %473, %475 : vector<3x9x128xf32>
    %477 = arith.addf %468, %476 : vector<3x9x128xf32>
    %c0_293 = arith.constant 0 : index
    %c1_294 = arith.constant 1 : index
    %c0_295 = arith.constant 0 : index
    %c0_296 = arith.constant 0 : index
    %478 = vector.load %arg2[%c0_293, %c1_294, %c0_295, %c0_296] : memref<1x8x8x128xf32, #tpu.memory_space<vmem>>, vector<1x1x1x128xf32>
    %479 = vector.shape_cast %478 : vector<1x1x1x128xf32> to vector<1x128xf32>
    %480 = vector.extract_strided_slice %470 {offsets = [1, 0, 0], sizes = [3, 9, 128], strides = [1, 1, 1]} : vector<10x9x128xf32> to vector<3x9x128xf32>
    %481 = vector.shape_cast %479 : vector<1x128xf32> to vector<1x1x128xf32>
    %482 = vector.broadcast %481 : vector<1x1x128xf32> to vector<3x9x128xf32>
    %483 = arith.mulf %480, %482 : vector<3x9x128xf32>
    %484 = arith.addf %477, %483 : vector<3x9x128xf32>
    %c0_297 = arith.constant 0 : index
    %c2_298 = arith.constant 2 : index
    %c0_299 = arith.constant 0 : index
    %c0_300 = arith.constant 0 : index
    %485 = vector.load %arg2[%c0_297, %c2_298, %c0_299, %c0_300] : memref<1x8x8x128xf32, #tpu.memory_space<vmem>>, vector<1x1x1x128xf32>
    %486 = vector.shape_cast %485 : vector<1x1x1x128xf32> to vector<1x128xf32>
    %487 = vector.extract_strided_slice %470 {offsets = [2, 0, 0], sizes = [3, 9, 128], strides = [1, 1, 1]} : vector<10x9x128xf32> to vector<3x9x128xf32>
    %488 = vector.shape_cast %486 : vector<1x128xf32> to vector<1x1x128xf32>
    %489 = vector.broadcast %488 : vector<1x1x128xf32> to vector<3x9x128xf32>
    %490 = arith.mulf %487, %489 : vector<3x9x128xf32>
    %491 = arith.addf %484, %490 : vector<3x9x128xf32>
    %c0_301 = arith.constant 0 : index
    %c3_302 = arith.constant 3 : index
    %c0_303 = arith.constant 0 : index
    %c0_304 = arith.constant 0 : index
    %492 = vector.load %arg2[%c0_301, %c3_302, %c0_303, %c0_304] : memref<1x8x8x128xf32, #tpu.memory_space<vmem>>, vector<1x1x1x128xf32>
    %493 = vector.shape_cast %492 : vector<1x1x1x128xf32> to vector<1x128xf32>
    %494 = vector.extract_strided_slice %470 {offsets = [3, 0, 0], sizes = [3, 9, 128], strides = [1, 1, 1]} : vector<10x9x128xf32> to vector<3x9x128xf32>
    %495 = vector.shape_cast %493 : vector<1x128xf32> to vector<1x1x128xf32>
    %496 = vector.broadcast %495 : vector<1x1x128xf32> to vector<3x9x128xf32>
    %497 = arith.mulf %494, %496 : vector<3x9x128xf32>
    %498 = arith.addf %491, %497 : vector<3x9x128xf32>
    %c0_305 = arith.constant 0 : index
    %c4_306 = arith.constant 4 : index
    %c0_307 = arith.constant 0 : index
    %c0_308 = arith.constant 0 : index
    %499 = vector.load %arg2[%c0_305, %c4_306, %c0_307, %c0_308] : memref<1x8x8x128xf32, #tpu.memory_space<vmem>>, vector<1x1x1x128xf32>
    %500 = vector.shape_cast %499 : vector<1x1x1x128xf32> to vector<1x128xf32>
    %501 = vector.extract_strided_slice %470 {offsets = [4, 0, 0], sizes = [3, 9, 128], strides = [1, 1, 1]} : vector<10x9x128xf32> to vector<3x9x128xf32>
    %502 = vector.shape_cast %500 : vector<1x128xf32> to vector<1x1x128xf32>
    %503 = vector.broadcast %502 : vector<1x1x128xf32> to vector<3x9x128xf32>
    %504 = arith.mulf %501, %503 : vector<3x9x128xf32>
    %505 = arith.addf %498, %504 : vector<3x9x128xf32>
    %c0_309 = arith.constant 0 : index
    %c5_310 = arith.constant 5 : index
    %c0_311 = arith.constant 0 : index
    %c0_312 = arith.constant 0 : index
    %506 = vector.load %arg2[%c0_309, %c5_310, %c0_311, %c0_312] : memref<1x8x8x128xf32, #tpu.memory_space<vmem>>, vector<1x1x1x128xf32>
    %507 = vector.shape_cast %506 : vector<1x1x1x128xf32> to vector<1x128xf32>
    %508 = vector.extract_strided_slice %470 {offsets = [5, 0, 0], sizes = [3, 9, 128], strides = [1, 1, 1]} : vector<10x9x128xf32> to vector<3x9x128xf32>
    %509 = vector.shape_cast %507 : vector<1x128xf32> to vector<1x1x128xf32>
    %510 = vector.broadcast %509 : vector<1x1x128xf32> to vector<3x9x128xf32>
    %511 = arith.mulf %508, %510 : vector<3x9x128xf32>
    %512 = arith.addf %505, %511 : vector<3x9x128xf32>
    %c0_313 = arith.constant 0 : index
    %c6_314 = arith.constant 6 : index
    %c0_315 = arith.constant 0 : index
    %c0_316 = arith.constant 0 : index
    %513 = vector.load %arg2[%c0_313, %c6_314, %c0_315, %c0_316] : memref<1x8x8x128xf32, #tpu.memory_space<vmem>>, vector<1x1x1x128xf32>
    %514 = vector.shape_cast %513 : vector<1x1x1x128xf32> to vector<1x128xf32>
    %515 = vector.extract_strided_slice %470 {offsets = [6, 0, 0], sizes = [3, 9, 128], strides = [1, 1, 1]} : vector<10x9x128xf32> to vector<3x9x128xf32>
    %516 = vector.shape_cast %514 : vector<1x128xf32> to vector<1x1x128xf32>
    %517 = vector.broadcast %516 : vector<1x1x128xf32> to vector<3x9x128xf32>
    %518 = arith.mulf %515, %517 : vector<3x9x128xf32>
    %519 = arith.addf %512, %518 : vector<3x9x128xf32>
    %c0_317 = arith.constant 0 : index
    %c7_318 = arith.constant 7 : index
    %c0_319 = arith.constant 0 : index
    %c0_320 = arith.constant 0 : index
    %520 = vector.load %arg2[%c0_317, %c7_318, %c0_319, %c0_320] : memref<1x8x8x128xf32, #tpu.memory_space<vmem>>, vector<1x1x1x128xf32>
    %521 = vector.shape_cast %520 : vector<1x1x1x128xf32> to vector<1x128xf32>
    %522 = vector.extract_strided_slice %470 {offsets = [7, 0, 0], sizes = [3, 9, 128], strides = [1, 1, 1]} : vector<10x9x128xf32> to vector<3x9x128xf32>
    %523 = vector.shape_cast %521 : vector<1x128xf32> to vector<1x1x128xf32>
    %524 = vector.broadcast %523 : vector<1x1x128xf32> to vector<3x9x128xf32>
    %525 = arith.mulf %522, %524 : vector<3x9x128xf32>
    %526 = arith.addf %519, %525 : vector<3x9x128xf32>
    %c0_321 = arith.constant 0 : index
    %c6_322 = arith.constant 6 : index
    %c1_323 = arith.constant 1 : index
    %c0_324 = arith.constant 0 : index
    %527 = vector.load %arg3[%c0_321, %c6_322, %c1_323, %c0_324] : memref<1x16x16x128xf32, #tpu.memory_space<vmem>>, vector<1x10x9x128xf32>
    %528 = vector.shape_cast %527 : vector<1x10x9x128xf32> to vector<10x9x128xf32>
    %c0_325 = arith.constant 0 : index
    %c0_326 = arith.constant 0 : index
    %c1_327 = arith.constant 1 : index
    %c0_328 = arith.constant 0 : index
    %529 = vector.load %arg2[%c0_325, %c0_326, %c1_327, %c0_328] : memref<1x8x8x128xf32, #tpu.memory_space<vmem>>, vector<1x1x1x128xf32>
    %530 = vector.shape_cast %529 : vector<1x1x1x128xf32> to vector<1x128xf32>
    %531 = vector.extract_strided_slice %528 {offsets = [0, 0, 0], sizes = [3, 9, 128], strides = [1, 1, 1]} : vector<10x9x128xf32> to vector<3x9x128xf32>
    %532 = vector.shape_cast %530 : vector<1x128xf32> to vector<1x1x128xf32>
    %533 = vector.broadcast %532 : vector<1x1x128xf32> to vector<3x9x128xf32>
    %534 = arith.mulf %531, %533 : vector<3x9x128xf32>
    %535 = arith.addf %526, %534 : vector<3x9x128xf32>
    %c0_329 = arith.constant 0 : index
    %c1_330 = arith.constant 1 : index
    %c1_331 = arith.constant 1 : index
    %c0_332 = arith.constant 0 : index
    %536 = vector.load %arg2[%c0_329, %c1_330, %c1_331, %c0_332] : memref<1x8x8x128xf32, #tpu.memory_space<vmem>>, vector<1x1x1x128xf32>
    %537 = vector.shape_cast %536 : vector<1x1x1x128xf32> to vector<1x128xf32>
    %538 = vector.extract_strided_slice %528 {offsets = [1, 0, 0], sizes = [3, 9, 128], strides = [1, 1, 1]} : vector<10x9x128xf32> to vector<3x9x128xf32>
    %539 = vector.shape_cast %537 : vector<1x128xf32> to vector<1x1x128xf32>
    %540 = vector.broadcast %539 : vector<1x1x128xf32> to vector<3x9x128xf32>
    %541 = arith.mulf %538, %540 : vector<3x9x128xf32>
    %542 = arith.addf %535, %541 : vector<3x9x128xf32>
    %c0_333 = arith.constant 0 : index
    %c2_334 = arith.constant 2 : index
    %c1_335 = arith.constant 1 : index
    %c0_336 = arith.constant 0 : index
    %543 = vector.load %arg2[%c0_333, %c2_334, %c1_335, %c0_336] : memref<1x8x8x128xf32, #tpu.memory_space<vmem>>, vector<1x1x1x128xf32>
    %544 = vector.shape_cast %543 : vector<1x1x1x128xf32> to vector<1x128xf32>
    %545 = vector.extract_strided_slice %528 {offsets = [2, 0, 0], sizes = [3, 9, 128], strides = [1, 1, 1]} : vector<10x9x128xf32> to vector<3x9x128xf32>
    %546 = vector.shape_cast %544 : vector<1x128xf32> to vector<1x1x128xf32>
    %547 = vector.broadcast %546 : vector<1x1x128xf32> to vector<3x9x128xf32>
    %548 = arith.mulf %545, %547 : vector<3x9x128xf32>
    %549 = arith.addf %542, %548 : vector<3x9x128xf32>
    %c0_337 = arith.constant 0 : index
    %c3_338 = arith.constant 3 : index
    %c1_339 = arith.constant 1 : index
    %c0_340 = arith.constant 0 : index
    %550 = vector.load %arg2[%c0_337, %c3_338, %c1_339, %c0_340] : memref<1x8x8x128xf32, #tpu.memory_space<vmem>>, vector<1x1x1x128xf32>
    %551 = vector.shape_cast %550 : vector<1x1x1x128xf32> to vector<1x128xf32>
    %552 = vector.extract_strided_slice %528 {offsets = [3, 0, 0], sizes = [3, 9, 128], strides = [1, 1, 1]} : vector<10x9x128xf32> to vector<3x9x128xf32>
    %553 = vector.shape_cast %551 : vector<1x128xf32> to vector<1x1x128xf32>
    %554 = vector.broadcast %553 : vector<1x1x128xf32> to vector<3x9x128xf32>
    %555 = arith.mulf %552, %554 : vector<3x9x128xf32>
    %556 = arith.addf %549, %555 : vector<3x9x128xf32>
    %c0_341 = arith.constant 0 : index
    %c4_342 = arith.constant 4 : index
    %c1_343 = arith.constant 1 : index
    %c0_344 = arith.constant 0 : index
    %557 = vector.load %arg2[%c0_341, %c4_342, %c1_343, %c0_344] : memref<1x8x8x128xf32, #tpu.memory_space<vmem>>, vector<1x1x1x128xf32>
    %558 = vector.shape_cast %557 : vector<1x1x1x128xf32> to vector<1x128xf32>
    %559 = vector.extract_strided_slice %528 {offsets = [4, 0, 0], sizes = [3, 9, 128], strides = [1, 1, 1]} : vector<10x9x128xf32> to vector<3x9x128xf32>
    %560 = vector.shape_cast %558 : vector<1x128xf32> to vector<1x1x128xf32>
    %561 = vector.broadcast %560 : vector<1x1x128xf32> to vector<3x9x128xf32>
    %562 = arith.mulf %559, %561 : vector<3x9x128xf32>
    %563 = arith.addf %556, %562 : vector<3x9x128xf32>
    %c0_345 = arith.constant 0 : index
    %c5_346 = arith.constant 5 : index
    %c1_347 = arith.constant 1 : index
    %c0_348 = arith.constant 0 : index
    %564 = vector.load %arg2[%c0_345, %c5_346, %c1_347, %c0_348] : memref<1x8x8x128xf32, #tpu.memory_space<vmem>>, vector<1x1x1x128xf32>
    %565 = vector.shape_cast %564 : vector<1x1x1x128xf32> to vector<1x128xf32>
    %566 = vector.extract_strided_slice %528 {offsets = [5, 0, 0], sizes = [3, 9, 128], strides = [1, 1, 1]} : vector<10x9x128xf32> to vector<3x9x128xf32>
    %567 = vector.shape_cast %565 : vector<1x128xf32> to vector<1x1x128xf32>
    %568 = vector.broadcast %567 : vector<1x1x128xf32> to vector<3x9x128xf32>
    %569 = arith.mulf %566, %568 : vector<3x9x128xf32>
    %570 = arith.addf %563, %569 : vector<3x9x128xf32>
    %c0_349 = arith.constant 0 : index
    %c6_350 = arith.constant 6 : index
    %c1_351 = arith.constant 1 : index
    %c0_352 = arith.constant 0 : index
    %571 = vector.load %arg2[%c0_349, %c6_350, %c1_351, %c0_352] : memref<1x8x8x128xf32, #tpu.memory_space<vmem>>, vector<1x1x1x128xf32>
    %572 = vector.shape_cast %571 : vector<1x1x1x128xf32> to vector<1x128xf32>
    %573 = vector.extract_strided_slice %528 {offsets = [6, 0, 0], sizes = [3, 9, 128], strides = [1, 1, 1]} : vector<10x9x128xf32> to vector<3x9x128xf32>
    %574 = vector.shape_cast %572 : vector<1x128xf32> to vector<1x1x128xf32>
    %575 = vector.broadcast %574 : vector<1x1x128xf32> to vector<3x9x128xf32>
    %576 = arith.mulf %573, %575 : vector<3x9x128xf32>
    %577 = arith.addf %570, %576 : vector<3x9x128xf32>
    %c0_353 = arith.constant 0 : index
    %c7_354 = arith.constant 7 : index
    %c1_355 = arith.constant 1 : index
    %c0_356 = arith.constant 0 : index
    %578 = vector.load %arg2[%c0_353, %c7_354, %c1_355, %c0_356] : memref<1x8x8x128xf32, #tpu.memory_space<vmem>>, vector<1x1x1x128xf32>
    %579 = vector.shape_cast %578 : vector<1x1x1x128xf32> to vector<1x128xf32>
    %580 = vector.extract_strided_slice %528 {offsets = [7, 0, 0], sizes = [3, 9, 128], strides = [1, 1, 1]} : vector<10x9x128xf32> to vector<3x9x128xf32>
    %581 = vector.shape_cast %579 : vector<1x128xf32> to vector<1x1x128xf32>
    %582 = vector.broadcast %581 : vector<1x1x128xf32> to vector<3x9x128xf32>
    %583 = arith.mulf %580, %582 : vector<3x9x128xf32>
    %584 = arith.addf %577, %583 : vector<3x9x128xf32>
    %c0_357 = arith.constant 0 : index
    %c6_358 = arith.constant 6 : index
    %c2_359 = arith.constant 2 : index
    %c0_360 = arith.constant 0 : index
    %585 = vector.load %arg3[%c0_357, %c6_358, %c2_359, %c0_360] : memref<1x16x16x128xf32, #tpu.memory_space<vmem>>, vector<1x10x9x128xf32>
    %586 = vector.shape_cast %585 : vector<1x10x9x128xf32> to vector<10x9x128xf32>
    %c0_361 = arith.constant 0 : index
    %c0_362 = arith.constant 0 : index
    %c2_363 = arith.constant 2 : index
    %c0_364 = arith.constant 0 : index
    %587 = vector.load %arg2[%c0_361, %c0_362, %c2_363, %c0_364] : memref<1x8x8x128xf32, #tpu.memory_space<vmem>>, vector<1x1x1x128xf32>
    %588 = vector.shape_cast %587 : vector<1x1x1x128xf32> to vector<1x128xf32>
    %589 = vector.extract_strided_slice %586 {offsets = [0, 0, 0], sizes = [3, 9, 128], strides = [1, 1, 1]} : vector<10x9x128xf32> to vector<3x9x128xf32>
    %590 = vector.shape_cast %588 : vector<1x128xf32> to vector<1x1x128xf32>
    %591 = vector.broadcast %590 : vector<1x1x128xf32> to vector<3x9x128xf32>
    %592 = arith.mulf %589, %591 : vector<3x9x128xf32>
    %593 = arith.addf %584, %592 : vector<3x9x128xf32>
    %c0_365 = arith.constant 0 : index
    %c1_366 = arith.constant 1 : index
    %c2_367 = arith.constant 2 : index
    %c0_368 = arith.constant 0 : index
    %594 = vector.load %arg2[%c0_365, %c1_366, %c2_367, %c0_368] : memref<1x8x8x128xf32, #tpu.memory_space<vmem>>, vector<1x1x1x128xf32>
    %595 = vector.shape_cast %594 : vector<1x1x1x128xf32> to vector<1x128xf32>
    %596 = vector.extract_strided_slice %586 {offsets = [1, 0, 0], sizes = [3, 9, 128], strides = [1, 1, 1]} : vector<10x9x128xf32> to vector<3x9x128xf32>
    %597 = vector.shape_cast %595 : vector<1x128xf32> to vector<1x1x128xf32>
    %598 = vector.broadcast %597 : vector<1x1x128xf32> to vector<3x9x128xf32>
    %599 = arith.mulf %596, %598 : vector<3x9x128xf32>
    %600 = arith.addf %593, %599 : vector<3x9x128xf32>
    %c0_369 = arith.constant 0 : index
    %c2_370 = arith.constant 2 : index
    %c2_371 = arith.constant 2 : index
    %c0_372 = arith.constant 0 : index
    %601 = vector.load %arg2[%c0_369, %c2_370, %c2_371, %c0_372] : memref<1x8x8x128xf32, #tpu.memory_space<vmem>>, vector<1x1x1x128xf32>
    %602 = vector.shape_cast %601 : vector<1x1x1x128xf32> to vector<1x128xf32>
    %603 = vector.extract_strided_slice %586 {offsets = [2, 0, 0], sizes = [3, 9, 128], strides = [1, 1, 1]} : vector<10x9x128xf32> to vector<3x9x128xf32>
    %604 = vector.shape_cast %602 : vector<1x128xf32> to vector<1x1x128xf32>
    %605 = vector.broadcast %604 : vector<1x1x128xf32> to vector<3x9x128xf32>
    %606 = arith.mulf %603, %605 : vector<3x9x128xf32>
    %607 = arith.addf %600, %606 : vector<3x9x128xf32>
    %c0_373 = arith.constant 0 : index
    %c3_374 = arith.constant 3 : index
    %c2_375 = arith.constant 2 : index
    %c0_376 = arith.constant 0 : index
    %608 = vector.load %arg2[%c0_373, %c3_374, %c2_375, %c0_376] : memref<1x8x8x128xf32, #tpu.memory_space<vmem>>, vector<1x1x1x128xf32>
    %609 = vector.shape_cast %608 : vector<1x1x1x128xf32> to vector<1x128xf32>
    %610 = vector.extract_strided_slice %586 {offsets = [3, 0, 0], sizes = [3, 9, 128], strides = [1, 1, 1]} : vector<10x9x128xf32> to vector<3x9x128xf32>
    %611 = vector.shape_cast %609 : vector<1x128xf32> to vector<1x1x128xf32>
    %612 = vector.broadcast %611 : vector<1x1x128xf32> to vector<3x9x128xf32>
    %613 = arith.mulf %610, %612 : vector<3x9x128xf32>
    %614 = arith.addf %607, %613 : vector<3x9x128xf32>
    %c0_377 = arith.constant 0 : index
    %c4_378 = arith.constant 4 : index
    %c2_379 = arith.constant 2 : index
    %c0_380 = arith.constant 0 : index
    %615 = vector.load %arg2[%c0_377, %c4_378, %c2_379, %c0_380] : memref<1x8x8x128xf32, #tpu.memory_space<vmem>>, vector<1x1x1x128xf32>
    %616 = vector.shape_cast %615 : vector<1x1x1x128xf32> to vector<1x128xf32>
    %617 = vector.extract_strided_slice %586 {offsets = [4, 0, 0], sizes = [3, 9, 128], strides = [1, 1, 1]} : vector<10x9x128xf32> to vector<3x9x128xf32>
    %618 = vector.shape_cast %616 : vector<1x128xf32> to vector<1x1x128xf32>
    %619 = vector.broadcast %618 : vector<1x1x128xf32> to vector<3x9x128xf32>
    %620 = arith.mulf %617, %619 : vector<3x9x128xf32>
    %621 = arith.addf %614, %620 : vector<3x9x128xf32>
    %c0_381 = arith.constant 0 : index
    %c5_382 = arith.constant 5 : index
    %c2_383 = arith.constant 2 : index
    %c0_384 = arith.constant 0 : index
    %622 = vector.load %arg2[%c0_381, %c5_382, %c2_383, %c0_384] : memref<1x8x8x128xf32, #tpu.memory_space<vmem>>, vector<1x1x1x128xf32>
    %623 = vector.shape_cast %622 : vector<1x1x1x128xf32> to vector<1x128xf32>
    %624 = vector.extract_strided_slice %586 {offsets = [5, 0, 0], sizes = [3, 9, 128], strides = [1, 1, 1]} : vector<10x9x128xf32> to vector<3x9x128xf32>
    %625 = vector.shape_cast %623 : vector<1x128xf32> to vector<1x1x128xf32>
    %626 = vector.broadcast %625 : vector<1x1x128xf32> to vector<3x9x128xf32>
    %627 = arith.mulf %624, %626 : vector<3x9x128xf32>
    %628 = arith.addf %621, %627 : vector<3x9x128xf32>
    %c0_385 = arith.constant 0 : index
    %c6_386 = arith.constant 6 : index
    %c2_387 = arith.constant 2 : index
    %c0_388 = arith.constant 0 : index
    %629 = vector.load %arg2[%c0_385, %c6_386, %c2_387, %c0_388] : memref<1x8x8x128xf32, #tpu.memory_space<vmem>>, vector<1x1x1x128xf32>
    %630 = vector.shape_cast %629 : vector<1x1x1x128xf32> to vector<1x128xf32>
    %631 = vector.extract_strided_slice %586 {offsets = [6, 0, 0], sizes = [3, 9, 128], strides = [1, 1, 1]} : vector<10x9x128xf32> to vector<3x9x128xf32>
    %632 = vector.shape_cast %630 : vector<1x128xf32> to vector<1x1x128xf32>
    %633 = vector.broadcast %632 : vector<1x1x128xf32> to vector<3x9x128xf32>
    %634 = arith.mulf %631, %633 : vector<3x9x128xf32>
    %635 = arith.addf %628, %634 : vector<3x9x128xf32>
    %c0_389 = arith.constant 0 : index
    %c7_390 = arith.constant 7 : index
    %c2_391 = arith.constant 2 : index
    %c0_392 = arith.constant 0 : index
    %636 = vector.load %arg2[%c0_389, %c7_390, %c2_391, %c0_392] : memref<1x8x8x128xf32, #tpu.memory_space<vmem>>, vector<1x1x1x128xf32>
    %637 = vector.shape_cast %636 : vector<1x1x1x128xf32> to vector<1x128xf32>
    %638 = vector.extract_strided_slice %586 {offsets = [7, 0, 0], sizes = [3, 9, 128], strides = [1, 1, 1]} : vector<10x9x128xf32> to vector<3x9x128xf32>
    %639 = vector.shape_cast %637 : vector<1x128xf32> to vector<1x1x128xf32>
    %640 = vector.broadcast %639 : vector<1x1x128xf32> to vector<3x9x128xf32>
    %641 = arith.mulf %638, %640 : vector<3x9x128xf32>
    %642 = arith.addf %635, %641 : vector<3x9x128xf32>
    %c0_393 = arith.constant 0 : index
    %c6_394 = arith.constant 6 : index
    %c3_395 = arith.constant 3 : index
    %c0_396 = arith.constant 0 : index
    %643 = vector.load %arg3[%c0_393, %c6_394, %c3_395, %c0_396] : memref<1x16x16x128xf32, #tpu.memory_space<vmem>>, vector<1x10x9x128xf32>
    %644 = vector.shape_cast %643 : vector<1x10x9x128xf32> to vector<10x9x128xf32>
    %c0_397 = arith.constant 0 : index
    %c0_398 = arith.constant 0 : index
    %c3_399 = arith.constant 3 : index
    %c0_400 = arith.constant 0 : index
    %645 = vector.load %arg2[%c0_397, %c0_398, %c3_399, %c0_400] : memref<1x8x8x128xf32, #tpu.memory_space<vmem>>, vector<1x1x1x128xf32>
    %646 = vector.shape_cast %645 : vector<1x1x1x128xf32> to vector<1x128xf32>
    %647 = vector.extract_strided_slice %644 {offsets = [0, 0, 0], sizes = [3, 9, 128], strides = [1, 1, 1]} : vector<10x9x128xf32> to vector<3x9x128xf32>
    %648 = vector.shape_cast %646 : vector<1x128xf32> to vector<1x1x128xf32>
    %649 = vector.broadcast %648 : vector<1x1x128xf32> to vector<3x9x128xf32>
    %650 = arith.mulf %647, %649 : vector<3x9x128xf32>
    %651 = arith.addf %642, %650 : vector<3x9x128xf32>
    %c0_401 = arith.constant 0 : index
    %c1_402 = arith.constant 1 : index
    %c3_403 = arith.constant 3 : index
    %c0_404 = arith.constant 0 : index
    %652 = vector.load %arg2[%c0_401, %c1_402, %c3_403, %c0_404] : memref<1x8x8x128xf32, #tpu.memory_space<vmem>>, vector<1x1x1x128xf32>
    %653 = vector.shape_cast %652 : vector<1x1x1x128xf32> to vector<1x128xf32>
    %654 = vector.extract_strided_slice %644 {offsets = [1, 0, 0], sizes = [3, 9, 128], strides = [1, 1, 1]} : vector<10x9x128xf32> to vector<3x9x128xf32>
    %655 = vector.shape_cast %653 : vector<1x128xf32> to vector<1x1x128xf32>
    %656 = vector.broadcast %655 : vector<1x1x128xf32> to vector<3x9x128xf32>
    %657 = arith.mulf %654, %656 : vector<3x9x128xf32>
    %658 = arith.addf %651, %657 : vector<3x9x128xf32>
    %c0_405 = arith.constant 0 : index
    %c2_406 = arith.constant 2 : index
    %c3_407 = arith.constant 3 : index
    %c0_408 = arith.constant 0 : index
    %659 = vector.load %arg2[%c0_405, %c2_406, %c3_407, %c0_408] : memref<1x8x8x128xf32, #tpu.memory_space<vmem>>, vector<1x1x1x128xf32>
    %660 = vector.shape_cast %659 : vector<1x1x1x128xf32> to vector<1x128xf32>
    %661 = vector.extract_strided_slice %644 {offsets = [2, 0, 0], sizes = [3, 9, 128], strides = [1, 1, 1]} : vector<10x9x128xf32> to vector<3x9x128xf32>
    %662 = vector.shape_cast %660 : vector<1x128xf32> to vector<1x1x128xf32>
    %663 = vector.broadcast %662 : vector<1x1x128xf32> to vector<3x9x128xf32>
    %664 = arith.mulf %661, %663 : vector<3x9x128xf32>
    %665 = arith.addf %658, %664 : vector<3x9x128xf32>
    %c0_409 = arith.constant 0 : index
    %c3_410 = arith.constant 3 : index
    %c3_411 = arith.constant 3 : index
    %c0_412 = arith.constant 0 : index
    %666 = vector.load %arg2[%c0_409, %c3_410, %c3_411, %c0_412] : memref<1x8x8x128xf32, #tpu.memory_space<vmem>>, vector<1x1x1x128xf32>
    %667 = vector.shape_cast %666 : vector<1x1x1x128xf32> to vector<1x128xf32>
    %668 = vector.extract_strided_slice %644 {offsets = [3, 0, 0], sizes = [3, 9, 128], strides = [1, 1, 1]} : vector<10x9x128xf32> to vector<3x9x128xf32>
    %669 = vector.shape_cast %667 : vector<1x128xf32> to vector<1x1x128xf32>
    %670 = vector.broadcast %669 : vector<1x1x128xf32> to vector<3x9x128xf32>
    %671 = arith.mulf %668, %670 : vector<3x9x128xf32>
    %672 = arith.addf %665, %671 : vector<3x9x128xf32>
    %c0_413 = arith.constant 0 : index
    %c4_414 = arith.constant 4 : index
    %c3_415 = arith.constant 3 : index
    %c0_416 = arith.constant 0 : index
    %673 = vector.load %arg2[%c0_413, %c4_414, %c3_415, %c0_416] : memref<1x8x8x128xf32, #tpu.memory_space<vmem>>, vector<1x1x1x128xf32>
    %674 = vector.shape_cast %673 : vector<1x1x1x128xf32> to vector<1x128xf32>
    %675 = vector.extract_strided_slice %644 {offsets = [4, 0, 0], sizes = [3, 9, 128], strides = [1, 1, 1]} : vector<10x9x128xf32> to vector<3x9x128xf32>
    %676 = vector.shape_cast %674 : vector<1x128xf32> to vector<1x1x128xf32>
    %677 = vector.broadcast %676 : vector<1x1x128xf32> to vector<3x9x128xf32>
    %678 = arith.mulf %675, %677 : vector<3x9x128xf32>
    %679 = arith.addf %672, %678 : vector<3x9x128xf32>
    %c0_417 = arith.constant 0 : index
    %c5_418 = arith.constant 5 : index
    %c3_419 = arith.constant 3 : index
    %c0_420 = arith.constant 0 : index
    %680 = vector.load %arg2[%c0_417, %c5_418, %c3_419, %c0_420] : memref<1x8x8x128xf32, #tpu.memory_space<vmem>>, vector<1x1x1x128xf32>
    %681 = vector.shape_cast %680 : vector<1x1x1x128xf32> to vector<1x128xf32>
    %682 = vector.extract_strided_slice %644 {offsets = [5, 0, 0], sizes = [3, 9, 128], strides = [1, 1, 1]} : vector<10x9x128xf32> to vector<3x9x128xf32>
    %683 = vector.shape_cast %681 : vector<1x128xf32> to vector<1x1x128xf32>
    %684 = vector.broadcast %683 : vector<1x1x128xf32> to vector<3x9x128xf32>
    %685 = arith.mulf %682, %684 : vector<3x9x128xf32>
    %686 = arith.addf %679, %685 : vector<3x9x128xf32>
    %c0_421 = arith.constant 0 : index
    %c6_422 = arith.constant 6 : index
    %c3_423 = arith.constant 3 : index
    %c0_424 = arith.constant 0 : index
    %687 = vector.load %arg2[%c0_421, %c6_422, %c3_423, %c0_424] : memref<1x8x8x128xf32, #tpu.memory_space<vmem>>, vector<1x1x1x128xf32>
    %688 = vector.shape_cast %687 : vector<1x1x1x128xf32> to vector<1x128xf32>
    %689 = vector.extract_strided_slice %644 {offsets = [6, 0, 0], sizes = [3, 9, 128], strides = [1, 1, 1]} : vector<10x9x128xf32> to vector<3x9x128xf32>
    %690 = vector.shape_cast %688 : vector<1x128xf32> to vector<1x1x128xf32>
    %691 = vector.broadcast %690 : vector<1x1x128xf32> to vector<3x9x128xf32>
    %692 = arith.mulf %689, %691 : vector<3x9x128xf32>
    %693 = arith.addf %686, %692 : vector<3x9x128xf32>
    %c0_425 = arith.constant 0 : index
    %c7_426 = arith.constant 7 : index
    %c3_427 = arith.constant 3 : index
    %c0_428 = arith.constant 0 : index
    %694 = vector.load %arg2[%c0_425, %c7_426, %c3_427, %c0_428] : memref<1x8x8x128xf32, #tpu.memory_space<vmem>>, vector<1x1x1x128xf32>
    %695 = vector.shape_cast %694 : vector<1x1x1x128xf32> to vector<1x128xf32>
    %696 = vector.extract_strided_slice %644 {offsets = [7, 0, 0], sizes = [3, 9, 128], strides = [1, 1, 1]} : vector<10x9x128xf32> to vector<3x9x128xf32>
    %697 = vector.shape_cast %695 : vector<1x128xf32> to vector<1x1x128xf32>
    %698 = vector.broadcast %697 : vector<1x1x128xf32> to vector<3x9x128xf32>
    %699 = arith.mulf %696, %698 : vector<3x9x128xf32>
    %700 = arith.addf %693, %699 : vector<3x9x128xf32>
    %c0_429 = arith.constant 0 : index
    %c6_430 = arith.constant 6 : index
    %c4_431 = arith.constant 4 : index
    %c0_432 = arith.constant 0 : index
    %701 = vector.load %arg3[%c0_429, %c6_430, %c4_431, %c0_432] : memref<1x16x16x128xf32, #tpu.memory_space<vmem>>, vector<1x10x9x128xf32>
    %702 = vector.shape_cast %701 : vector<1x10x9x128xf32> to vector<10x9x128xf32>
    %c0_433 = arith.constant 0 : index
    %c0_434 = arith.constant 0 : index
    %c4_435 = arith.constant 4 : index
    %c0_436 = arith.constant 0 : index
    %703 = vector.load %arg2[%c0_433, %c0_434, %c4_435, %c0_436] : memref<1x8x8x128xf32, #tpu.memory_space<vmem>>, vector<1x1x1x128xf32>
    %704 = vector.shape_cast %703 : vector<1x1x1x128xf32> to vector<1x128xf32>
    %705 = vector.extract_strided_slice %702 {offsets = [0, 0, 0], sizes = [3, 9, 128], strides = [1, 1, 1]} : vector<10x9x128xf32> to vector<3x9x128xf32>
    %706 = vector.shape_cast %704 : vector<1x128xf32> to vector<1x1x128xf32>
    %707 = vector.broadcast %706 : vector<1x1x128xf32> to vector<3x9x128xf32>
    %708 = arith.mulf %705, %707 : vector<3x9x128xf32>
    %709 = arith.addf %700, %708 : vector<3x9x128xf32>
    %c0_437 = arith.constant 0 : index
    %c1_438 = arith.constant 1 : index
    %c4_439 = arith.constant 4 : index
    %c0_440 = arith.constant 0 : index
    %710 = vector.load %arg2[%c0_437, %c1_438, %c4_439, %c0_440] : memref<1x8x8x128xf32, #tpu.memory_space<vmem>>, vector<1x1x1x128xf32>
    %711 = vector.shape_cast %710 : vector<1x1x1x128xf32> to vector<1x128xf32>
    %712 = vector.extract_strided_slice %702 {offsets = [1, 0, 0], sizes = [3, 9, 128], strides = [1, 1, 1]} : vector<10x9x128xf32> to vector<3x9x128xf32>
    %713 = vector.shape_cast %711 : vector<1x128xf32> to vector<1x1x128xf32>
    %714 = vector.broadcast %713 : vector<1x1x128xf32> to vector<3x9x128xf32>
    %715 = arith.mulf %712, %714 : vector<3x9x128xf32>
    %716 = arith.addf %709, %715 : vector<3x9x128xf32>
    %c0_441 = arith.constant 0 : index
    %c2_442 = arith.constant 2 : index
    %c4_443 = arith.constant 4 : index
    %c0_444 = arith.constant 0 : index
    %717 = vector.load %arg2[%c0_441, %c2_442, %c4_443, %c0_444] : memref<1x8x8x128xf32, #tpu.memory_space<vmem>>, vector<1x1x1x128xf32>
    %718 = vector.shape_cast %717 : vector<1x1x1x128xf32> to vector<1x128xf32>
    %719 = vector.extract_strided_slice %702 {offsets = [2, 0, 0], sizes = [3, 9, 128], strides = [1, 1, 1]} : vector<10x9x128xf32> to vector<3x9x128xf32>
    %720 = vector.shape_cast %718 : vector<1x128xf32> to vector<1x1x128xf32>
    %721 = vector.broadcast %720 : vector<1x1x128xf32> to vector<3x9x128xf32>
    %722 = arith.mulf %719, %721 : vector<3x9x128xf32>
    %723 = arith.addf %716, %722 : vector<3x9x128xf32>
    %c0_445 = arith.constant 0 : index
    %c3_446 = arith.constant 3 : index
    %c4_447 = arith.constant 4 : index
    %c0_448 = arith.constant 0 : index
    %724 = vector.load %arg2[%c0_445, %c3_446, %c4_447, %c0_448] : memref<1x8x8x128xf32, #tpu.memory_space<vmem>>, vector<1x1x1x128xf32>
    %725 = vector.shape_cast %724 : vector<1x1x1x128xf32> to vector<1x128xf32>
    %726 = vector.extract_strided_slice %702 {offsets = [3, 0, 0], sizes = [3, 9, 128], strides = [1, 1, 1]} : vector<10x9x128xf32> to vector<3x9x128xf32>
    %727 = vector.shape_cast %725 : vector<1x128xf32> to vector<1x1x128xf32>
    %728 = vector.broadcast %727 : vector<1x1x128xf32> to vector<3x9x128xf32>
    %729 = arith.mulf %726, %728 : vector<3x9x128xf32>
    %730 = arith.addf %723, %729 : vector<3x9x128xf32>
    %c0_449 = arith.constant 0 : index
    %c4_450 = arith.constant 4 : index
    %c4_451 = arith.constant 4 : index
    %c0_452 = arith.constant 0 : index
    %731 = vector.load %arg2[%c0_449, %c4_450, %c4_451, %c0_452] : memref<1x8x8x128xf32, #tpu.memory_space<vmem>>, vector<1x1x1x128xf32>
    %732 = vector.shape_cast %731 : vector<1x1x1x128xf32> to vector<1x128xf32>
    %733 = vector.extract_strided_slice %702 {offsets = [4, 0, 0], sizes = [3, 9, 128], strides = [1, 1, 1]} : vector<10x9x128xf32> to vector<3x9x128xf32>
    %734 = vector.shape_cast %732 : vector<1x128xf32> to vector<1x1x128xf32>
    %735 = vector.broadcast %734 : vector<1x1x128xf32> to vector<3x9x128xf32>
    %736 = arith.mulf %733, %735 : vector<3x9x128xf32>
    %737 = arith.addf %730, %736 : vector<3x9x128xf32>
    %c0_453 = arith.constant 0 : index
    %c5_454 = arith.constant 5 : index
    %c4_455 = arith.constant 4 : index
    %c0_456 = arith.constant 0 : index
    %738 = vector.load %arg2[%c0_453, %c5_454, %c4_455, %c0_456] : memref<1x8x8x128xf32, #tpu.memory_space<vmem>>, vector<1x1x1x128xf32>
    %739 = vector.shape_cast %738 : vector<1x1x1x128xf32> to vector<1x128xf32>
    %740 = vector.extract_strided_slice %702 {offsets = [5, 0, 0], sizes = [3, 9, 128], strides = [1, 1, 1]} : vector<10x9x128xf32> to vector<3x9x128xf32>
    %741 = vector.shape_cast %739 : vector<1x128xf32> to vector<1x1x128xf32>
    %742 = vector.broadcast %741 : vector<1x1x128xf32> to vector<3x9x128xf32>
    %743 = arith.mulf %740, %742 : vector<3x9x128xf32>
    %744 = arith.addf %737, %743 : vector<3x9x128xf32>
    %c0_457 = arith.constant 0 : index
    %c6_458 = arith.constant 6 : index
    %c4_459 = arith.constant 4 : index
    %c0_460 = arith.constant 0 : index
    %745 = vector.load %arg2[%c0_457, %c6_458, %c4_459, %c0_460] : memref<1x8x8x128xf32, #tpu.memory_space<vmem>>, vector<1x1x1x128xf32>
    %746 = vector.shape_cast %745 : vector<1x1x1x128xf32> to vector<1x128xf32>
    %747 = vector.extract_strided_slice %702 {offsets = [6, 0, 0], sizes = [3, 9, 128], strides = [1, 1, 1]} : vector<10x9x128xf32> to vector<3x9x128xf32>
    %748 = vector.shape_cast %746 : vector<1x128xf32> to vector<1x1x128xf32>
    %749 = vector.broadcast %748 : vector<1x1x128xf32> to vector<3x9x128xf32>
    %750 = arith.mulf %747, %749 : vector<3x9x128xf32>
    %751 = arith.addf %744, %750 : vector<3x9x128xf32>
    %c0_461 = arith.constant 0 : index
    %c7_462 = arith.constant 7 : index
    %c4_463 = arith.constant 4 : index
    %c0_464 = arith.constant 0 : index
    %752 = vector.load %arg2[%c0_461, %c7_462, %c4_463, %c0_464] : memref<1x8x8x128xf32, #tpu.memory_space<vmem>>, vector<1x1x1x128xf32>
    %753 = vector.shape_cast %752 : vector<1x1x1x128xf32> to vector<1x128xf32>
    %754 = vector.extract_strided_slice %702 {offsets = [7, 0, 0], sizes = [3, 9, 128], strides = [1, 1, 1]} : vector<10x9x128xf32> to vector<3x9x128xf32>
    %755 = vector.shape_cast %753 : vector<1x128xf32> to vector<1x1x128xf32>
    %756 = vector.broadcast %755 : vector<1x1x128xf32> to vector<3x9x128xf32>
    %757 = arith.mulf %754, %756 : vector<3x9x128xf32>
    %758 = arith.addf %751, %757 : vector<3x9x128xf32>
    %c0_465 = arith.constant 0 : index
    %c6_466 = arith.constant 6 : index
    %c5_467 = arith.constant 5 : index
    %c0_468 = arith.constant 0 : index
    %759 = vector.load %arg3[%c0_465, %c6_466, %c5_467, %c0_468] : memref<1x16x16x128xf32, #tpu.memory_space<vmem>>, vector<1x10x9x128xf32>
    %760 = vector.shape_cast %759 : vector<1x10x9x128xf32> to vector<10x9x128xf32>
    %c0_469 = arith.constant 0 : index
    %c0_470 = arith.constant 0 : index
    %c5_471 = arith.constant 5 : index
    %c0_472 = arith.constant 0 : index
    %761 = vector.load %arg2[%c0_469, %c0_470, %c5_471, %c0_472] : memref<1x8x8x128xf32, #tpu.memory_space<vmem>>, vector<1x1x1x128xf32>
    %762 = vector.shape_cast %761 : vector<1x1x1x128xf32> to vector<1x128xf32>
    %763 = vector.extract_strided_slice %760 {offsets = [0, 0, 0], sizes = [3, 9, 128], strides = [1, 1, 1]} : vector<10x9x128xf32> to vector<3x9x128xf32>
    %764 = vector.shape_cast %762 : vector<1x128xf32> to vector<1x1x128xf32>
    %765 = vector.broadcast %764 : vector<1x1x128xf32> to vector<3x9x128xf32>
    %766 = arith.mulf %763, %765 : vector<3x9x128xf32>
    %767 = arith.addf %758, %766 : vector<3x9x128xf32>
    %c0_473 = arith.constant 0 : index
    %c1_474 = arith.constant 1 : index
    %c5_475 = arith.constant 5 : index
    %c0_476 = arith.constant 0 : index
    %768 = vector.load %arg2[%c0_473, %c1_474, %c5_475, %c0_476] : memref<1x8x8x128xf32, #tpu.memory_space<vmem>>, vector<1x1x1x128xf32>
    %769 = vector.shape_cast %768 : vector<1x1x1x128xf32> to vector<1x128xf32>
    %770 = vector.extract_strided_slice %760 {offsets = [1, 0, 0], sizes = [3, 9, 128], strides = [1, 1, 1]} : vector<10x9x128xf32> to vector<3x9x128xf32>
    %771 = vector.shape_cast %769 : vector<1x128xf32> to vector<1x1x128xf32>
    %772 = vector.broadcast %771 : vector<1x1x128xf32> to vector<3x9x128xf32>
    %773 = arith.mulf %770, %772 : vector<3x9x128xf32>
    %774 = arith.addf %767, %773 : vector<3x9x128xf32>
    %c0_477 = arith.constant 0 : index
    %c2_478 = arith.constant 2 : index
    %c5_479 = arith.constant 5 : index
    %c0_480 = arith.constant 0 : index
    %775 = vector.load %arg2[%c0_477, %c2_478, %c5_479, %c0_480] : memref<1x8x8x128xf32, #tpu.memory_space<vmem>>, vector<1x1x1x128xf32>
    %776 = vector.shape_cast %775 : vector<1x1x1x128xf32> to vector<1x128xf32>
    %777 = vector.extract_strided_slice %760 {offsets = [2, 0, 0], sizes = [3, 9, 128], strides = [1, 1, 1]} : vector<10x9x128xf32> to vector<3x9x128xf32>
    %778 = vector.shape_cast %776 : vector<1x128xf32> to vector<1x1x128xf32>
    %779 = vector.broadcast %778 : vector<1x1x128xf32> to vector<3x9x128xf32>
    %780 = arith.mulf %777, %779 : vector<3x9x128xf32>
    %781 = arith.addf %774, %780 : vector<3x9x128xf32>
    %c0_481 = arith.constant 0 : index
    %c3_482 = arith.constant 3 : index
    %c5_483 = arith.constant 5 : index
    %c0_484 = arith.constant 0 : index
    %782 = vector.load %arg2[%c0_481, %c3_482, %c5_483, %c0_484] : memref<1x8x8x128xf32, #tpu.memory_space<vmem>>, vector<1x1x1x128xf32>
    %783 = vector.shape_cast %782 : vector<1x1x1x128xf32> to vector<1x128xf32>
    %784 = vector.extract_strided_slice %760 {offsets = [3, 0, 0], sizes = [3, 9, 128], strides = [1, 1, 1]} : vector<10x9x128xf32> to vector<3x9x128xf32>
    %785 = vector.shape_cast %783 : vector<1x128xf32> to vector<1x1x128xf32>
    %786 = vector.broadcast %785 : vector<1x1x128xf32> to vector<3x9x128xf32>
    %787 = arith.mulf %784, %786 : vector<3x9x128xf32>
    %788 = arith.addf %781, %787 : vector<3x9x128xf32>
    %c0_485 = arith.constant 0 : index
    %c4_486 = arith.constant 4 : index
    %c5_487 = arith.constant 5 : index
    %c0_488 = arith.constant 0 : index
    %789 = vector.load %arg2[%c0_485, %c4_486, %c5_487, %c0_488] : memref<1x8x8x128xf32, #tpu.memory_space<vmem>>, vector<1x1x1x128xf32>
    %790 = vector.shape_cast %789 : vector<1x1x1x128xf32> to vector<1x128xf32>
    %791 = vector.extract_strided_slice %760 {offsets = [4, 0, 0], sizes = [3, 9, 128], strides = [1, 1, 1]} : vector<10x9x128xf32> to vector<3x9x128xf32>
    %792 = vector.shape_cast %790 : vector<1x128xf32> to vector<1x1x128xf32>
    %793 = vector.broadcast %792 : vector<1x1x128xf32> to vector<3x9x128xf32>
    %794 = arith.mulf %791, %793 : vector<3x9x128xf32>
    %795 = arith.addf %788, %794 : vector<3x9x128xf32>
    %c0_489 = arith.constant 0 : index
    %c5_490 = arith.constant 5 : index
    %c5_491 = arith.constant 5 : index
    %c0_492 = arith.constant 0 : index
    %796 = vector.load %arg2[%c0_489, %c5_490, %c5_491, %c0_492] : memref<1x8x8x128xf32, #tpu.memory_space<vmem>>, vector<1x1x1x128xf32>
    %797 = vector.shape_cast %796 : vector<1x1x1x128xf32> to vector<1x128xf32>
    %798 = vector.extract_strided_slice %760 {offsets = [5, 0, 0], sizes = [3, 9, 128], strides = [1, 1, 1]} : vector<10x9x128xf32> to vector<3x9x128xf32>
    %799 = vector.shape_cast %797 : vector<1x128xf32> to vector<1x1x128xf32>
    %800 = vector.broadcast %799 : vector<1x1x128xf32> to vector<3x9x128xf32>
    %801 = arith.mulf %798, %800 : vector<3x9x128xf32>
    %802 = arith.addf %795, %801 : vector<3x9x128xf32>
    %c0_493 = arith.constant 0 : index
    %c6_494 = arith.constant 6 : index
    %c5_495 = arith.constant 5 : index
    %c0_496 = arith.constant 0 : index
    %803 = vector.load %arg2[%c0_493, %c6_494, %c5_495, %c0_496] : memref<1x8x8x128xf32, #tpu.memory_space<vmem>>, vector<1x1x1x128xf32>
    %804 = vector.shape_cast %803 : vector<1x1x1x128xf32> to vector<1x128xf32>
    %805 = vector.extract_strided_slice %760 {offsets = [6, 0, 0], sizes = [3, 9, 128], strides = [1, 1, 1]} : vector<10x9x128xf32> to vector<3x9x128xf32>
    %806 = vector.shape_cast %804 : vector<1x128xf32> to vector<1x1x128xf32>
    %807 = vector.broadcast %806 : vector<1x1x128xf32> to vector<3x9x128xf32>
    %808 = arith.mulf %805, %807 : vector<3x9x128xf32>
    %809 = arith.addf %802, %808 : vector<3x9x128xf32>
    %c0_497 = arith.constant 0 : index
    %c7_498 = arith.constant 7 : index
    %c5_499 = arith.constant 5 : index
    %c0_500 = arith.constant 0 : index
    %810 = vector.load %arg2[%c0_497, %c7_498, %c5_499, %c0_500] : memref<1x8x8x128xf32, #tpu.memory_space<vmem>>, vector<1x1x1x128xf32>
    %811 = vector.shape_cast %810 : vector<1x1x1x128xf32> to vector<1x128xf32>
    %812 = vector.extract_strided_slice %760 {offsets = [7, 0, 0], sizes = [3, 9, 128], strides = [1, 1, 1]} : vector<10x9x128xf32> to vector<3x9x128xf32>
    %813 = vector.shape_cast %811 : vector<1x128xf32> to vector<1x1x128xf32>
    %814 = vector.broadcast %813 : vector<1x1x128xf32> to vector<3x9x128xf32>
    %815 = arith.mulf %812, %814 : vector<3x9x128xf32>
    %816 = arith.addf %809, %815 : vector<3x9x128xf32>
    %c0_501 = arith.constant 0 : index
    %c6_502 = arith.constant 6 : index
    %c6_503 = arith.constant 6 : index
    %c0_504 = arith.constant 0 : index
    %817 = vector.load %arg3[%c0_501, %c6_502, %c6_503, %c0_504] : memref<1x16x16x128xf32, #tpu.memory_space<vmem>>, vector<1x10x9x128xf32>
    %818 = vector.shape_cast %817 : vector<1x10x9x128xf32> to vector<10x9x128xf32>
    %c0_505 = arith.constant 0 : index
    %c0_506 = arith.constant 0 : index
    %c6_507 = arith.constant 6 : index
    %c0_508 = arith.constant 0 : index
    %819 = vector.load %arg2[%c0_505, %c0_506, %c6_507, %c0_508] : memref<1x8x8x128xf32, #tpu.memory_space<vmem>>, vector<1x1x1x128xf32>
    %820 = vector.shape_cast %819 : vector<1x1x1x128xf32> to vector<1x128xf32>
    %821 = vector.extract_strided_slice %818 {offsets = [0, 0, 0], sizes = [3, 9, 128], strides = [1, 1, 1]} : vector<10x9x128xf32> to vector<3x9x128xf32>
    %822 = vector.shape_cast %820 : vector<1x128xf32> to vector<1x1x128xf32>
    %823 = vector.broadcast %822 : vector<1x1x128xf32> to vector<3x9x128xf32>
    %824 = arith.mulf %821, %823 : vector<3x9x128xf32>
    %825 = arith.addf %816, %824 : vector<3x9x128xf32>
    %c0_509 = arith.constant 0 : index
    %c1_510 = arith.constant 1 : index
    %c6_511 = arith.constant 6 : index
    %c0_512 = arith.constant 0 : index
    %826 = vector.load %arg2[%c0_509, %c1_510, %c6_511, %c0_512] : memref<1x8x8x128xf32, #tpu.memory_space<vmem>>, vector<1x1x1x128xf32>
    %827 = vector.shape_cast %826 : vector<1x1x1x128xf32> to vector<1x128xf32>
    %828 = vector.extract_strided_slice %818 {offsets = [1, 0, 0], sizes = [3, 9, 128], strides = [1, 1, 1]} : vector<10x9x128xf32> to vector<3x9x128xf32>
    %829 = vector.shape_cast %827 : vector<1x128xf32> to vector<1x1x128xf32>
    %830 = vector.broadcast %829 : vector<1x1x128xf32> to vector<3x9x128xf32>
    %831 = arith.mulf %828, %830 : vector<3x9x128xf32>
    %832 = arith.addf %825, %831 : vector<3x9x128xf32>
    %c0_513 = arith.constant 0 : index
    %c2_514 = arith.constant 2 : index
    %c6_515 = arith.constant 6 : index
    %c0_516 = arith.constant 0 : index
    %833 = vector.load %arg2[%c0_513, %c2_514, %c6_515, %c0_516] : memref<1x8x8x128xf32, #tpu.memory_space<vmem>>, vector<1x1x1x128xf32>
    %834 = vector.shape_cast %833 : vector<1x1x1x128xf32> to vector<1x128xf32>
    %835 = vector.extract_strided_slice %818 {offsets = [2, 0, 0], sizes = [3, 9, 128], strides = [1, 1, 1]} : vector<10x9x128xf32> to vector<3x9x128xf32>
    %836 = vector.shape_cast %834 : vector<1x128xf32> to vector<1x1x128xf32>
    %837 = vector.broadcast %836 : vector<1x1x128xf32> to vector<3x9x128xf32>
    %838 = arith.mulf %835, %837 : vector<3x9x128xf32>
    %839 = arith.addf %832, %838 : vector<3x9x128xf32>
    %c0_517 = arith.constant 0 : index
    %c3_518 = arith.constant 3 : index
    %c6_519 = arith.constant 6 : index
    %c0_520 = arith.constant 0 : index
    %840 = vector.load %arg2[%c0_517, %c3_518, %c6_519, %c0_520] : memref<1x8x8x128xf32, #tpu.memory_space<vmem>>, vector<1x1x1x128xf32>
    %841 = vector.shape_cast %840 : vector<1x1x1x128xf32> to vector<1x128xf32>
    %842 = vector.extract_strided_slice %818 {offsets = [3, 0, 0], sizes = [3, 9, 128], strides = [1, 1, 1]} : vector<10x9x128xf32> to vector<3x9x128xf32>
    %843 = vector.shape_cast %841 : vector<1x128xf32> to vector<1x1x128xf32>
    %844 = vector.broadcast %843 : vector<1x1x128xf32> to vector<3x9x128xf32>
    %845 = arith.mulf %842, %844 : vector<3x9x128xf32>
    %846 = arith.addf %839, %845 : vector<3x9x128xf32>
    %c0_521 = arith.constant 0 : index
    %c4_522 = arith.constant 4 : index
    %c6_523 = arith.constant 6 : index
    %c0_524 = arith.constant 0 : index
    %847 = vector.load %arg2[%c0_521, %c4_522, %c6_523, %c0_524] : memref<1x8x8x128xf32, #tpu.memory_space<vmem>>, vector<1x1x1x128xf32>
    %848 = vector.shape_cast %847 : vector<1x1x1x128xf32> to vector<1x128xf32>
    %849 = vector.extract_strided_slice %818 {offsets = [4, 0, 0], sizes = [3, 9, 128], strides = [1, 1, 1]} : vector<10x9x128xf32> to vector<3x9x128xf32>
    %850 = vector.shape_cast %848 : vector<1x128xf32> to vector<1x1x128xf32>
    %851 = vector.broadcast %850 : vector<1x1x128xf32> to vector<3x9x128xf32>
    %852 = arith.mulf %849, %851 : vector<3x9x128xf32>
    %853 = arith.addf %846, %852 : vector<3x9x128xf32>
    %c0_525 = arith.constant 0 : index
    %c5_526 = arith.constant 5 : index
    %c6_527 = arith.constant 6 : index
    %c0_528 = arith.constant 0 : index
    %854 = vector.load %arg2[%c0_525, %c5_526, %c6_527, %c0_528] : memref<1x8x8x128xf32, #tpu.memory_space<vmem>>, vector<1x1x1x128xf32>
    %855 = vector.shape_cast %854 : vector<1x1x1x128xf32> to vector<1x128xf32>
    %856 = vector.extract_strided_slice %818 {offsets = [5, 0, 0], sizes = [3, 9, 128], strides = [1, 1, 1]} : vector<10x9x128xf32> to vector<3x9x128xf32>
    %857 = vector.shape_cast %855 : vector<1x128xf32> to vector<1x1x128xf32>
    %858 = vector.broadcast %857 : vector<1x1x128xf32> to vector<3x9x128xf32>
    %859 = arith.mulf %856, %858 : vector<3x9x128xf32>
    %860 = arith.addf %853, %859 : vector<3x9x128xf32>
    %c0_529 = arith.constant 0 : index
    %c6_530 = arith.constant 6 : index
    %c6_531 = arith.constant 6 : index
    %c0_532 = arith.constant 0 : index
    %861 = vector.load %arg2[%c0_529, %c6_530, %c6_531, %c0_532] : memref<1x8x8x128xf32, #tpu.memory_space<vmem>>, vector<1x1x1x128xf32>
    %862 = vector.shape_cast %861 : vector<1x1x1x128xf32> to vector<1x128xf32>
    %863 = vector.extract_strided_slice %818 {offsets = [6, 0, 0], sizes = [3, 9, 128], strides = [1, 1, 1]} : vector<10x9x128xf32> to vector<3x9x128xf32>
    %864 = vector.shape_cast %862 : vector<1x128xf32> to vector<1x1x128xf32>
    %865 = vector.broadcast %864 : vector<1x1x128xf32> to vector<3x9x128xf32>
    %866 = arith.mulf %863, %865 : vector<3x9x128xf32>
    %867 = arith.addf %860, %866 : vector<3x9x128xf32>
    %c0_533 = arith.constant 0 : index
    %c7_534 = arith.constant 7 : index
    %c6_535 = arith.constant 6 : index
    %c0_536 = arith.constant 0 : index
    %868 = vector.load %arg2[%c0_533, %c7_534, %c6_535, %c0_536] : memref<1x8x8x128xf32, #tpu.memory_space<vmem>>, vector<1x1x1x128xf32>
    %869 = vector.shape_cast %868 : vector<1x1x1x128xf32> to vector<1x128xf32>
    %870 = vector.extract_strided_slice %818 {offsets = [7, 0, 0], sizes = [3, 9, 128], strides = [1, 1, 1]} : vector<10x9x128xf32> to vector<3x9x128xf32>
    %871 = vector.shape_cast %869 : vector<1x128xf32> to vector<1x1x128xf32>
    %872 = vector.broadcast %871 : vector<1x1x128xf32> to vector<3x9x128xf32>
    %873 = arith.mulf %870, %872 : vector<3x9x128xf32>
    %874 = arith.addf %867, %873 : vector<3x9x128xf32>
    %c0_537 = arith.constant 0 : index
    %c6_538 = arith.constant 6 : index
    %c7_539 = arith.constant 7 : index
    %c0_540 = arith.constant 0 : index
    %875 = vector.load %arg3[%c0_537, %c6_538, %c7_539, %c0_540] : memref<1x16x16x128xf32, #tpu.memory_space<vmem>>, vector<1x10x9x128xf32>
    %876 = vector.shape_cast %875 : vector<1x10x9x128xf32> to vector<10x9x128xf32>
    %c0_541 = arith.constant 0 : index
    %c0_542 = arith.constant 0 : index
    %c7_543 = arith.constant 7 : index
    %c0_544 = arith.constant 0 : index
    %877 = vector.load %arg2[%c0_541, %c0_542, %c7_543, %c0_544] : memref<1x8x8x128xf32, #tpu.memory_space<vmem>>, vector<1x1x1x128xf32>
    %878 = vector.shape_cast %877 : vector<1x1x1x128xf32> to vector<1x128xf32>
    %879 = vector.extract_strided_slice %876 {offsets = [0, 0, 0], sizes = [3, 9, 128], strides = [1, 1, 1]} : vector<10x9x128xf32> to vector<3x9x128xf32>
    %880 = vector.shape_cast %878 : vector<1x128xf32> to vector<1x1x128xf32>
    %881 = vector.broadcast %880 : vector<1x1x128xf32> to vector<3x9x128xf32>
    %882 = arith.mulf %879, %881 : vector<3x9x128xf32>
    %883 = arith.addf %874, %882 : vector<3x9x128xf32>
    %c0_545 = arith.constant 0 : index
    %c1_546 = arith.constant 1 : index
    %c7_547 = arith.constant 7 : index
    %c0_548 = arith.constant 0 : index
    %884 = vector.load %arg2[%c0_545, %c1_546, %c7_547, %c0_548] : memref<1x8x8x128xf32, #tpu.memory_space<vmem>>, vector<1x1x1x128xf32>
    %885 = vector.shape_cast %884 : vector<1x1x1x128xf32> to vector<1x128xf32>
    %886 = vector.extract_strided_slice %876 {offsets = [1, 0, 0], sizes = [3, 9, 128], strides = [1, 1, 1]} : vector<10x9x128xf32> to vector<3x9x128xf32>
    %887 = vector.shape_cast %885 : vector<1x128xf32> to vector<1x1x128xf32>
    %888 = vector.broadcast %887 : vector<1x1x128xf32> to vector<3x9x128xf32>
    %889 = arith.mulf %886, %888 : vector<3x9x128xf32>
    %890 = arith.addf %883, %889 : vector<3x9x128xf32>
    %c0_549 = arith.constant 0 : index
    %c2_550 = arith.constant 2 : index
    %c7_551 = arith.constant 7 : index
    %c0_552 = arith.constant 0 : index
    %891 = vector.load %arg2[%c0_549, %c2_550, %c7_551, %c0_552] : memref<1x8x8x128xf32, #tpu.memory_space<vmem>>, vector<1x1x1x128xf32>
    %892 = vector.shape_cast %891 : vector<1x1x1x128xf32> to vector<1x128xf32>
    %893 = vector.extract_strided_slice %876 {offsets = [2, 0, 0], sizes = [3, 9, 128], strides = [1, 1, 1]} : vector<10x9x128xf32> to vector<3x9x128xf32>
    %894 = vector.shape_cast %892 : vector<1x128xf32> to vector<1x1x128xf32>
    %895 = vector.broadcast %894 : vector<1x1x128xf32> to vector<3x9x128xf32>
    %896 = arith.mulf %893, %895 : vector<3x9x128xf32>
    %897 = arith.addf %890, %896 : vector<3x9x128xf32>
    %c0_553 = arith.constant 0 : index
    %c3_554 = arith.constant 3 : index
    %c7_555 = arith.constant 7 : index
    %c0_556 = arith.constant 0 : index
    %898 = vector.load %arg2[%c0_553, %c3_554, %c7_555, %c0_556] : memref<1x8x8x128xf32, #tpu.memory_space<vmem>>, vector<1x1x1x128xf32>
    %899 = vector.shape_cast %898 : vector<1x1x1x128xf32> to vector<1x128xf32>
    %900 = vector.extract_strided_slice %876 {offsets = [3, 0, 0], sizes = [3, 9, 128], strides = [1, 1, 1]} : vector<10x9x128xf32> to vector<3x9x128xf32>
    %901 = vector.shape_cast %899 : vector<1x128xf32> to vector<1x1x128xf32>
    %902 = vector.broadcast %901 : vector<1x1x128xf32> to vector<3x9x128xf32>
    %903 = arith.mulf %900, %902 : vector<3x9x128xf32>
    %904 = arith.addf %897, %903 : vector<3x9x128xf32>
    %c0_557 = arith.constant 0 : index
    %c4_558 = arith.constant 4 : index
    %c7_559 = arith.constant 7 : index
    %c0_560 = arith.constant 0 : index
    %905 = vector.load %arg2[%c0_557, %c4_558, %c7_559, %c0_560] : memref<1x8x8x128xf32, #tpu.memory_space<vmem>>, vector<1x1x1x128xf32>
    %906 = vector.shape_cast %905 : vector<1x1x1x128xf32> to vector<1x128xf32>
    %907 = vector.extract_strided_slice %876 {offsets = [4, 0, 0], sizes = [3, 9, 128], strides = [1, 1, 1]} : vector<10x9x128xf32> to vector<3x9x128xf32>
    %908 = vector.shape_cast %906 : vector<1x128xf32> to vector<1x1x128xf32>
    %909 = vector.broadcast %908 : vector<1x1x128xf32> to vector<3x9x128xf32>
    %910 = arith.mulf %907, %909 : vector<3x9x128xf32>
    %911 = arith.addf %904, %910 : vector<3x9x128xf32>
    %c0_561 = arith.constant 0 : index
    %c5_562 = arith.constant 5 : index
    %c7_563 = arith.constant 7 : index
    %c0_564 = arith.constant 0 : index
    %912 = vector.load %arg2[%c0_561, %c5_562, %c7_563, %c0_564] : memref<1x8x8x128xf32, #tpu.memory_space<vmem>>, vector<1x1x1x128xf32>
    %913 = vector.shape_cast %912 : vector<1x1x1x128xf32> to vector<1x128xf32>
    %914 = vector.extract_strided_slice %876 {offsets = [5, 0, 0], sizes = [3, 9, 128], strides = [1, 1, 1]} : vector<10x9x128xf32> to vector<3x9x128xf32>
    %915 = vector.shape_cast %913 : vector<1x128xf32> to vector<1x1x128xf32>
    %916 = vector.broadcast %915 : vector<1x1x128xf32> to vector<3x9x128xf32>
    %917 = arith.mulf %914, %916 : vector<3x9x128xf32>
    %918 = arith.addf %911, %917 : vector<3x9x128xf32>
    %c0_565 = arith.constant 0 : index
    %c6_566 = arith.constant 6 : index
    %c7_567 = arith.constant 7 : index
    %c0_568 = arith.constant 0 : index
    %919 = vector.load %arg2[%c0_565, %c6_566, %c7_567, %c0_568] : memref<1x8x8x128xf32, #tpu.memory_space<vmem>>, vector<1x1x1x128xf32>
    %920 = vector.shape_cast %919 : vector<1x1x1x128xf32> to vector<1x128xf32>
    %921 = vector.extract_strided_slice %876 {offsets = [6, 0, 0], sizes = [3, 9, 128], strides = [1, 1, 1]} : vector<10x9x128xf32> to vector<3x9x128xf32>
    %922 = vector.shape_cast %920 : vector<1x128xf32> to vector<1x1x128xf32>
    %923 = vector.broadcast %922 : vector<1x1x128xf32> to vector<3x9x128xf32>
    %924 = arith.mulf %921, %923 : vector<3x9x128xf32>
    %925 = arith.addf %918, %924 : vector<3x9x128xf32>
    %c0_569 = arith.constant 0 : index
    %c7_570 = arith.constant 7 : index
    %c7_571 = arith.constant 7 : index
    %c0_572 = arith.constant 0 : index
    %926 = vector.load %arg2[%c0_569, %c7_570, %c7_571, %c0_572] : memref<1x8x8x128xf32, #tpu.memory_space<vmem>>, vector<1x1x1x128xf32>
    %927 = vector.shape_cast %926 : vector<1x1x1x128xf32> to vector<1x128xf32>
    %928 = vector.extract_strided_slice %876 {offsets = [7, 0, 0], sizes = [3, 9, 128], strides = [1, 1, 1]} : vector<10x9x128xf32> to vector<3x9x128xf32>
    %929 = vector.shape_cast %927 : vector<1x128xf32> to vector<1x1x128xf32>
    %930 = vector.broadcast %929 : vector<1x1x128xf32> to vector<3x9x128xf32>
    %931 = arith.mulf %928, %930 : vector<3x9x128xf32>
    %932 = arith.addf %925, %931 : vector<3x9x128xf32>
    %c0_573 = arith.constant 0 : index
    %c6_574 = arith.constant 6 : index
    %c0_575 = arith.constant 0 : index
    %c0_576 = arith.constant 0 : index
    %933 = vector.load %arg4[%c0_573, %c6_574, %c0_575, %c0_576] : memref<1x9x9x128xf32, #tpu.memory_space<vmem>>, vector<1x3x9x128xf32>
    %934 = vector.shape_cast %933 : vector<1x3x9x128xf32> to vector<3x9x128xf32>
    %935 = vector.shape_cast %932 : vector<3x9x128xf32> to vector<1x3x9x128xf32>
    tpu.vector_store %arg4[%c0_573, %c6_574, %c0_575, %c0_576], %935 {strides = array<i32>} : memref<1x9x9x128xf32, #tpu.memory_space<vmem>>, vector<1x3x9x128xf32>,
    return
  }
  func.func @transform_0(%arg0: i32, %arg1: i32) -> (i32, i32, i32, i32) {
    %c0_i32 = arith.constant 0 : i32
    %c0_i32_0 = arith.constant 0 : i32
    %c0_i32_1 = arith.constant 0 : i32
    return %arg0, %c0_i32, %c0_i32_0, %arg1 : i32, i32, i32, i32
  }
  func.func @transform_1(%arg0: i32, %arg1: i32) -> (i32, i32, i32, i32) {
    %c0_i32 = arith.constant 0 : i32
    %c0_i32_0 = arith.constant 0 : i32
    %c0_i32_1 = arith.constant 0 : i32
    return %arg0, %c0_i32, %c0_i32_0, %arg1 : i32, i32, i32, i32
  }
  func.func @transform_2(%arg0: i32, %arg1: i32) -> (i32, i32, i32, i32) {
    %c0_i32 = arith.constant 0 : i32
    %c0_i32_0 = arith.constant 0 : i32
    %c0_i32_1 = arith.constant 0 : i32
    return %arg0, %c0_i32, %c0_i32_0, %arg1 : i32, i32, i32, i32
  }
}

</mosaic_0001>

<llo_original>
// kernel: _irca_xcorr_impl.1
$region0: #{_irca_xcorr_impl.1}
  #allocation0 [shape = 'u32[]', space=smem, size = 0x4, offset = 0x4, fixed_abs, tag = 'smem constant byte address 0x4 - core index']
  #allocation1 [shape = 'u32[72,128]{1,0:T(1,128)}', space=vmem, size = 0x9000, scoped, tag = 'internal scratch']
  %s0 = inlined_call_operand.vmem [shape: f32[2,8,8,128], index: 0, kind: input, shape index: {}]
  %s1 = inlined_call_operand.vmem [shape: f32[2,16,16,128], index: 1, kind: input, shape index: {}]
  %s2 = inlined_call_operand.vmem [shape: f32[2,9,9,128], index: 2, kind: output, shape index: {}]
  %s3 = sld [smem:[#allocation0]]
  $region41: #{_irca_xcorr_impl.1} parent=0
    _
  %s5 = ssub.s32 1, %s3
  %s6 = scalar_select 0, %s5, %s3
  loop: start=0, step=1, limit=4
  $region2: #{_irca_xcorr_impl.1} parent=0 // loop_pre_header
    _
  $region3: #{_irca_xcorr_impl.1} parent=0 // loop_header
    %s8 = sphi 0, %s12
    %p9 = scmp.ge.s32.totalorder %s8, 4
    %s15 = sphi 0, %s27
    %s16 = sphi 0, %s23
    %s17 = sphi 0, %s15
    %s18 = sphi 0, %s16
    %s19 = sphi 0, %s17
    %s20 = sphi 0, %s18
    %s32 = sphi 0, %s34
    %s35 = sphi 0, %s32
    %s36 = sphi 0, %s35
    %s52 = sphi 0, %s36
    %s60 = sphi 0, %s62
    %s63 = sphi 0, %s60
    %s64 = sphi 0, %s63
    %s80 = sphi 0, %s64
    %s88 = sphi 0, %s90
    %s91 = sphi 0, %s88
    %s92 = sphi 0, %s91
    %s108 = sphi 0, %s92
  $region4: #{_irca_xcorr_impl.1} parent=0 // loop_header_branch
    %11 = sbr.rel (%p9) target = $region8
  $region5: #{_irca_xcorr_impl.1} parent=0 // loop_body
    %s13 = ssub.s32 %s8, 1
    %s14 = ssub.s32 %s8, 2
    %s21 = sadd.s32 1, %s16
    %p22 = scmp.ge.s32.totalorder %s21, 1
    %s23 = scalar_select %p22, 0, %s21
    %s24 = sadd.s32 1, %s15
    %s25 = scalar_select %p22, %s24, %s15
    %p26 = scmp.ge.s32.totalorder %s25, 2
    %s27 = scalar_select %p26, 0, %s25
    %s28 = ssub.s32 %s15, %s27
    %s29 = ssub.s32 %s16, %s23
    %s30 = sor.u32 %s28, %s29
    %p31 = scmp.eq.s32.totalorder %s30, 0
    %s33 = sadd.s32 %s32, 1
    %s34 = scalar_select %p31, %s32, %s33
    %p37 = pneg %p31
    %p38 = scmp.eq.s32.totalorder %s8, 1
    %p39 = por %p37, %p38
    %p40 = scmp.ne.s32.totalorder %s32, %s35
    %p41 = scmp.eq.s32.totalorder %s8, 0
    %p42 = por %p40, %p41
    %p43 = scmp.ne.s32.totalorder %s32, %s35
    %p44 = scmp.eq.s32.totalorder %s13, 1
    %p45 = por %p43, %p44
    %p46 = scmp.ne.s32.totalorder %s35, %s36
    %p47 = scmp.eq.s32.totalorder %s13, 0
    %p48 = por %p46, %p47
    %p49 = scmp.ne.s32.totalorder %s35, %s36
    %p50 = scmp.eq.s32.totalorder %s14, 1
    %p51 = por %p49, %p50
    %p53 = scmp.ne.s32.totalorder %s36, %s52
    %p54 = scmp.eq.s32.totalorder %s14, 0
    %p55 = por %p53, %p54
    %s56 = ssub.s32 %s15, %s27
    %s57 = ssub.s32 %s16, %s23
    %s58 = sor.u32 %s56, %s57
    %p59 = scmp.eq.s32.totalorder %s58, 0
    %s61 = sadd.s32 %s60, 1
    %s62 = scalar_select %p59, %s60, %s61
    %p65 = pneg %p59
    %p66 = scmp.eq.s32.totalorder %s8, 1
    %p67 = por %p65, %p66
    %p68 = scmp.ne.s32.totalorder %s60, %s63
    %p69 = scmp.eq.s32.totalorder %s8, 0
    %p70 = por %p68, %p69
    %p71 = scmp.ne.s32.totalorder %s60, %s63
    %p72 = scmp.eq.s32.totalorder %s13, 1
    %p73 = por %p71, %p72
    %p74 = scmp.ne.s32.totalorder %s63, %s64
    %p75 = scmp.eq.s32.totalorder %s13, 0
    %p76 = por %p74, %p75
    %p77 = scmp.ne.s32.totalorder %s63, %s64
    %p78 = scmp.eq.s32.totalorder %s14, 1
    %p79 = por %p77, %p78
    %p81 = scmp.ne.s32.totalorder %s64, %s80
    %p82 = scmp.eq.s32.totalorder %s14, 0
    %p83 = por %p81, %p82
    %s84 = ssub.s32 %s15, %s27
    %s85 = ssub.s32 %s16, %s23
    %s86 = sor.u32 %s84, %s85
    %p87 = scmp.eq.s32.totalorder %s86, 0
    %s89 = sadd.s32 %s88, 1
    %s90 = scalar_select %p87, %s88, %s89
    %p93 = pneg %p87
    %p94 = scmp.eq.s32.totalorder %s8, 1
    %p95 = por %p93, %p94
    %p96 = scmp.ne.s32.totalorder %s88, %s91
    %p97 = scmp.eq.s32.totalorder %s8, 0
    %p98 = por %p96, %p97
    %p99 = scmp.ne.s32.totalorder %s88, %s91
    %p100 = scmp.eq.s32.totalorder %s13, 1
    %p101 = por %p99, %p100
    %p102 = scmp.ne.s32.totalorder %s91, %s92
    %p103 = scmp.eq.s32.totalorder %s13, 0
    %p104 = por %p102, %p103
    %p105 = scmp.ne.s32.totalorder %s91, %s92
    %p106 = scmp.eq.s32.totalorder %s14, 1
    %p107 = por %p105, %p106
    %p109 = scmp.ne.s32.totalorder %s92, %s108
    %p110 = scmp.eq.s32.totalorder %s14, 0
    %p111 = por %p109, %p110
    %p112 = scmp.le.s32.totalorder 1, %s8
    %p113 = scmp.lt.s32.totalorder %s8, 3
    %p114 = pnand %p112, %p113
    %p115 = pneg %p114
    // Predicated region
    $region9: #{_irca_xcorr_impl.1} parent=5 // pred_check
      _
    $region10: #{_irca_xcorr_impl.1} parent=5 // pred_check_branch
      %117 = sbr.rel (%p114) target = $region12
    $region11: #{_irca_xcorr_impl.1} parent=5 // pred_region
      %s118 = ssub.s32 %s8, 1
    $region12: #{_irca_xcorr_impl.1} parent=5 // pred_fallthru
      _
    %p119 = scmp.lt.s32.totalorder %s8, 2
    // Predicated region
    $region13: #{_irca_xcorr_impl.1} parent=5 // pred_check
      %p120 = pneg %p119
    $region14: #{_irca_xcorr_impl.1} parent=5 // pred_check_branch
      %122 = sbr.rel (%p120) target = $region16
    $region15: #{_irca_xcorr_impl.1} parent=5 // pred_region
      // Predicated region
      $region17: #{_irca_xcorr_impl.1} parent=15 // pred_check
        %p123 = pneg %p42
      $region18: #{_irca_xcorr_impl.1} parent=15 // pred_check_branch
        %125 = sbr.rel (%p123) target = $region20
      $region19: #{_irca_xcorr_impl.1} parent=15 // pred_region
        %p126 = scmp.lt.s32.totalorder %s15, 1
        %s127 = scalar_select %p126, %s15, 1
        %p128 = scmp.lt.s32.totalorder %s16, 0
        %s129 = scalar_select %p128, %s16, 0
        %s130 = smul.addr %s127, 8
        %s131 = sadd.s32 %s129, %s130
        %s132 = smul.addr %s131, 8
        %s133 = scalar_lea.vmem %s0, %s132
      $region20: #{_irca_xcorr_impl.1} parent=15 // pred_fallthru
        _
      // Predicated region
      $region21: #{_irca_xcorr_impl.1} parent=15 // pred_check
        %p134 = pneg %p70
      $region22: #{_irca_xcorr_impl.1} parent=15 // pred_check_branch
        %136 = sbr.rel (%p134) target = $region24
      $region23: #{_irca_xcorr_impl.1} parent=15 // pred_region
        %p137 = scmp.lt.s32.totalorder %s15, 1
        %s138 = scalar_select %p137, %s15, 1
        %p139 = scmp.lt.s32.totalorder %s16, 0
        %s140 = scalar_select %p139, %s16, 0
        %s141 = smul.addr %s138, 32
        %s142 = sadd.s32 %s140, %s141
        %s143 = smul.addr %s142, 8
        %s144 = scalar_lea.vmem %s1, %s143
      $region24: #{_irca_xcorr_impl.1} parent=15 // pred_fallthru
        _
    $region16: #{_irca_xcorr_impl.1} parent=5 // pred_fallthru
      _
    %p145 = scmp.le.s32.totalorder 1, %s8
    %p146 = scmp.lt.s32.totalorder %s8, 3
    %p147 = pnand %p145, %p146
    %p148 = pneg %p147
    // Predicated region
    $region25: #{_irca_xcorr_impl.1} parent=5 // pred_check
      _
    $region26: #{_irca_xcorr_impl.1} parent=5 // pred_check_branch
      %150 = sbr.rel (%p147) target = $region28
    $region27: #{_irca_xcorr_impl.1} parent=5 // pred_region
      %s151 = ssub.s32 %s8, 1
      %p152 = scmp.lt.s32.totalorder %s17, 1
      %s153 = scalar_select %p152, %s17, 1
      %p154 = scmp.lt.s32.totalorder %s18, 0
      %s155 = scalar_select %p154, %s18, 0
      %s156 = smul.addr %s153, 8
      %s157 = sadd.s32 %s155, %s156
      %s158 = smul.addr %s157, 8
      %s159 = scalar_lea.vmem %s0, %s158
      %p160 = pneg %p48
      %p161 = pneg %p45
      %p162 = scmp.lt.s32.totalorder %s17, 1
      %s163 = scalar_select %p162, %s17, 1
      %p164 = scmp.lt.s32.totalorder %s18, 0
      %s165 = scalar_select %p164, %s18, 0
      %s166 = smul.addr %s163, 32
      %s167 = sadd.s32 %s165, %s166
      %s168 = smul.addr %s167, 8
      %s169 = scalar_lea.vmem %s1, %s168
      %p170 = pneg %p76
      %p171 = pneg %p73
      %p172 = pneg %p104
      %p173 = pneg %p101
      %p174 = scmp.lt.s32.totalorder %s17, 1
      %s175 = scalar_select %p174, %s17, 1
      %p176 = scmp.lt.s32.totalorder %s18, 0
      %s177 = scalar_select %p176, %s18, 0
      %s178 = smul.addr %s175, 18
      %s179 = sadd.s32 %s177, %s178
      %s180 = smul.addr %s179, 8
      %s181 = scalar_lea.vmem %s2, %s180
      %p182 = scmp.lt.s32.totalorder %s17, 1
      %s183 = scalar_select %p182, %s17, 1
      %p184 = scmp.lt.s32.totalorder %s18, 0
      %s185 = scalar_select %p184, %s18, 0
      %s186 = smul.addr %s183, 8
      %s187 = sadd.s32 %s185, %s186
      %s188 = smul.addr %s187, 8
      %s189 = scalar_lea.vmem %s0, %s188
      %p190 = scmp.lt.s32.totalorder %s17, 1
      %s191 = scalar_select %p190, %s17, 1
      %p192 = scmp.lt.s32.totalorder %s18, 0
      %s193 = scalar_select %p192, %s18, 0
      %s194 = smul.addr %s191, 32
      %s195 = sadd.s32 %s193, %s194
      %s196 = smul.addr %s195, 8
      %s197 = scalar_lea.vmem %s1, %s196
      %p198 = scmp.lt.s32.totalorder %s17, 1
      %s199 = scalar_select %p198, %s17, 1
      %p200 = scmp.lt.s32.totalorder %s18, 0
      %s201 = scalar_select %p200, %s18, 0
      %s202 = smul.addr %s199, 18
      %s203 = sadd.s32 %s201, %s202
      %s204 = smul.addr %s203, 8
      %s205 = scalar_lea.vmem %s2, %s204
      %v206 = vld [vmem:[%s197] sm:$0xff]
      %v207 = vld [vmem:[%s197 + $0x8] sm:$0x1]
      %v208 = vld [vmem:[%s197 + $0x10] sm:$0xff]
      %v209 = vld [vmem:[%s197 + $0x18] sm:$0x1]
      %v210 = vld [vmem:[%s197 + $0x20] sm:$0xff]
      %v211 = vld [vmem:[%s197 + $0x28] sm:$0x1]
      %v212 = vld [vmem:[%s197 + $0x30] sm:$0xff]
      %v213 = vld [vmem:[%s197 + $0x38] sm:$0x1]
      %v214 = vld [vmem:[%s197 + $0x40] sm:$0xff]
      %v215 = vld [vmem:[%s197 + $0x48] sm:$0x1]
      %v216 = vld [vmem:[%s197 + $0x50] sm:$0xff]
      %v217 = vld [vmem:[%s197 + $0x58] sm:$0x1]
      %v218 = vld [vmem:[%s197 + $0x60] sm:$0xff]
      %v219 = vld [vmem:[%s197 + $0x68] sm:$0x1]
      %v220 = vld [vmem:[%s197 + $0x70] sm:$0xff]
      %v221 = vld [vmem:[%s197 + $0x78] sm:$0x1]
      %v222 = vld [vmem:[%s197 + $0x80] sm:$0xff]
      %v223 = vld [vmem:[%s197 + $0x88] sm:$0x1]
      %v224 = vld [vmem:[%s197 + $0x90] sm:$0xff]
      %v225 = vld [vmem:[%s197 + $0x98] sm:$0x1]
      %v226 = vld [vmem:[%s197 + $0xa0] sm:$0xff]
      %v227 = vld [vmem:[%s197 + $0xa8] sm:$0x1]
      %v228 = vld [vmem:[%s197 + $0xb0] sm:$0xff]
      %v229 = vld [vmem:[%s197 + $0xb8] sm:$0x1]
      %v230 = vld [vmem:[%s197 + $0xc0] sm:$0xff]
      %v231 = vld [vmem:[%s197 + $0xc8] sm:$0x1]
      %v232 = vld [vmem:[%s189] sm:$0x1]
      %v233 = vperm.slane %v232, 0
      %v234 = vmul.f32 %v206, %v233
      %v235 = vmul.f32 %v207, %v233
      %v236 = vmul.f32 %v208, %v233
      %v237 = vmul.f32 %v209, %v233
      %v238 = vmul.f32 %v210, %v233
      %v239 = vmul.f32 %v211, %v233
      %v240 = vmul.f32 %v212, %v233
      %v241 = vmul.f32 %v213, %v233
      %v242 = vmul.f32 %v214, %v233
      %v243 = vmul.f32 %v215, %v233
      %v244 = vmul.f32 %v216, %v233
      %v245 = vmul.f32 %v217, %v233
      %v246 = vadd.f32 %v234, 0.0
      %v247 = vadd.f32 %v235, 0.0
      %v248 = vadd.f32 %v236, 0.0
      %v249 = vadd.f32 %v237, 0.0
      %v250 = vadd.f32 %v238, 0.0
      %v251 = vadd.f32 %v239, 0.0
      %v252 = vadd.f32 %v240, 0.0
      %v253 = vadd.f32 %v241, 0.0
      %v254 = vadd.f32 %v242, 0.0
      %v255 = vadd.f32 %v243, 0.0
      %v256 = vadd.f32 %v244, 0.0
      %v257 = vadd.f32 %v245, 0.0
      %s258 = scalar_lea.vmem %s189, 8
      %v259 = vld [vmem:[%s258] sm:$0x1]
      %v260 = vperm.slane %v259, 0
      %v261 = vmul.f32 %v208, %v260
      %v262 = vmul.f32 %v209, %v260
      %v263 = vmul.f32 %v210, %v260
      %v264 = vmul.f32 %v211, %v260
      %v265 = vmul.f32 %v212, %v260
      %v266 = vmul.f32 %v213, %v260
      %v267 = vmul.f32 %v214, %v260
      %v268 = vmul.f32 %v215, %v260
      %v269 = vmul.f32 %v216, %v260
      %v270 = vmul.f32 %v217, %v260
      %v271 = vmul.f32 %v218, %v260
      %v272 = vmul.f32 %v219, %v260
      %v273 = vadd.f32 %v246, %v261
      %v274 = vadd.f32 %v247, %v262
      %v275 = vadd.f32 %v248, %v263
      %v276 = vadd.f32 %v249, %v264
      %v277 = vadd.f32 %v250, %v265
      %v278 = vadd.f32 %v251, %v266
      %v279 = vadd.f32 %v252, %v267
      %v280 = vadd.f32 %v253, %v268
      %v281 = vadd.f32 %v254, %v269
      %v282 = vadd.f32 %v255, %v270
      %v283 = vadd.f32 %v256, %v271
      %v284 = vadd.f32 %v257, %v272
      %s285 = scalar_lea.vmem %s189, 16
      %v286 = vld [vmem:[%s285] sm:$0x1]
      %v287 = vperm.slane %v286, 0
      %v288 = vmul.f32 %v210, %v287
      %v289 = vmul.f32 %v211, %v287
      %v290 = vmul.f32 %v212, %v287
      %v291 = vmul.f32 %v213, %v287
      %v292 = vmul.f32 %v214, %v287
      %v293 = vmul.f32 %v215, %v287
      %v294 = vmul.f32 %v216, %v287
      %v295 = vmul.f32 %v217, %v287
      %v296 = vmul.f32 %v218, %v287
      %v297 = vmul.f32 %v219, %v287
      %v298 = vmul.f32 %v220, %v287
      %v299 = vmul.f32 %v221, %v287
      %v300 = vadd.f32 %v273, %v288
      %v301 = vadd.f32 %v274, %v289
      %v302 = vadd.f32 %v275, %v290
      %v303 = vadd.f32 %v276, %v291
      %v304 = vadd.f32 %v277, %v292
      %v305 = vadd.f32 %v278, %v293
      %v306 = vadd.f32 %v279, %v294
      %v307 = vadd.f32 %v280, %v295
      %v308 = vadd.f32 %v281, %v296
      %v309 = vadd.f32 %v282, %v297
      %v310 = vadd.f32 %v283, %v298
      %v311 = vadd.f32 %v284, %v299
      %s312 = scalar_lea.vmem %s189, 24
      %v313 = vld [vmem:[%s312] sm:$0x1]
      %v314 = vperm.slane %v313, 0
      %v315 = vmul.f32 %v212, %v314
      %v316 = vmul.f32 %v213, %v314
      %v317 = vmul.f32 %v214, %v314
      %v318 = vmul.f32 %v215, %v314
      %v319 = vmul.f32 %v216, %v314
      %v320 = vmul.f32 %v217, %v314
      %v321 = vmul.f32 %v218, %v314
      %v322 = vmul.f32 %v219, %v314
      %v323 = vmul.f32 %v220, %v314
      %v324 = vmul.f32 %v221, %v314
      %v325 = vmul.f32 %v222, %v314
      %v326 = vmul.f32 %v223, %v314
      %v327 = vadd.f32 %v300, %v315
      %v328 = vadd.f32 %v301, %v316
      %v329 = vadd.f32 %v302, %v317
      %v330 = vadd.f32 %v303, %v318
      %v331 = vadd.f32 %v304, %v319
      %v332 = vadd.f32 %v305, %v320
      %v333 = vadd.f32 %v306, %v321
      %v334 = vadd.f32 %v307, %v322
      %v335 = vadd.f32 %v308, %v323
      %v336 = vadd.f32 %v309, %v324
      %v337 = vadd.f32 %v310, %v325
      %v338 = vadd.f32 %v311, %v326
      %s339 = scalar_lea.vmem %s189, 32
      %v340 = vld [vmem:[%s339] sm:$0x1]
      %v341 = vperm.slane %v340, 0
      %v342 = vmul.f32 %v214, %v341
      %v343 = vmul.f32 %v215, %v341
      %v344 = vmul.f32 %v216, %v341
      %v345 = vmul.f32 %v217, %v341
      %v346 = vmul.f32 %v218, %v341
      %v347 = vmul.f32 %v219, %v341
      %v348 = vmul.f32 %v220, %v341
      %v349 = vmul.f32 %v221, %v341
      %v350 = vmul.f32 %v222, %v341
      %v351 = vmul.f32 %v223, %v341
      %v352 = vmul.f32 %v224, %v341
      %v353 = vmul.f32 %v225, %v341
      %v354 = vadd.f32 %v327, %v342
      %v355 = vadd.f32 %v328, %v343
      %v356 = vadd.f32 %v329, %v344
      %v357 = vadd.f32 %v330, %v345
      %v358 = vadd.f32 %v331, %v346
      %v359 = vadd.f32 %v332, %v347
      %v360 = vadd.f32 %v333, %v348
      %v361 = vadd.f32 %v334, %v349
      %v362 = vadd.f32 %v335, %v350
      %v363 = vadd.f32 %v336, %v351
      %v364 = vadd.f32 %v337, %v352
      %v365 = vadd.f32 %v338, %v353
      %s366 = scalar_lea.vmem %s189, 40
      %v367 = vld [vmem:[%s366] sm:$0x1]
      %v368 = vperm.slane %v367, 0
      %v369 = vmul.f32 %v216, %v368
      %v370 = vmul.f32 %v217, %v368
      %v371 = vmul.f32 %v218, %v368
      %v372 = vmul.f32 %v219, %v368
      %v373 = vmul.f32 %v220, %v368
      %v374 = vmul.f32 %v221, %v368
      %v375 = vmul.f32 %v222, %v368
      %v376 = vmul.f32 %v223, %v368
      %v377 = vmul.f32 %v224, %v368
      %v378 = vmul.f32 %v225, %v368
      %v379 = vmul.f32 %v226, %v368
      %v380 = vmul.f32 %v227, %v368
      %v381 = vadd.f32 %v354, %v369
      %v382 = vadd.f32 %v355, %v370
      %v383 = vadd.f32 %v356, %v371
      %v384 = vadd.f32 %v357, %v372
      %v385 = vadd.f32 %v358, %v373
      %v386 = vadd.f32 %v359, %v374
      %v387 = vadd.f32 %v360, %v375
      %v388 = vadd.f32 %v361, %v376
      %v389 = vadd.f32 %v362, %v377
      %v390 = vadd.f32 %v363, %v378
      %v391 = vadd.f32 %v364, %v379
      %v392 = vadd.f32 %v365, %v380
      %s393 = scalar_lea.vmem %s189, 48
      %v394 = vld [vmem:[%s393] sm:$0x1]
      %v395 = vperm.slane %v394, 0
      %v396 = vmul.f32 %v218, %v395
      %v397 = vmul.f32 %v219, %v395
      %v398 = vmul.f32 %v220, %v395
      %v399 = vmul.f32 %v221, %v395
      %v400 = vmul.f32 %v222, %v395
      %v401 = vmul.f32 %v223, %v395
      %v402 = vmul.f32 %v224, %v395
      %v403 = vmul.f32 %v225, %v395
      %v404 = vmul.f32 %v226, %v395
      %v405 = vmul.f32 %v227, %v395
      %v406 = vmul.f32 %v228, %v395
      %v407 = vmul.f32 %v229, %v395
      %v408 = vadd.f32 %v381, %v396
      %v409 = vadd.f32 %v382, %v397
      %v410 = vadd.f32 %v383, %v398
      %v411 = vadd.f32 %v384, %v399
      %v412 = vadd.f32 %v385, %v400
      %v413 = vadd.f32 %v386, %v401
      %v414 = vadd.f32 %v387, %v402
      %v415 = vadd.f32 %v388, %v403
      %v416 = vadd.f32 %v389, %v404
      %v417 = vadd.f32 %v390, %v405
      %v418 = vadd.f32 %v391, %v406
      %v419 = vadd.f32 %v392, %v407
      %s420 = scalar_lea.vmem %s189, 56
      %v421 = vld [vmem:[%s420] sm:$0x1]
      %v422 = vperm.slane %v421, 0
      %v423 = vmul.f32 %v220, %v422
      %v424 = vmul.f32 %v221, %v422
      %v425 = vmul.f32 %v222, %v422
      %v426 = vmul.f32 %v223, %v422
      %v427 = vmul.f32 %v224, %v422
      %v428 = vmul.f32 %v225, %v422
      %v429 = vmul.f32 %v226, %v422
      %v430 = vmul.f32 %v227, %v422
      %v431 = vmul.f32 %v228, %v422
      %v432 = vmul.f32 %v229, %v422
      %v433 = vmul.f32 %v230, %v422
      %v434 = vmul.f32 %v231, %v422
      %v435 = vadd.f32 %v408, %v423
      %v436 = vadd.f32 %v409, %v424
      %v437 = vadd.f32 %v410, %v425
      %v438 = vadd.f32 %v411, %v426
      %v439 = vadd.f32 %v412, %v427
      %v440 = vadd.f32 %v413, %v428
      %v441 = vadd.f32 %v414, %v429
      %v442 = vadd.f32 %v415, %v430
      %v443 = vadd.f32 %v416, %v431
      %v444 = vadd.f32 %v417, %v432
      %v445 = vadd.f32 %v418, %v433
      %v446 = vadd.f32 %v419, %v434
      %v447 = vld [vmem:[%s197 + $0x1] sm:$0xff]
      %v448 = vld [vmem:[%s197 + $0x9] sm:$0x1]
      %v449 = vld [vmem:[%s197 + $0x11] sm:$0xff]
      %v450 = vld [vmem:[%s197 + $0x19] sm:$0x1]
      %v451 = vld [vmem:[%s197 + $0x21] sm:$0xff]
      %v452 = vld [vmem:[%s197 + $0x29] sm:$0x1]
      %v453 = vld [vmem:[%s197 + $0x31] sm:$0xff]
      %v454 = vld [vmem:[%s197 + $0x39] sm:$0x1]
      %v455 = vld [vmem:[%s197 + $0x41] sm:$0xff]
      %v456 = vld [vmem:[%s197 + $0x49] sm:$0x1]
      %v457 = vld [vmem:[%s197 + $0x51] sm:$0xff]
      %v458 = vld [vmem:[%s197 + $0x59] sm:$0x1]
      %v459 = vld [vmem:[%s197 + $0x61] sm:$0xff]
      %v460 = vld [vmem:[%s197 + $0x69] sm:$0x1]
      %v461 = vld [vmem:[%s197 + $0x71] sm:$0xff]
      %v462 = vld [vmem:[%s197 + $0x79] sm:$0x1]
      %v463 = vld [vmem:[%s197 + $0x81] sm:$0xff]
      %v464 = vld [vmem:[%s197 + $0x89] sm:$0x1]
      %v465 = vld [vmem:[%s197 + $0x91] sm:$0xff]
      %v466 = vld [vmem:[%s197 + $0x99] sm:$0x1]
      %v467 = vld [vmem:[%s197 + $0xa1] sm:$0xff]
      %v468 = vld [vmem:[%s197 + $0xa9] sm:$0x1]
      %v469 = vld [vmem:[%s197 + $0xb1] sm:$0xff]
      %v470 = vld [vmem:[%s197 + $0xb9] sm:$0x1]
      %v471 = vld [vmem:[%s197 + $0xc1] sm:$0xff]
      %v472 = vld [vmem:[%s197 + $0xc9] sm:$0x1]
      %v473 = vld [vmem:[%s189 + $0x1] sm:$0x1]
      %v474 = vperm.slane %v473, 0
      %v475 = vmul.f32 %v447, %v474
      %v476 = vmul.f32 %v448, %v474
      %v477 = vmul.f32 %v449, %v474
      %v478 = vmul.f32 %v450, %v474
      %v479 = vmul.f32 %v451, %v474
      %v480 = vmul.f32 %v452, %v474
      %v481 = vmul.f32 %v453, %v474
      %v482 = vmul.f32 %v454, %v474
      %v483 = vmul.f32 %v455, %v474
      %v484 = vmul.f32 %v456, %v474
      %v485 = vmul.f32 %v457, %v474
      %v486 = vmul.f32 %v458, %v474
      %v487 = vadd.f32 %v435, %v475
      %v488 = vadd.f32 %v436, %v476
      %v489 = vadd.f32 %v437, %v477
      %v490 = vadd.f32 %v438, %v478
      %v491 = vadd.f32 %v439, %v479
      %v492 = vadd.f32 %v440, %v480
      %v493 = vadd.f32 %v441, %v481
      %v494 = vadd.f32 %v442, %v482
      %v495 = vadd.f32 %v443, %v483
      %v496 = vadd.f32 %v444, %v484
      %v497 = vadd.f32 %v445, %v485
      %v498 = vadd.f32 %v446, %v486
      %v499 = vld [vmem:[%s258 + $0x1] sm:$0x1]
      %v500 = vperm.slane %v499, 0
      %v501 = vmul.f32 %v449, %v500
      %v502 = vmul.f32 %v450, %v500
      %v503 = vmul.f32 %v451, %v500
      %v504 = vmul.f32 %v452, %v500
      %v505 = vmul.f32 %v453, %v500
      %v506 = vmul.f32 %v454, %v500
      %v507 = vmul.f32 %v455, %v500
      %v508 = vmul.f32 %v456, %v500
      %v509 = vmul.f32 %v457, %v500
      %v510 = vmul.f32 %v458, %v500
      %v511 = vmul.f32 %v459, %v500
      %v512 = vmul.f32 %v460, %v500
      %v513 = vadd.f32 %v487, %v501
      %v514 = vadd.f32 %v488, %v502
      %v515 = vadd.f32 %v489, %v503
      %v516 = vadd.f32 %v490, %v504
      %v517 = vadd.f32 %v491, %v505
      %v518 = vadd.f32 %v492, %v506
      %v519 = vadd.f32 %v493, %v507
      %v520 = vadd.f32 %v494, %v508
      %v521 = vadd.f32 %v495, %v509
      %v522 = vadd.f32 %v496, %v510
      %v523 = vadd.f32 %v497, %v511
      %v524 = vadd.f32 %v498, %v512
      %v525 = vld [vmem:[%s285 + $0x1] sm:$0x1]
      %v526 = vperm.slane %v525, 0
      %v527 = vmul.f32 %v451, %v526
      %v528 = vmul.f32 %v452, %v526
      %v529 = vmul.f32 %v453, %v526
      %v530 = vmul.f32 %v454, %v526
      %v531 = vmul.f32 %v455, %v526
      %v532 = vmul.f32 %v456, %v526
      %v533 = vmul.f32 %v457, %v526
      %v534 = vmul.f32 %v458, %v526
      %v535 = vmul.f32 %v459, %v526
      %v536 = vmul.f32 %v460, %v526
      %v537 = vmul.f32 %v461, %v526
      %v538 = vmul.f32 %v462, %v526
      %v539 = vadd.f32 %v513, %v527
      %v540 = vadd.f32 %v514, %v528
      %v541 = vadd.f32 %v515, %v529
      %v542 = vadd.f32 %v516, %v530
      %v543 = vadd.f32 %v517, %v531
      %v544 = vadd.f32 %v518, %v532
      %v545 = vadd.f32 %v519, %v533
      %v546 = vadd.f32 %v520, %v534
      %v547 = vadd.f32 %v521, %v535
      %v548 = vadd.f32 %v522, %v536
      %v549 = vadd.f32 %v523, %v537
      %v550 = vadd.f32 %v524, %v538
      %v551 = vld [vmem:[%s312 + $0x1] sm:$0x1]
      %v552 = vperm.slane %v551, 0
      %v553 = vmul.f32 %v453, %v552
      %v554 = vmul.f32 %v454, %v552
      %v555 = vmul.f32 %v455, %v552
      %v556 = vmul.f32 %v456, %v552
      %v557 = vmul.f32 %v457, %v552
      %v558 = vmul.f32 %v458, %v552
      %v559 = vmul.f32 %v459, %v552
      %v560 = vmul.f32 %v460, %v552
      %v561 = vmul.f32 %v461, %v552
      %v562 = vmul.f32 %v462, %v552
      %v563 = vmul.f32 %v463, %v552
      %v564 = vmul.f32 %v464, %v552
      %v565 = vadd.f32 %v539, %v553
      %v566 = vadd.f32 %v540, %v554
      %v567 = vadd.f32 %v541, %v555
      %v568 = vadd.f32 %v542, %v556
      %v569 = vadd.f32 %v543, %v557
      %v570 = vadd.f32 %v544, %v558
      %v571 = vadd.f32 %v545, %v559
      %v572 = vadd.f32 %v546, %v560
      %v573 = vadd.f32 %v547, %v561
      %v574 = vadd.f32 %v548, %v562
      %v575 = vadd.f32 %v549, %v563
      %v576 = vadd.f32 %v550, %v564
      %v577 = vld [vmem:[%s339 + $0x1] sm:$0x1]
      %v578 = vperm.slane %v577, 0
      %v579 = vmul.f32 %v455, %v578
      %v580 = vmul.f32 %v456, %v578
      %v581 = vmul.f32 %v457, %v578
      %v582 = vmul.f32 %v458, %v578
      %v583 = vmul.f32 %v459, %v578
      %v584 = vmul.f32 %v460, %v578
      %v585 = vmul.f32 %v461, %v578
      %v586 = vmul.f32 %v462, %v578
      %v587 = vmul.f32 %v463, %v578
      %v588 = vmul.f32 %v464, %v578
      %v589 = vmul.f32 %v465, %v578
      %v590 = vmul.f32 %v466, %v578
      %v591 = vadd.f32 %v565, %v579
      %v592 = vadd.f32 %v566, %v580
      %v593 = vadd.f32 %v567, %v581
      %v594 = vadd.f32 %v568, %v582
      %v595 = vadd.f32 %v569, %v583
      %v596 = vadd.f32 %v570, %v584
      %v597 = vadd.f32 %v571, %v585
      %v598 = vadd.f32 %v572, %v586
      %v599 = vadd.f32 %v573, %v587
      %v600 = vadd.f32 %v574, %v588
      %v601 = vadd.f32 %v575, %v589
      %v602 = vadd.f32 %v576, %v590
      %v603 = vld [vmem:[%s366 + $0x1] sm:$0x1]
      %v604 = vperm.slane %v603, 0
      %v605 = vmul.f32 %v457, %v604
      %v606 = vmul.f32 %v458, %v604
      %v607 = vmul.f32 %v459, %v604
      %v608 = vmul.f32 %v460, %v604
      %v609 = vmul.f32 %v461, %v604
      %v610 = vmul.f32 %v462, %v604
      %v611 = vmul.f32 %v463, %v604
      %v612 = vmul.f32 %v464, %v604
      %v613 = vmul.f32 %v465, %v604
      %v614 = vmul.f32 %v466, %v604
      %v615 = vmul.f32 %v467, %v604
      %v616 = vmul.f32 %v468, %v604
      %v617 = vadd.f32 %v591, %v605
      %v618 = vadd.f32 %v592, %v606
      %v619 = vadd.f32 %v593, %v607
      %v620 = vadd.f32 %v594, %v608
      %v621 = vadd.f32 %v595, %v609
      %v622 = vadd.f32 %v596, %v610
      %v623 = vadd.f32 %v597, %v611
      %v624 = vadd.f32 %v598, %v612
      %v625 = vadd.f32 %v599, %v613
      %v626 = vadd.f32 %v600, %v614
      %v627 = vadd.f32 %v601, %v615
      %v628 = vadd.f32 %v602, %v616
      %v629 = vld [vmem:[%s393 + $0x1] sm:$0x1]
      %v630 = vperm.slane %v629, 0
      %v631 = vmul.f32 %v459, %v630
      %v632 = vmul.f32 %v460, %v630
      %v633 = vmul.f32 %v461, %v630
      %v634 = vmul.f32 %v462, %v630
      %v635 = vmul.f32 %v463, %v630
      %v636 = vmul.f32 %v464, %v630
      %v637 = vmul.f32 %v465, %v630
      %v638 = vmul.f32 %v466, %v630
      %v639 = vmul.f32 %v467, %v630
      %v640 = vmul.f32 %v468, %v630
      %v641 = vmul.f32 %v469, %v630
      %v642 = vmul.f32 %v470, %v630
      %v643 = vadd.f32 %v617, %v631
      %v644 = vadd.f32 %v618, %v632
      %v645 = vadd.f32 %v619, %v633
      %v646 = vadd.f32 %v620, %v634
      %v647 = vadd.f32 %v621, %v635
      %v648 = vadd.f32 %v622, %v636
      %v649 = vadd.f32 %v623, %v637
      %v650 = vadd.f32 %v624, %v638
      %v651 = vadd.f32 %v625, %v639
      %v652 = vadd.f32 %v626, %v640
      %v653 = vadd.f32 %v627, %v641
      %v654 = vadd.f32 %v628, %v642
      %v655 = vld [vmem:[%s420 + $0x1] sm:$0x1]
      %v656 = vperm.slane %v655, 0
      %v657 = vmul.f32 %v461, %v656
      %v658 = vmul.f32 %v462, %v656
      %v659 = vmul.f32 %v463, %v656
      %v660 = vmul.f32 %v464, %v656
      %v661 = vmul.f32 %v465, %v656
      %v662 = vmul.f32 %v466, %v656
      %v663 = vmul.f32 %v467, %v656
      %v664 = vmul.f32 %v468, %v656
      %v665 = vmul.f32 %v469, %v656
      %v666 = vmul.f32 %v470, %v656
      %v667 = vmul.f32 %v471, %v656
      %v668 = vmul.f32 %v472, %v656
      %v669 = vadd.f32 %v643, %v657
      %v670 = vadd.f32 %v644, %v658
      %v671 = vadd.f32 %v645, %v659
      %v672 = vadd.f32 %v646, %v660
      %v673 = vadd.f32 %v647, %v661
      %v674 = vadd.f32 %v648, %v662
      %v675 = vadd.f32 %v649, %v663
      %v676 = vadd.f32 %v650, %v664
      %v677 = vadd.f32 %v651, %v665
      %v678 = vadd.f32 %v652, %v666
      %v679 = vadd.f32 %v653, %v667
      %v680 = vadd.f32 %v654, %v668
      %v681 = vld [vmem:[%s197 + $0x2] sm:$0xff]
      %v682 = vld [vmem:[%s197 + $0xa] sm:$0x1]
      %v683 = vld [vmem:[%s197 + $0x12] sm:$0xff]
      %v684 = vld [vmem:[%s197 + $0x1a] sm:$0x1]
      %v685 = vld [vmem:[%s197 + $0x22] sm:$0xff]
      %v686 = vld [vmem:[%s197 + $0x2a] sm:$0x1]
      %v687 = vld [vmem:[%s197 + $0x32] sm:$0xff]
      %v688 = vld [vmem:[%s197 + $0x3a] sm:$0x1]
      %v689 = vld [vmem:[%s197 + $0x42] sm:$0xff]
      %v690 = vld [vmem:[%s197 + $0x4a] sm:$0x1]
      %v691 = vld [vmem:[%s197 + $0x52] sm:$0xff]
      %v692 = vld [vmem:[%s197 + $0x5a] sm:$0x1]
      %v693 = vld [vmem:[%s197 + $0x62] sm:$0xff]
      %v694 = vld [vmem:[%s197 + $0x6a] sm:$0x1]
      %v695 = vld [vmem:[%s197 + $0x72] sm:$0xff]
      %v696 = vld [vmem:[%s197 + $0x7a] sm:$0x1]
      %v697 = vld [vmem:[%s197 + $0x82] sm:$0xff]
      %v698 = vld [vmem:[%s197 + $0x8a] sm:$0x1]
      %v699 = vld [vmem:[%s197 + $0x92] sm:$0xff]
      %v700 = vld [vmem:[%s197 + $0x9a] sm:$0x1]
      %v701 = vld [vmem:[%s197 + $0xa2] sm:$0xff]
      %v702 = vld [vmem:[%s197 + $0xaa] sm:$0x1]
      %v703 = vld [vmem:[%s197 + $0xb2] sm:$0xff]
      %v704 = vld [vmem:[%s197 + $0xba] sm:$0x1]
      %v705 = vld [vmem:[%s197 + $0xc2] sm:$0xff]
      %v706 = vld [vmem:[%s197 + $0xca] sm:$0x1]
      %v707 = vld [vmem:[%s189 + $0x2] sm:$0x1]
      %v708 = vperm.slane %v707, 0
      %v709 = vmul.f32 %v681, %v708
      %v710 = vmul.f32 %v682, %v708
      %v711 = vmul.f32 %v683, %v708
      %v712 = vmul.f32 %v684, %v708
      %v713 = vmul.f32 %v685, %v708
      %v714 = vmul.f32 %v686, %v708
      %v715 = vmul.f32 %v687, %v708
      %v716 = vmul.f32 %v688, %v708
      %v717 = vmul.f32 %v689, %v708
      %v718 = vmul.f32 %v690, %v708
      %v719 = vmul.f32 %v691, %v708
      %v720 = vmul.f32 %v692, %v708
      %v721 = vadd.f32 %v669, %v709
      %v722 = vadd.f32 %v670, %v710
      %v723 = vadd.f32 %v671, %v711
      %v724 = vadd.f32 %v672, %v712
      %v725 = vadd.f32 %v673, %v713
      %v726 = vadd.f32 %v674, %v714
      %v727 = vadd.f32 %v675, %v715
      %v728 = vadd.f32 %v676, %v716
      %v729 = vadd.f32 %v677, %v717
      %v730 = vadd.f32 %v678, %v718
      %v731 = vadd.f32 %v679, %v719
      %v732 = vadd.f32 %v680, %v720
      %v733 = vld [vmem:[%s258 + $0x2] sm:$0x1]
      %v734 = vperm.slane %v733, 0
      %v735 = vmul.f32 %v683, %v734
      %v736 = vmul.f32 %v684, %v734
      %v737 = vmul.f32 %v685, %v734
      %v738 = vmul.f32 %v686, %v734
      %v739 = vmul.f32 %v687, %v734
      %v740 = vmul.f32 %v688, %v734
      %v741 = vmul.f32 %v689, %v734
      %v742 = vmul.f32 %v690, %v734
      %v743 = vmul.f32 %v691, %v734
      %v744 = vmul.f32 %v692, %v734
      %v745 = vmul.f32 %v693, %v734
      %v746 = vmul.f32 %v694, %v734
      %v747 = vadd.f32 %v721, %v735
      %v748 = vadd.f32 %v722, %v736
      %v749 = vadd.f32 %v723, %v737
      %v750 = vadd.f32 %v724, %v738
      %v751 = vadd.f32 %v725, %v739
      %v752 = vadd.f32 %v726, %v740
      %v753 = vadd.f32 %v727, %v741
      %v754 = vadd.f32 %v728, %v742
      %v755 = vadd.f32 %v729, %v743
      %v756 = vadd.f32 %v730, %v744
      %v757 = vadd.f32 %v731, %v745
      %v758 = vadd.f32 %v732, %v746
      %v759 = vld [vmem:[%s285 + $0x2] sm:$0x1]
      %v760 = vperm.slane %v759, 0
      %v761 = vmul.f32 %v685, %v760
      %v762 = vmul.f32 %v686, %v760
      %v763 = vmul.f32 %v687, %v760
      %v764 = vmul.f32 %v688, %v760
      %v765 = vmul.f32 %v689, %v760
      %v766 = vmul.f32 %v690, %v760
      %v767 = vmul.f32 %v691, %v760
      %v768 = vmul.f32 %v692, %v760
      %v769 = vmul.f32 %v693, %v760
      %v770 = vmul.f32 %v694, %v760
      %v771 = vmul.f32 %v695, %v760
      %v772 = vmul.f32 %v696, %v760
      %v773 = vadd.f32 %v747, %v761
      %v774 = vadd.f32 %v748, %v762
      %v775 = vadd.f32 %v749, %v763
      %v776 = vadd.f32 %v750, %v764
      %v777 = vadd.f32 %v751, %v765
      %v778 = vadd.f32 %v752, %v766
      %v779 = vadd.f32 %v753, %v767
      %v780 = vadd.f32 %v754, %v768
      %v781 = vadd.f32 %v755, %v769
      %v782 = vadd.f32 %v756, %v770
      %v783 = vadd.f32 %v757, %v771
      %v784 = vadd.f32 %v758, %v772
      %v785 = vld [vmem:[%s312 + $0x2] sm:$0x1]
      %v786 = vperm.slane %v785, 0
      %v787 = vmul.f32 %v687, %v786
      %v788 = vmul.f32 %v688, %v786
      %v789 = vmul.f32 %v689, %v786
      %v790 = vmul.f32 %v690, %v786
      %v791 = vmul.f32 %v691, %v786
      %v792 = vmul.f32 %v692, %v786
      %v793 = vmul.f32 %v693, %v786
      %v794 = vmul.f32 %v694, %v786
      %v795 = vmul.f32 %v695, %v786
      %v796 = vmul.f32 %v696, %v786
      %v797 = vmul.f32 %v697, %v786
      %v798 = vmul.f32 %v698, %v786
      %v799 = vadd.f32 %v773, %v787
      %v800 = vadd.f32 %v774, %v788
      %v801 = vadd.f32 %v775, %v789
      %v802 = vadd.f32 %v776, %v790
      %v803 = vadd.f32 %v777, %v791
      %v804 = vadd.f32 %v778, %v792
      %v805 = vadd.f32 %v779, %v793
      %v806 = vadd.f32 %v780, %v794
      %v807 = vadd.f32 %v781, %v795
      %v808 = vadd.f32 %v782, %v796
      %v809 = vadd.f32 %v783, %v797
      %v810 = vadd.f32 %v784, %v798
      %v811 = vld [vmem:[%s339 + $0x2] sm:$0x1]
      %v812 = vperm.slane %v811, 0
      %v813 = vmul.f32 %v689, %v812
      %v814 = vmul.f32 %v690, %v812
      %v815 = vmul.f32 %v691, %v812
      %v816 = vmul.f32 %v692, %v812
      %v817 = vmul.f32 %v693, %v812
      %v818 = vmul.f32 %v694, %v812
      %v819 = vmul.f32 %v695, %v812
      %v820 = vmul.f32 %v696, %v812
      %v821 = vmul.f32 %v697, %v812
      %v822 = vmul.f32 %v698, %v812
      %v823 = vmul.f32 %v699, %v812
      %v824 = vmul.f32 %v700, %v812
      %v825 = vadd.f32 %v799, %v813
      %v826 = vadd.f32 %v800, %v814
      %v827 = vadd.f32 %v801, %v815
      %v828 = vadd.f32 %v802, %v816
      %v829 = vadd.f32 %v803, %v817
      %v830 = vadd.f32 %v804, %v818
      %v831 = vadd.f32 %v805, %v819
      %v832 = vadd.f32 %v806, %v820
      %v833 = vadd.f32 %v807, %v821
      %v834 = vadd.f32 %v808, %v822
      %v835 = vadd.f32 %v809, %v823
      %v836 = vadd.f32 %v810, %v824
      %v837 = vld [vmem:[%s366 + $0x2] sm:$0x1]
      %v838 = vperm.slane %v837, 0
      %v839 = vmul.f32 %v691, %v838
      %v840 = vmul.f32 %v692, %v838
      %v841 = vmul.f32 %v693, %v838
      %v842 = vmul.f32 %v694, %v838
      %v843 = vmul.f32 %v695, %v838
      %v844 = vmul.f32 %v696, %v838
      %v845 = vmul.f32 %v697, %v838
      %v846 = vmul.f32 %v698, %v838
      %v847 = vmul.f32 %v699, %v838
      %v848 = vmul.f32 %v700, %v838
      %v849 = vmul.f32 %v701, %v838
      %v850 = vmul.f32 %v702, %v838
      %v851 = vadd.f32 %v825, %v839
      %v852 = vadd.f32 %v826, %v840
      %v853 = vadd.f32 %v827, %v841
      %v854 = vadd.f32 %v828, %v842
      %v855 = vadd.f32 %v829, %v843
      %v856 = vadd.f32 %v830, %v844
      %v857 = vadd.f32 %v831, %v845
      %v858 = vadd.f32 %v832, %v846
      %v859 = vadd.f32 %v833, %v847
      %v860 = vadd.f32 %v834, %v848
      %v861 = vadd.f32 %v835, %v849
      %v862 = vadd.f32 %v836, %v850
      %v863 = vld [vmem:[%s393 + $0x2] sm:$0x1]
      %v864 = vperm.slane %v863, 0
      %v865 = vmul.f32 %v693, %v864
      %v866 = vmul.f32 %v694, %v864
      %v867 = vmul.f32 %v695, %v864
      %v868 = vmul.f32 %v696, %v864
      %v869 = vmul.f32 %v697, %v864
      %v870 = vmul.f32 %v698, %v864
      %v871 = vmul.f32 %v699, %v864
      %v872 = vmul.f32 %v700, %v864
      %v873 = vmul.f32 %v701, %v864
      %v874 = vmul.f32 %v702, %v864
      %v875 = vmul.f32 %v703, %v864
      %v876 = vmul.f32 %v704, %v864
      %v877 = vadd.f32 %v851, %v865
      %v878 = vadd.f32 %v852, %v866
      %v879 = vadd.f32 %v853, %v867
      %v880 = vadd.f32 %v854, %v868
      %v881 = vadd.f32 %v855, %v869
      %v882 = vadd.f32 %v856, %v870
      %v883 = vadd.f32 %v857, %v871
      %v884 = vadd.f32 %v858, %v872
      %v885 = vadd.f32 %v859, %v873
      %v886 = vadd.f32 %v860, %v874
      %v887 = vadd.f32 %v861, %v875
      %v888 = vadd.f32 %v862, %v876
      %v889 = vld [vmem:[%s420 + $0x2] sm:$0x1]
      %v890 = vperm.slane %v889, 0
      %v891 = vmul.f32 %v695, %v890
      %v892 = vmul.f32 %v696, %v890
      %v893 = vmul.f32 %v697, %v890
      %v894 = vmul.f32 %v698, %v890
      %v895 = vmul.f32 %v699, %v890
      %v896 = vmul.f32 %v700, %v890
      %v897 = vmul.f32 %v701, %v890
      %v898 = vmul.f32 %v702, %v890
      %v899 = vmul.f32 %v703, %v890
      %v900 = vmul.f32 %v704, %v890
      %v901 = vmul.f32 %v705, %v890
      %v902 = vmul.f32 %v706, %v890
      %v903 = vadd.f32 %v877, %v891
      %v904 = vadd.f32 %v878, %v892
      %v905 = vadd.f32 %v879, %v893
      %v906 = vadd.f32 %v880, %v894
      %v907 = vadd.f32 %v881, %v895
      %v908 = vadd.f32 %v882, %v896
      %v909 = vadd.f32 %v883, %v897
      %v910 = vadd.f32 %v884, %v898
      %v911 = vadd.f32 %v885, %v899
      %v912 = vadd.f32 %v886, %v900
      %v913 = vadd.f32 %v887, %v901
      %v914 = vadd.f32 %v888, %v902
      %v915 = vld [vmem:[%s197 + $0x3] sm:$0xff]
      %v916 = vld [vmem:[%s197 + $0xb] sm:$0x1]
      %v917 = vld [vmem:[%s197 + $0x13] sm:$0xff]
      %v918 = vld [vmem:[%s197 + $0x1b] sm:$0x1]
      %v919 = vld [vmem:[%s197 + $0x23] sm:$0xff]
      %v920 = vld [vmem:[%s197 + $0x2b] sm:$0x1]
      %v921 = vld [vmem:[%s197 + $0x33] sm:$0xff]
      %v922 = vld [vmem:[%s197 + $0x3b] sm:$0x1]
      %v923 = vld [vmem:[%s197 + $0x43] sm:$0xff]
      %v924 = vld [vmem:[%s197 + $0x4b] sm:$0x1]
      %v925 = vld [vmem:[%s197 + $0x53] sm:$0xff]
      %v926 = vld [vmem:[%s197 + $0x5b] sm:$0x1]
      %v927 = vld [vmem:[%s197 + $0x63] sm:$0xff]
      %v928 = vld [vmem:[%s197 + $0x6b] sm:$0x1]
      %v929 = vld [vmem:[%s197 + $0x73] sm:$0xff]
      %v930 = vld [vmem:[%s197 + $0x7b] sm:$0x1]
      %v931 = vld [vmem:[%s197 + $0x83] sm:$0xff]
      %v932 = vld [vmem:[%s197 + $0x8b] sm:$0x1]
      %v933 = vld [vmem:[%s197 + $0x93] sm:$0xff]
      %v934 = vld [vmem:[%s197 + $0x9b] sm:$0x1]
      %v935 = vld [vmem:[%s197 + $0xa3] sm:$0xff]
      %v936 = vld [vmem:[%s197 + $0xab] sm:$0x1]
      %v937 = vld [vmem:[%s197 + $0xb3] sm:$0xff]
      %v938 = vld [vmem:[%s197 + $0xbb] sm:$0x1]
      %v939 = vld [vmem:[%s197 + $0xc3] sm:$0xff]
      %v940 = vld [vmem:[%s197 + $0xcb] sm:$0x1]
      %v941 = vld [vmem:[%s189 + $0x3] sm:$0x1]
      %v942 = vperm.slane %v941, 0
      %v943 = vmul.f32 %v915, %v942
      %v944 = vmul.f32 %v916, %v942
      %v945 = vmul.f32 %v917, %v942
      %v946 = vmul.f32 %v918, %v942
      %v947 = vmul.f32 %v919, %v942
      %v948 = vmul.f32 %v920, %v942
      %v949 = vmul.f32 %v921, %v942
      %v950 = vmul.f32 %v922, %v942
      %v951 = vmul.f32 %v923, %v942
      %v952 = vmul.f32 %v924, %v942
      %v953 = vmul.f32 %v925, %v942
      %v954 = vmul.f32 %v926, %v942
      %v955 = vadd.f32 %v903, %v943
      %v956 = vadd.f32 %v904, %v944
      %v957 = vadd.f32 %v905, %v945
      %v958 = vadd.f32 %v906, %v946
      %v959 = vadd.f32 %v907, %v947
      %v960 = vadd.f32 %v908, %v948
      %v961 = vadd.f32 %v909, %v949
      %v962 = vadd.f32 %v910, %v950
      %v963 = vadd.f32 %v911, %v951
      %v964 = vadd.f32 %v912, %v952
      %v965 = vadd.f32 %v913, %v953
      %v966 = vadd.f32 %v914, %v954
      %v967 = vld [vmem:[%s258 + $0x3] sm:$0x1]
      %v968 = vperm.slane %v967, 0
      %v969 = vmul.f32 %v917, %v968
      %v970 = vmul.f32 %v918, %v968
      %v971 = vmul.f32 %v919, %v968
      %v972 = vmul.f32 %v920, %v968
      %v973 = vmul.f32 %v921, %v968
      %v974 = vmul.f32 %v922, %v968
      %v975 = vmul.f32 %v923, %v968
      %v976 = vmul.f32 %v924, %v968
      %v977 = vmul.f32 %v925, %v968
      %v978 = vmul.f32 %v926, %v968
      %v979 = vmul.f32 %v927, %v968
      %v980 = vmul.f32 %v928, %v968
      %v981 = vadd.f32 %v955, %v969
      %v982 = vadd.f32 %v956, %v970
      %v983 = vadd.f32 %v957, %v971
      %v984 = vadd.f32 %v958, %v972
      %v985 = vadd.f32 %v959, %v973
      %v986 = vadd.f32 %v960, %v974
      %v987 = vadd.f32 %v961, %v975
      %v988 = vadd.f32 %v962, %v976
      %v989 = vadd.f32 %v963, %v977
      %v990 = vadd.f32 %v964, %v978
      %v991 = vadd.f32 %v965, %v979
      %v992 = vadd.f32 %v966, %v980
      %v993 = vld [vmem:[%s285 + $0x3] sm:$0x1]
      %v994 = vperm.slane %v993, 0
      %v995 = vmul.f32 %v919, %v994
      %v996 = vmul.f32 %v920, %v994
      %v997 = vmul.f32 %v921, %v994
      %v998 = vmul.f32 %v922, %v994
      %v999 = vmul.f32 %v923, %v994
      %v1000 = vmul.f32 %v924, %v994
      %v1001 = vmul.f32 %v925, %v994
      %v1002 = vmul.f32 %v926, %v994
      %v1003 = vmul.f32 %v927, %v994
      %v1004 = vmul.f32 %v928, %v994
      %v1005 = vmul.f32 %v929, %v994
      %v1006 = vmul.f32 %v930, %v994
      %v1007 = vadd.f32 %v981, %v995
      %v1008 = vadd.f32 %v982, %v996
      %v1009 = vadd.f32 %v983, %v997
      %v1010 = vadd.f32 %v984, %v998
      %v1011 = vadd.f32 %v985, %v999
      %v1012 = vadd.f32 %v986, %v1000
      %v1013 = vadd.f32 %v987, %v1001
      %v1014 = vadd.f32 %v988, %v1002
      %v1015 = vadd.f32 %v989, %v1003
      %v1016 = vadd.f32 %v990, %v1004
      %v1017 = vadd.f32 %v991, %v1005
      %v1018 = vadd.f32 %v992, %v1006
      %v1019 = vld [vmem:[%s312 + $0x3] sm:$0x1]
      %v1020 = vperm.slane %v1019, 0
      %v1021 = vmul.f32 %v921, %v1020
      %v1022 = vmul.f32 %v922, %v1020
      %v1023 = vmul.f32 %v923, %v1020
      %v1024 = vmul.f32 %v924, %v1020
      %v1025 = vmul.f32 %v925, %v1020
      %v1026 = vmul.f32 %v926, %v1020
      %v1027 = vmul.f32 %v927, %v1020
      %v1028 = vmul.f32 %v928, %v1020
      %v1029 = vmul.f32 %v929, %v1020
      %v1030 = vmul.f32 %v930, %v1020
      %v1031 = vmul.f32 %v931, %v1020
      %v1032 = vmul.f32 %v932, %v1020
      %v1033 = vadd.f32 %v1007, %v1021
      %v1034 = vadd.f32 %v1008, %v1022
      %v1035 = vadd.f32 %v1009, %v1023
      %v1036 = vadd.f32 %v1010, %v1024
      %v1037 = vadd.f32 %v1011, %v1025
      %v1038 = vadd.f32 %v1012, %v1026
      %v1039 = vadd.f32 %v1013, %v1027
      %v1040 = vadd.f32 %v1014, %v1028
      %v1041 = vadd.f32 %v1015, %v1029
      %v1042 = vadd.f32 %v1016, %v1030
      %v1043 = vadd.f32 %v1017, %v1031
      %v1044 = vadd.f32 %v1018, %v1032
      %v1045 = vld [vmem:[%s339 + $0x3] sm:$0x1]
      %v1046 = vperm.slane %v1045, 0
      %v1047 = vmul.f32 %v923, %v1046
      %v1048 = vmul.f32 %v924, %v1046
      %v1049 = vmul.f32 %v925, %v1046
      %v1050 = vmul.f32 %v926, %v1046
      %v1051 = vmul.f32 %v927, %v1046
      %v1052 = vmul.f32 %v928, %v1046
      %v1053 = vmul.f32 %v929, %v1046
      %v1054 = vmul.f32 %v930, %v1046
      %v1055 = vmul.f32 %v931, %v1046
      %v1056 = vmul.f32 %v932, %v1046
      %v1057 = vmul.f32 %v933, %v1046
      %v1058 = vmul.f32 %v934, %v1046
      %v1059 = vadd.f32 %v1033, %v1047
      %v1060 = vadd.f32 %v1034, %v1048
      %v1061 = vadd.f32 %v1035, %v1049
      %v1062 = vadd.f32 %v1036, %v1050
      %v1063 = vadd.f32 %v1037, %v1051
      %v1064 = vadd.f32 %v1038, %v1052
      %v1065 = vadd.f32 %v1039, %v1053
      %v1066 = vadd.f32 %v1040, %v1054
      %v1067 = vadd.f32 %v1041, %v1055
      %v1068 = vadd.f32 %v1042, %v1056
      %v1069 = vadd.f32 %v1043, %v1057
      %v1070 = vadd.f32 %v1044, %v1058
      %v1071 = vld [vmem:[%s366 + $0x3] sm:$0x1]
      %v1072 = vperm.slane %v1071, 0
      %v1073 = vmul.f32 %v925, %v1072
      %v1074 = vmul.f32 %v926, %v1072
      %v1075 = vmul.f32 %v927, %v1072
      %v1076 = vmul.f32 %v928, %v1072
      %v1077 = vmul.f32 %v929, %v1072
      %v1078 = vmul.f32 %v930, %v1072
      %v1079 = vmul.f32 %v931, %v1072
      %v1080 = vmul.f32 %v932, %v1072
      %v1081 = vmul.f32 %v933, %v1072
      %v1082 = vmul.f32 %v934, %v1072
      %v1083 = vmul.f32 %v935, %v1072
      %v1084 = vmul.f32 %v936, %v1072
      %v1085 = vadd.f32 %v1059, %v1073
      %v1086 = vadd.f32 %v1060, %v1074
      %v1087 = vadd.f32 %v1061, %v1075
      %v1088 = vadd.f32 %v1062, %v1076
      %v1089 = vadd.f32 %v1063, %v1077
      %v1090 = vadd.f32 %v1064, %v1078
      %v1091 = vadd.f32 %v1065, %v1079
      %v1092 = vadd.f32 %v1066, %v1080
      %v1093 = vadd.f32 %v1067, %v1081
      %v1094 = vadd.f32 %v1068, %v1082
      %v1095 = vadd.f32 %v1069, %v1083
      %v1096 = vadd.f32 %v1070, %v1084
      %v1097 = vld [vmem:[%s393 + $0x3] sm:$0x1]
      %v1098 = vperm.slane %v1097, 0
      %v1099 = vmul.f32 %v927, %v1098
      %v1100 = vmul.f32 %v928, %v1098
      %v1101 = vmul.f32 %v929, %v1098
      %v1102 = vmul.f32 %v930, %v1098
      %v1103 = vmul.f32 %v931, %v1098
      %v1104 = vmul.f32 %v932, %v1098
      %v1105 = vmul.f32 %v933, %v1098
      %v1106 = vmul.f32 %v934, %v1098
      %v1107 = vmul.f32 %v935, %v1098
      %v1108 = vmul.f32 %v936, %v1098
      %v1109 = vmul.f32 %v937, %v1098
      %v1110 = vmul.f32 %v938, %v1098
      %v1111 = vadd.f32 %v1085, %v1099
      %v1112 = vadd.f32 %v1086, %v1100
      %v1113 = vadd.f32 %v1087, %v1101
      %v1114 = vadd.f32 %v1088, %v1102
      %v1115 = vadd.f32 %v1089, %v1103
      %v1116 = vadd.f32 %v1090, %v1104
      %v1117 = vadd.f32 %v1091, %v1105
      %v1118 = vadd.f32 %v1092, %v1106
      %v1119 = vadd.f32 %v1093, %v1107
      %v1120 = vadd.f32 %v1094, %v1108
      %v1121 = vadd.f32 %v1095, %v1109
      %v1122 = vadd.f32 %v1096, %v1110
      %v1123 = vld [vmem:[%s420 + $0x3] sm:$0x1]
      %v1124 = vperm.slane %v1123, 0
      %v1125 = vmul.f32 %v929, %v1124
      %v1126 = vmul.f32 %v930, %v1124
      %v1127 = vmul.f32 %v931, %v1124
      %v1128 = vmul.f32 %v932, %v1124
      %v1129 = vmul.f32 %v933, %v1124
      %v1130 = vmul.f32 %v934, %v1124
      %v1131 = vmul.f32 %v935, %v1124
      %v1132 = vmul.f32 %v936, %v1124
      %v1133 = vmul.f32 %v937, %v1124
      %v1134 = vmul.f32 %v938, %v1124
      %v1135 = vmul.f32 %v939, %v1124
      %v1136 = vmul.f32 %v940, %v1124
      %v1137 = vadd.f32 %v1111, %v1125
      %v1138 = vadd.f32 %v1112, %v1126
      %v1139 = vadd.f32 %v1113, %v1127
      %v1140 = vadd.f32 %v1114, %v1128
      %v1141 = vadd.f32 %v1115, %v1129
      %v1142 = vadd.f32 %v1116, %v1130
      %v1143 = vadd.f32 %v1117, %v1131
      %v1144 = vadd.f32 %v1118, %v1132
      %v1145 = vadd.f32 %v1119, %v1133
      %v1146 = vadd.f32 %v1120, %v1134
      %v1147 = vadd.f32 %v1121, %v1135
      %v1148 = vadd.f32 %v1122, %v1136
      %v1149 = vld [vmem:[%s197 + $0x4] sm:$0xff]
      %v1150 = vld [vmem:[%s197 + $0xc] sm:$0x1]
      %v1151 = vld [vmem:[%s197 + $0x14] sm:$0xff]
      %v1152 = vld [vmem:[%s197 + $0x1c] sm:$0x1]
      %v1153 = vld [vmem:[%s197 + $0x24] sm:$0xff]
      %v1154 = vld [vmem:[%s197 + $0x2c] sm:$0x1]
      %v1155 = vld [vmem:[%s197 + $0x34] sm:$0xff]
      %v1156 = vld [vmem:[%s197 + $0x3c] sm:$0x1]
      %v1157 = vld [vmem:[%s197 + $0x44] sm:$0xff]
      %v1158 = vld [vmem:[%s197 + $0x4c] sm:$0x1]
      %v1159 = vld [vmem:[%s197 + $0x54] sm:$0xff]
      %v1160 = vld [vmem:[%s197 + $0x5c] sm:$0x1]
      %v1161 = vld [vmem:[%s197 + $0x64] sm:$0xff]
      %v1162 = vld [vmem:[%s197 + $0x6c] sm:$0x1]
      %v1163 = vld [vmem:[%s197 + $0x74] sm:$0xff]
      %v1164 = vld [vmem:[%s197 + $0x7c] sm:$0x1]
      %v1165 = vld [vmem:[%s197 + $0x84] sm:$0xff]
      %v1166 = vld [vmem:[%s197 + $0x8c] sm:$0x1]
      %v1167 = vld [vmem:[%s197 + $0x94] sm:$0xff]
      %v1168 = vld [vmem:[%s197 + $0x9c] sm:$0x1]
      %v1169 = vld [vmem:[%s197 + $0xa4] sm:$0xff]
      %v1170 = vld [vmem:[%s197 + $0xac] sm:$0x1]
      %v1171 = vld [vmem:[%s197 + $0xb4] sm:$0xff]
      %v1172 = vld [vmem:[%s197 + $0xbc] sm:$0x1]
      %v1173 = vld [vmem:[%s197 + $0xc4] sm:$0xff]
      %v1174 = vld [vmem:[%s197 + $0xcc] sm:$0x1]
      %v1175 = vld [vmem:[%s189 + $0x4] sm:$0x1]
      %v1176 = vperm.slane %v1175, 0
      %v1177 = vmul.f32 %v1149, %v1176
      %v1178 = vmul.f32 %v1150, %v1176
      %v1179 = vmul.f32 %v1151, %v1176
      %v1180 = vmul.f32 %v1152, %v1176
      %v1181 = vmul.f32 %v1153, %v1176
      %v1182 = vmul.f32 %v1154, %v1176
      %v1183 = vmul.f32 %v1155, %v1176
      %v1184 = vmul.f32 %v1156, %v1176
      %v1185 = vmul.f32 %v1157, %v1176
      %v1186 = vmul.f32 %v1158, %v1176
      %v1187 = vmul.f32 %v1159, %v1176
      %v1188 = vmul.f32 %v1160, %v1176
      %v1189 = vadd.f32 %v1137, %v1177
      %v1190 = vadd.f32 %v1138, %v1178
      %v1191 = vadd.f32 %v1139, %v1179
      %v1192 = vadd.f32 %v1140, %v1180
      %v1193 = vadd.f32 %v1141, %v1181
      %v1194 = vadd.f32 %v1142, %v1182
      %v1195 = vadd.f32 %v1143, %v1183
      %v1196 = vadd.f32 %v1144, %v1184
      %v1197 = vadd.f32 %v1145, %v1185
      %v1198 = vadd.f32 %v1146, %v1186
      %v1199 = vadd.f32 %v1147, %v1187
      %v1200 = vadd.f32 %v1148, %v1188
      %v1201 = vld [vmem:[%s258 + $0x4] sm:$0x1]
      %v1202 = vperm.slane %v1201, 0
      %v1203 = vmul.f32 %v1151, %v1202
      %v1204 = vmul.f32 %v1152, %v1202
      %v1205 = vmul.f32 %v1153, %v1202
      %v1206 = vmul.f32 %v1154, %v1202
      %v1207 = vmul.f32 %v1155, %v1202
      %v1208 = vmul.f32 %v1156, %v1202
      %v1209 = vmul.f32 %v1157, %v1202
      %v1210 = vmul.f32 %v1158, %v1202
      %v1211 = vmul.f32 %v1159, %v1202
      %v1212 = vmul.f32 %v1160, %v1202
      %v1213 = vmul.f32 %v1161, %v1202
      %v1214 = vmul.f32 %v1162, %v1202
      %v1215 = vadd.f32 %v1189, %v1203
      %v1216 = vadd.f32 %v1190, %v1204
      %v1217 = vadd.f32 %v1191, %v1205
      %v1218 = vadd.f32 %v1192, %v1206
      %v1219 = vadd.f32 %v1193, %v1207
      %v1220 = vadd.f32 %v1194, %v1208
      %v1221 = vadd.f32 %v1195, %v1209
      %v1222 = vadd.f32 %v1196, %v1210
      %v1223 = vadd.f32 %v1197, %v1211
      %v1224 = vadd.f32 %v1198, %v1212
      %v1225 = vadd.f32 %v1199, %v1213
      %v1226 = vadd.f32 %v1200, %v1214
      %v1227 = vld [vmem:[%s285 + $0x4] sm:$0x1]
      %v1228 = vperm.slane %v1227, 0
      %v1229 = vmul.f32 %v1153, %v1228
      %v1230 = vmul.f32 %v1154, %v1228
      %v1231 = vmul.f32 %v1155, %v1228
      %v1232 = vmul.f32 %v1156, %v1228
      %v1233 = vmul.f32 %v1157, %v1228
      %v1234 = vmul.f32 %v1158, %v1228
      %v1235 = vmul.f32 %v1159, %v1228
      %v1236 = vmul.f32 %v1160, %v1228
      %v1237 = vmul.f32 %v1161, %v1228
      %v1238 = vmul.f32 %v1162, %v1228
      %v1239 = vmul.f32 %v1163, %v1228
      %v1240 = vmul.f32 %v1164, %v1228
      %v1241 = vadd.f32 %v1215, %v1229
      %v1242 = vadd.f32 %v1216, %v1230
      %v1243 = vadd.f32 %v1217, %v1231
      %v1244 = vadd.f32 %v1218, %v1232
      %v1245 = vadd.f32 %v1219, %v1233
      %v1246 = vadd.f32 %v1220, %v1234
      %v1247 = vadd.f32 %v1221, %v1235
      %v1248 = vadd.f32 %v1222, %v1236
      %v1249 = vadd.f32 %v1223, %v1237
      %v1250 = vadd.f32 %v1224, %v1238
      %v1251 = vadd.f32 %v1225, %v1239
      %v1252 = vadd.f32 %v1226, %v1240
      %v1253 = vld [vmem:[%s312 + $0x4] sm:$0x1]
      %v1254 = vperm.slane %v1253, 0
      %v1255 = vmul.f32 %v1155, %v1254
      %v1256 = vmul.f32 %v1156, %v1254
      %v1257 = vmul.f32 %v1157, %v1254
      %v1258 = vmul.f32 %v1158, %v1254
      %v1259 = vmul.f32 %v1159, %v1254
      %v1260 = vmul.f32 %v1160, %v1254
      %v1261 = vmul.f32 %v1161, %v1254
      %v1262 = vmul.f32 %v1162, %v1254
      %v1263 = vmul.f32 %v1163, %v1254
      %v1264 = vmul.f32 %v1164, %v1254
      %v1265 = vmul.f32 %v1165, %v1254
      %v1266 = vmul.f32 %v1166, %v1254
      %v1267 = vadd.f32 %v1241, %v1255
      %v1268 = vadd.f32 %v1242, %v1256
      %v1269 = vadd.f32 %v1243, %v1257
      %v1270 = vadd.f32 %v1244, %v1258
      %v1271 = vadd.f32 %v1245, %v1259
      %v1272 = vadd.f32 %v1246, %v1260
      %v1273 = vadd.f32 %v1247, %v1261
      %v1274 = vadd.f32 %v1248, %v1262
      %v1275 = vadd.f32 %v1249, %v1263
      %v1276 = vadd.f32 %v1250, %v1264
      %v1277 = vadd.f32 %v1251, %v1265
      %v1278 = vadd.f32 %v1252, %v1266
      %v1279 = vld [vmem:[%s339 + $0x4] sm:$0x1]
      %v1280 = vperm.slane %v1279, 0
      %v1281 = vmul.f32 %v1157, %v1280
      %v1282 = vmul.f32 %v1158, %v1280
      %v1283 = vmul.f32 %v1159, %v1280
      %v1284 = vmul.f32 %v1160, %v1280
      %v1285 = vmul.f32 %v1161, %v1280
      %v1286 = vmul.f32 %v1162, %v1280
      %v1287 = vmul.f32 %v1163, %v1280
      %v1288 = vmul.f32 %v1164, %v1280
      %v1289 = vmul.f32 %v1165, %v1280
      %v1290 = vmul.f32 %v1166, %v1280
      %v1291 = vmul.f32 %v1167, %v1280
      %v1292 = vmul.f32 %v1168, %v1280
      %v1293 = vadd.f32 %v1267, %v1281
      %v1294 = vadd.f32 %v1268, %v1282
      %v1295 = vadd.f32 %v1269, %v1283
      %v1296 = vadd.f32 %v1270, %v1284
      %v1297 = vadd.f32 %v1271, %v1285
      %v1298 = vadd.f32 %v1272, %v1286
      %v1299 = vadd.f32 %v1273, %v1287
      %v1300 = vadd.f32 %v1274, %v1288
      %v1301 = vadd.f32 %v1275, %v1289
      %v1302 = vadd.f32 %v1276, %v1290
      %v1303 = vadd.f32 %v1277, %v1291
      %v1304 = vadd.f32 %v1278, %v1292
      %v1305 = vld [vmem:[%s366 + $0x4] sm:$0x1]
      %v1306 = vperm.slane %v1305, 0
      %v1307 = vmul.f32 %v1159, %v1306
      %v1308 = vmul.f32 %v1160, %v1306
      %v1309 = vmul.f32 %v1161, %v1306
      %v1310 = vmul.f32 %v1162, %v1306
      %v1311 = vmul.f32 %v1163, %v1306
      %v1312 = vmul.f32 %v1164, %v1306
      %v1313 = vmul.f32 %v1165, %v1306
      %v1314 = vmul.f32 %v1166, %v1306
      %v1315 = vmul.f32 %v1167, %v1306
      %v1316 = vmul.f32 %v1168, %v1306
      %v1317 = vmul.f32 %v1169, %v1306
      %v1318 = vmul.f32 %v1170, %v1306
      %v1319 = vadd.f32 %v1293, %v1307
      %v1320 = vadd.f32 %v1294, %v1308
      %v1321 = vadd.f32 %v1295, %v1309
      %v1322 = vadd.f32 %v1296, %v1310
      %v1323 = vadd.f32 %v1297, %v1311
      %v1324 = vadd.f32 %v1298, %v1312
      %v1325 = vadd.f32 %v1299, %v1313
      %v1326 = vadd.f32 %v1300, %v1314
      %v1327 = vadd.f32 %v1301, %v1315
      %v1328 = vadd.f32 %v1302, %v1316
      %v1329 = vadd.f32 %v1303, %v1317
      %v1330 = vadd.f32 %v1304, %v1318
      %v1331 = vld [vmem:[%s393 + $0x4] sm:$0x1]
      %v1332 = vperm.slane %v1331, 0
      %v1333 = vmul.f32 %v1161, %v1332
      %v1334 = vmul.f32 %v1162, %v1332
      %v1335 = vmul.f32 %v1163, %v1332
      %v1336 = vmul.f32 %v1164, %v1332
      %v1337 = vmul.f32 %v1165, %v1332
      %v1338 = vmul.f32 %v1166, %v1332
      %v1339 = vmul.f32 %v1167, %v1332
      %v1340 = vmul.f32 %v1168, %v1332
      %v1341 = vmul.f32 %v1169, %v1332
      %v1342 = vmul.f32 %v1170, %v1332
      %v1343 = vmul.f32 %v1171, %v1332
      %v1344 = vmul.f32 %v1172, %v1332
      %v1345 = vadd.f32 %v1319, %v1333
      %v1346 = vadd.f32 %v1320, %v1334
      %v1347 = vadd.f32 %v1321, %v1335
      %v1348 = vadd.f32 %v1322, %v1336
      %v1349 = vadd.f32 %v1323, %v1337
      %v1350 = vadd.f32 %v1324, %v1338
      %v1351 = vadd.f32 %v1325, %v1339
      %v1352 = vadd.f32 %v1326, %v1340
      %v1353 = vadd.f32 %v1327, %v1341
      %v1354 = vadd.f32 %v1328, %v1342
      %v1355 = vadd.f32 %v1329, %v1343
      %v1356 = vadd.f32 %v1330, %v1344
      %v1357 = vld [vmem:[%s420 + $0x4] sm:$0x1]
      %v1358 = vperm.slane %v1357, 0
      %v1359 = vmul.f32 %v1163, %v1358
      %v1360 = vmul.f32 %v1164, %v1358
      %v1361 = vmul.f32 %v1165, %v1358
      %v1362 = vmul.f32 %v1166, %v1358
      %v1363 = vmul.f32 %v1167, %v1358
      %v1364 = vmul.f32 %v1168, %v1358
      %v1365 = vmul.f32 %v1169, %v1358
      %v1366 = vmul.f32 %v1170, %v1358
      %v1367 = vmul.f32 %v1171, %v1358
      %v1368 = vmul.f32 %v1172, %v1358
      %v1369 = vmul.f32 %v1173, %v1358
      %v1370 = vmul.f32 %v1174, %v1358
      %v1371 = vadd.f32 %v1345, %v1359
      %v1372 = vadd.f32 %v1346, %v1360
      %v1373 = vadd.f32 %v1347, %v1361
      %v1374 = vadd.f32 %v1348, %v1362
      %v1375 = vadd.f32 %v1349, %v1363
      %v1376 = vadd.f32 %v1350, %v1364
      %v1377 = vadd.f32 %v1351, %v1365
      %v1378 = vadd.f32 %v1352, %v1366
      %v1379 = vadd.f32 %v1353, %v1367
      %v1380 = vadd.f32 %v1354, %v1368
      %v1381 = vadd.f32 %v1355, %v1369
      %v1382 = vadd.f32 %v1356, %v1370
      %v1383 = vld [vmem:[%s197 + $0x5] sm:$0xff]
      %v1384 = vld [vmem:[%s197 + $0xd] sm:$0x1]
      %v1385 = vld [vmem:[%s197 + $0x15] sm:$0xff]
      %v1386 = vld [vmem:[%s197 + $0x1d] sm:$0x1]
      %v1387 = vld [vmem:[%s197 + $0x25] sm:$0xff]
      %v1388 = vld [vmem:[%s197 + $0x2d] sm:$0x1]
      %v1389 = vld [vmem:[%s197 + $0x35] sm:$0xff]
      %v1390 = vld [vmem:[%s197 + $0x3d] sm:$0x1]
      %v1391 = vld [vmem:[%s197 + $0x45] sm:$0xff]
      %v1392 = vld [vmem:[%s197 + $0x4d] sm:$0x1]
      %v1393 = vld [vmem:[%s197 + $0x55] sm:$0xff]
      %v1394 = vld [vmem:[%s197 + $0x5d] sm:$0x1]
      %v1395 = vld [vmem:[%s197 + $0x65] sm:$0xff]
      %v1396 = vld [vmem:[%s197 + $0x6d] sm:$0x1]
      %v1397 = vld [vmem:[%s197 + $0x75] sm:$0xff]
      %v1398 = vld [vmem:[%s197 + $0x7d] sm:$0x1]
      %v1399 = vld [vmem:[%s197 + $0x85] sm:$0xff]
      %v1400 = vld [vmem:[%s197 + $0x8d] sm:$0x1]
      %v1401 = vld [vmem:[%s197 + $0x95] sm:$0xff]
      %v1402 = vld [vmem:[%s197 + $0x9d] sm:$0x1]
      %v1403 = vld [vmem:[%s197 + $0xa5] sm:$0xff]
      %v1404 = vld [vmem:[%s197 + $0xad] sm:$0x1]
      %v1405 = vld [vmem:[%s197 + $0xb5] sm:$0xff]
      %v1406 = vld [vmem:[%s197 + $0xbd] sm:$0x1]
      %v1407 = vld [vmem:[%s197 + $0xc5] sm:$0xff]
      %v1408 = vld [vmem:[%s197 + $0xcd] sm:$0x1]
      %v1409 = vld [vmem:[%s189 + $0x5] sm:$0x1]
      %v1410 = vperm.slane %v1409, 0
      %v1411 = vmul.f32 %v1383, %v1410
      %v1412 = vmul.f32 %v1384, %v1410
      %v1413 = vmul.f32 %v1385, %v1410
      %v1414 = vmul.f32 %v1386, %v1410
      %v1415 = vmul.f32 %v1387, %v1410
      %v1416 = vmul.f32 %v1388, %v1410
      %v1417 = vmul.f32 %v1389, %v1410
      %v1418 = vmul.f32 %v1390, %v1410
      %v1419 = vmul.f32 %v1391, %v1410
      %v1420 = vmul.f32 %v1392, %v1410
      %v1421 = vmul.f32 %v1393, %v1410
      %v1422 = vmul.f32 %v1394, %v1410
      %v1423 = vadd.f32 %v1371, %v1411
      %v1424 = vadd.f32 %v1372, %v1412
      %v1425 = vadd.f32 %v1373, %v1413
      %v1426 = vadd.f32 %v1374, %v1414
      %v1427 = vadd.f32 %v1375, %v1415
      %v1428 = vadd.f32 %v1376, %v1416
      %v1429 = vadd.f32 %v1377, %v1417
      %v1430 = vadd.f32 %v1378, %v1418
      %v1431 = vadd.f32 %v1379, %v1419
      %v1432 = vadd.f32 %v1380, %v1420
      %v1433 = vadd.f32 %v1381, %v1421
      %v1434 = vadd.f32 %v1382, %v1422
      %v1435 = vld [vmem:[%s258 + $0x5] sm:$0x1]
      %v1436 = vperm.slane %v1435, 0
      %v1437 = vmul.f32 %v1385, %v1436
      %v1438 = vmul.f32 %v1386, %v1436
      %v1439 = vmul.f32 %v1387, %v1436
      %v1440 = vmul.f32 %v1388, %v1436
      %v1441 = vmul.f32 %v1389, %v1436
      %v1442 = vmul.f32 %v1390, %v1436
      %v1443 = vmul.f32 %v1391, %v1436
      %v1444 = vmul.f32 %v1392, %v1436
      %v1445 = vmul.f32 %v1393, %v1436
      %v1446 = vmul.f32 %v1394, %v1436
      %v1447 = vmul.f32 %v1395, %v1436
      %v1448 = vmul.f32 %v1396, %v1436
      %v1449 = vadd.f32 %v1423, %v1437
      %v1450 = vadd.f32 %v1424, %v1438
      %v1451 = vadd.f32 %v1425, %v1439
      %v1452 = vadd.f32 %v1426, %v1440
      %v1453 = vadd.f32 %v1427, %v1441
      %v1454 = vadd.f32 %v1428, %v1442
      %v1455 = vadd.f32 %v1429, %v1443
      %v1456 = vadd.f32 %v1430, %v1444
      %v1457 = vadd.f32 %v1431, %v1445
      %v1458 = vadd.f32 %v1432, %v1446
      %v1459 = vadd.f32 %v1433, %v1447
      %v1460 = vadd.f32 %v1434, %v1448
      %v1461 = vld [vmem:[%s285 + $0x5] sm:$0x1]
      %v1462 = vperm.slane %v1461, 0
      %v1463 = vmul.f32 %v1387, %v1462
      %v1464 = vmul.f32 %v1388, %v1462
      %v1465 = vmul.f32 %v1389, %v1462
      %v1466 = vmul.f32 %v1390, %v1462
      %v1467 = vmul.f32 %v1391, %v1462
      %v1468 = vmul.f32 %v1392, %v1462
      %v1469 = vmul.f32 %v1393, %v1462
      %v1470 = vmul.f32 %v1394, %v1462
      %v1471 = vmul.f32 %v1395, %v1462
      %v1472 = vmul.f32 %v1396, %v1462
      %v1473 = vmul.f32 %v1397, %v1462
      %v1474 = vmul.f32 %v1398, %v1462
      %v1475 = vadd.f32 %v1449, %v1463
      %v1476 = vadd.f32 %v1450, %v1464
      %v1477 = vadd.f32 %v1451, %v1465
      %v1478 = vadd.f32 %v1452, %v1466
      %v1479 = vadd.f32 %v1453, %v1467
      %v1480 = vadd.f32 %v1454, %v1468
      %v1481 = vadd.f32 %v1455, %v1469
      %v1482 = vadd.f32 %v1456, %v1470
      %v1483 = vadd.f32 %v1457, %v1471
      %v1484 = vadd.f32 %v1458, %v1472
      %v1485 = vadd.f32 %v1459, %v1473
      %v1486 = vadd.f32 %v1460, %v1474
      %v1487 = vld [vmem:[%s312 + $0x5] sm:$0x1]
      %v1488 = vperm.slane %v1487, 0
      %v1489 = vmul.f32 %v1389, %v1488
      %v1490 = vmul.f32 %v1390, %v1488
      %v1491 = vmul.f32 %v1391, %v1488
      %v1492 = vmul.f32 %v1392, %v1488
      %v1493 = vmul.f32 %v1393, %v1488
      %v1494 = vmul.f32 %v1394, %v1488
      %v1495 = vmul.f32 %v1395, %v1488
      %v1496 = vmul.f32 %v1396, %v1488
      %v1497 = vmul.f32 %v1397, %v1488
      %v1498 = vmul.f32 %v1398, %v1488
      %v1499 = vmul.f32 %v1399, %v1488
      %v1500 = vmul.f32 %v1400, %v1488
      %v1501 = vadd.f32 %v1475, %v1489
      %v1502 = vadd.f32 %v1476, %v1490
      %v1503 = vadd.f32 %v1477, %v1491
      %v1504 = vadd.f32 %v1478, %v1492
      %v1505 = vadd.f32 %v1479, %v1493
      %v1506 = vadd.f32 %v1480, %v1494
      %v1507 = vadd.f32 %v1481, %v1495
      %v1508 = vadd.f32 %v1482, %v1496
      %v1509 = vadd.f32 %v1483, %v1497
      %v1510 = vadd.f32 %v1484, %v1498
      %v1511 = vadd.f32 %v1485, %v1499
      %v1512 = vadd.f32 %v1486, %v1500
      %v1513 = vld [vmem:[%s339 + $0x5] sm:$0x1]
      %v1514 = vperm.slane %v1513, 0
      %v1515 = vmul.f32 %v1391, %v1514
      %v1516 = vmul.f32 %v1392, %v1514
      %v1517 = vmul.f32 %v1393, %v1514
      %v1518 = vmul.f32 %v1394, %v1514
      %v1519 = vmul.f32 %v1395, %v1514
      %v1520 = vmul.f32 %v1396, %v1514
      %v1521 = vmul.f32 %v1397, %v1514
      %v1522 = vmul.f32 %v1398, %v1514
      %v1523 = vmul.f32 %v1399, %v1514
      %v1524 = vmul.f32 %v1400, %v1514
      %v1525 = vmul.f32 %v1401, %v1514
      %v1526 = vmul.f32 %v1402, %v1514
      %v1527 = vadd.f32 %v1501, %v1515
      %v1528 = vadd.f32 %v1502, %v1516
      %v1529 = vadd.f32 %v1503, %v1517
      %v1530 = vadd.f32 %v1504, %v1518
      %v1531 = vadd.f32 %v1505, %v1519
      %v1532 = vadd.f32 %v1506, %v1520
      %v1533 = vadd.f32 %v1507, %v1521
      %v1534 = vadd.f32 %v1508, %v1522
      %v1535 = vadd.f32 %v1509, %v1523
      %v1536 = vadd.f32 %v1510, %v1524
      %v1537 = vadd.f32 %v1511, %v1525
      %v1538 = vadd.f32 %v1512, %v1526
      %v1539 = vld [vmem:[%s366 + $0x5] sm:$0x1]
      %v1540 = vperm.slane %v1539, 0
      %v1541 = vmul.f32 %v1393, %v1540
      %v1542 = vmul.f32 %v1394, %v1540
      %v1543 = vmul.f32 %v1395, %v1540
      %v1544 = vmul.f32 %v1396, %v1540
      %v1545 = vmul.f32 %v1397, %v1540
      %v1546 = vmul.f32 %v1398, %v1540
      %v1547 = vmul.f32 %v1399, %v1540
      %v1548 = vmul.f32 %v1400, %v1540
      %v1549 = vmul.f32 %v1401, %v1540
      %v1550 = vmul.f32 %v1402, %v1540
      %v1551 = vmul.f32 %v1403, %v1540
      %v1552 = vmul.f32 %v1404, %v1540
      %v1553 = vadd.f32 %v1527, %v1541
      %v1554 = vadd.f32 %v1528, %v1542
      %v1555 = vadd.f32 %v1529, %v1543
      %v1556 = vadd.f32 %v1530, %v1544
      %v1557 = vadd.f32 %v1531, %v1545
      %v1558 = vadd.f32 %v1532, %v1546
      %v1559 = vadd.f32 %v1533, %v1547
      %v1560 = vadd.f32 %v1534, %v1548
      %v1561 = vadd.f32 %v1535, %v1549
      %v1562 = vadd.f32 %v1536, %v1550
      %v1563 = vadd.f32 %v1537, %v1551
      %v1564 = vadd.f32 %v1538, %v1552
      %v1565 = vld [vmem:[%s393 + $0x5] sm:$0x1]
      %v1566 = vperm.slane %v1565, 0
      %v1567 = vmul.f32 %v1395, %v1566
      %v1568 = vmul.f32 %v1396, %v1566
      %v1569 = vmul.f32 %v1397, %v1566
      %v1570 = vmul.f32 %v1398, %v1566
      %v1571 = vmul.f32 %v1399, %v1566
      %v1572 = vmul.f32 %v1400, %v1566
      %v1573 = vmul.f32 %v1401, %v1566
      %v1574 = vmul.f32 %v1402, %v1566
      %v1575 = vmul.f32 %v1403, %v1566
      %v1576 = vmul.f32 %v1404, %v1566
      %v1577 = vmul.f32 %v1405, %v1566
      %v1578 = vmul.f32 %v1406, %v1566
      %v1579 = vadd.f32 %v1553, %v1567
      %v1580 = vadd.f32 %v1554, %v1568
      %v1581 = vadd.f32 %v1555, %v1569
      %v1582 = vadd.f32 %v1556, %v1570
      %v1583 = vadd.f32 %v1557, %v1571
      %v1584 = vadd.f32 %v1558, %v1572
      %v1585 = vadd.f32 %v1559, %v1573
      %v1586 = vadd.f32 %v1560, %v1574
      %v1587 = vadd.f32 %v1561, %v1575
      %v1588 = vadd.f32 %v1562, %v1576
      %v1589 = vadd.f32 %v1563, %v1577
      %v1590 = vadd.f32 %v1564, %v1578
      %v1591 = vld [vmem:[%s420 + $0x5] sm:$0x1]
      %v1592 = vperm.slane %v1591, 0
      %v1593 = vmul.f32 %v1397, %v1592
      %v1594 = vmul.f32 %v1398, %v1592
      %v1595 = vmul.f32 %v1399, %v1592
      %v1596 = vmul.f32 %v1400, %v1592
      %v1597 = vmul.f32 %v1401, %v1592
      %v1598 = vmul.f32 %v1402, %v1592
      %v1599 = vmul.f32 %v1403, %v1592
      %v1600 = vmul.f32 %v1404, %v1592
      %v1601 = vmul.f32 %v1405, %v1592
      %v1602 = vmul.f32 %v1406, %v1592
      %v1603 = vmul.f32 %v1407, %v1592
      %v1604 = vmul.f32 %v1408, %v1592
      %v1605 = vadd.f32 %v1579, %v1593
      %v1606 = vadd.f32 %v1580, %v1594
      %v1607 = vadd.f32 %v1581, %v1595
      %v1608 = vadd.f32 %v1582, %v1596
      %v1609 = vadd.f32 %v1583, %v1597
      %v1610 = vadd.f32 %v1584, %v1598
      %v1611 = vadd.f32 %v1585, %v1599
      %v1612 = vadd.f32 %v1586, %v1600
      %v1613 = vadd.f32 %v1587, %v1601
      %v1614 = vadd.f32 %v1588, %v1602
      %v1615 = vadd.f32 %v1589, %v1603
      %v1616 = vadd.f32 %v1590, %v1604
      %v1617 = vld [vmem:[%s197 + $0x6] sm:$0xff]
      %v1618 = vld [vmem:[%s197 + $0xe] sm:$0x1]
      %v1619 = vld [vmem:[%s197 + $0x16] sm:$0xff]
      %v1620 = vld [vmem:[%s197 + $0x1e] sm:$0x1]
      %v1621 = vld [vmem:[%s197 + $0x26] sm:$0xff]
      %v1622 = vld [vmem:[%s197 + $0x2e] sm:$0x1]
      %v1623 = vld [vmem:[%s197 + $0x36] sm:$0xff]
      %v1624 = vld [vmem:[%s197 + $0x3e] sm:$0x1]
      %v1625 = vld [vmem:[%s197 + $0x46] sm:$0xff]
      %v1626 = vld [vmem:[%s197 + $0x4e] sm:$0x1]
      %v1627 = vld [vmem:[%s197 + $0x56] sm:$0xff]
      %v1628 = vld [vmem:[%s197 + $0x5e] sm:$0x1]
      %v1629 = vld [vmem:[%s197 + $0x66] sm:$0xff]
      %v1630 = vld [vmem:[%s197 + $0x6e] sm:$0x1]
      %v1631 = vld [vmem:[%s197 + $0x76] sm:$0xff]
      %v1632 = vld [vmem:[%s197 + $0x7e] sm:$0x1]
      %v1633 = vld [vmem:[%s197 + $0x86] sm:$0xff]
      %v1634 = vld [vmem:[%s197 + $0x8e] sm:$0x1]
      %v1635 = vld [vmem:[%s197 + $0x96] sm:$0xff]
      %v1636 = vld [vmem:[%s197 + $0x9e] sm:$0x1]
      %v1637 = vld [vmem:[%s197 + $0xa6] sm:$0xff]
      %v1638 = vld [vmem:[%s197 + $0xae] sm:$0x1]
      %v1639 = vld [vmem:[%s197 + $0xb6] sm:$0xff]
      %v1640 = vld [vmem:[%s197 + $0xbe] sm:$0x1]
      %v1641 = vld [vmem:[%s197 + $0xc6] sm:$0xff]
      %v1642 = vld [vmem:[%s197 + $0xce] sm:$0x1]
      %v1643 = vld [vmem:[%s189 + $0x6] sm:$0x1]
      %v1644 = vperm.slane %v1643, 0
      %v1645 = vmul.f32 %v1617, %v1644
      %v1646 = vmul.f32 %v1618, %v1644
      %v1647 = vmul.f32 %v1619, %v1644
      %v1648 = vmul.f32 %v1620, %v1644
      %v1649 = vmul.f32 %v1621, %v1644
      %v1650 = vmul.f32 %v1622, %v1644
      %v1651 = vmul.f32 %v1623, %v1644
      %v1652 = vmul.f32 %v1624, %v1644
      %v1653 = vmul.f32 %v1625, %v1644
      %v1654 = vmul.f32 %v1626, %v1644
      %v1655 = vmul.f32 %v1627, %v1644
      %v1656 = vmul.f32 %v1628, %v1644
      %v1657 = vadd.f32 %v1605, %v1645
      %v1658 = vadd.f32 %v1606, %v1646
      %v1659 = vadd.f32 %v1607, %v1647
      %v1660 = vadd.f32 %v1608, %v1648
      %v1661 = vadd.f32 %v1609, %v1649
      %v1662 = vadd.f32 %v1610, %v1650
      %v1663 = vadd.f32 %v1611, %v1651
      %v1664 = vadd.f32 %v1612, %v1652
      %v1665 = vadd.f32 %v1613, %v1653
      %v1666 = vadd.f32 %v1614, %v1654
      %v1667 = vadd.f32 %v1615, %v1655
      %v1668 = vadd.f32 %v1616, %v1656
      %v1669 = vld [vmem:[%s258 + $0x6] sm:$0x1]
      %v1670 = vperm.slane %v1669, 0
      %v1671 = vmul.f32 %v1619, %v1670
      %v1672 = vmul.f32 %v1620, %v1670
      %v1673 = vmul.f32 %v1621, %v1670
      %v1674 = vmul.f32 %v1622, %v1670
      %v1675 = vmul.f32 %v1623, %v1670
      %v1676 = vmul.f32 %v1624, %v1670
      %v1677 = vmul.f32 %v1625, %v1670
      %v1678 = vmul.f32 %v1626, %v1670
      %v1679 = vmul.f32 %v1627, %v1670
      %v1680 = vmul.f32 %v1628, %v1670
      %v1681 = vmul.f32 %v1629, %v1670
      %v1682 = vmul.f32 %v1630, %v1670
      %v1683 = vadd.f32 %v1657, %v1671
      %v1684 = vadd.f32 %v1658, %v1672
      %v1685 = vadd.f32 %v1659, %v1673
      %v1686 = vadd.f32 %v1660, %v1674
      %v1687 = vadd.f32 %v1661, %v1675
      %v1688 = vadd.f32 %v1662, %v1676
      %v1689 = vadd.f32 %v1663, %v1677
      %v1690 = vadd.f32 %v1664, %v1678
      %v1691 = vadd.f32 %v1665, %v1679
      %v1692 = vadd.f32 %v1666, %v1680
      %v1693 = vadd.f32 %v1667, %v1681
      %v1694 = vadd.f32 %v1668, %v1682
      %v1695 = vld [vmem:[%s285 + $0x6] sm:$0x1]
      %v1696 = vperm.slane %v1695, 0
      %v1697 = vmul.f32 %v1621, %v1696
      %v1698 = vmul.f32 %v1622, %v1696
      %v1699 = vmul.f32 %v1623, %v1696
      %v1700 = vmul.f32 %v1624, %v1696
      %v1701 = vmul.f32 %v1625, %v1696
      %v1702 = vmul.f32 %v1626, %v1696
      %v1703 = vmul.f32 %v1627, %v1696
      %v1704 = vmul.f32 %v1628, %v1696
      %v1705 = vmul.f32 %v1629, %v1696
      %v1706 = vmul.f32 %v1630, %v1696
      %v1707 = vmul.f32 %v1631, %v1696
      %v1708 = vmul.f32 %v1632, %v1696
      %v1709 = vadd.f32 %v1683, %v1697
      %v1710 = vadd.f32 %v1684, %v1698
      %v1711 = vadd.f32 %v1685, %v1699
      %v1712 = vadd.f32 %v1686, %v1700
      %v1713 = vadd.f32 %v1687, %v1701
      %v1714 = vadd.f32 %v1688, %v1702
      %v1715 = vadd.f32 %v1689, %v1703
      %v1716 = vadd.f32 %v1690, %v1704
      %v1717 = vadd.f32 %v1691, %v1705
      %v1718 = vadd.f32 %v1692, %v1706
      %v1719 = vadd.f32 %v1693, %v1707
      %v1720 = vadd.f32 %v1694, %v1708
      %v1721 = vld [vmem:[%s312 + $0x6] sm:$0x1]
      %v1722 = vperm.slane %v1721, 0
      %v1723 = vmul.f32 %v1623, %v1722
      %v1724 = vmul.f32 %v1624, %v1722
      %v1725 = vmul.f32 %v1625, %v1722
      %v1726 = vmul.f32 %v1626, %v1722
      %v1727 = vmul.f32 %v1627, %v1722
      %v1728 = vmul.f32 %v1628, %v1722
      %v1729 = vmul.f32 %v1629, %v1722
      %v1730 = vmul.f32 %v1630, %v1722
      %v1731 = vmul.f32 %v1631, %v1722
      %v1732 = vmul.f32 %v1632, %v1722
      %v1733 = vmul.f32 %v1633, %v1722
      %v1734 = vmul.f32 %v1634, %v1722
      %v1735 = vadd.f32 %v1709, %v1723
      %v1736 = vadd.f32 %v1710, %v1724
      %v1737 = vadd.f32 %v1711, %v1725
      %v1738 = vadd.f32 %v1712, %v1726
      %v1739 = vadd.f32 %v1713, %v1727
      %v1740 = vadd.f32 %v1714, %v1728
      %v1741 = vadd.f32 %v1715, %v1729
      %v1742 = vadd.f32 %v1716, %v1730
      %v1743 = vadd.f32 %v1717, %v1731
      %v1744 = vadd.f32 %v1718, %v1732
      %v1745 = vadd.f32 %v1719, %v1733
      %v1746 = vadd.f32 %v1720, %v1734
      %v1747 = vld [vmem:[%s339 + $0x6] sm:$0x1]
      %v1748 = vperm.slane %v1747, 0
      %v1749 = vmul.f32 %v1625, %v1748
      %v1750 = vmul.f32 %v1626, %v1748
      %v1751 = vmul.f32 %v1627, %v1748
      %v1752 = vmul.f32 %v1628, %v1748
      %v1753 = vmul.f32 %v1629, %v1748
      %v1754 = vmul.f32 %v1630, %v1748
      %v1755 = vmul.f32 %v1631, %v1748
      %v1756 = vmul.f32 %v1632, %v1748
      %v1757 = vmul.f32 %v1633, %v1748
      %v1758 = vmul.f32 %v1634, %v1748
      %v1759 = vmul.f32 %v1635, %v1748
      %v1760 = vmul.f32 %v1636, %v1748
      %v1761 = vadd.f32 %v1735, %v1749
      %v1762 = vadd.f32 %v1736, %v1750
      %v1763 = vadd.f32 %v1737, %v1751
      %v1764 = vadd.f32 %v1738, %v1752
      %v1765 = vadd.f32 %v1739, %v1753
      %v1766 = vadd.f32 %v1740, %v1754
      %v1767 = vadd.f32 %v1741, %v1755
      %v1768 = vadd.f32 %v1742, %v1756
      %v1769 = vadd.f32 %v1743, %v1757
      %v1770 = vadd.f32 %v1744, %v1758
      %v1771 = vadd.f32 %v1745, %v1759
      %v1772 = vadd.f32 %v1746, %v1760
      %v1773 = vld [vmem:[%s366 + $0x6] sm:$0x1]
      %v1774 = vperm.slane %v1773, 0
      %v1775 = vmul.f32 %v1627, %v1774
      %v1776 = vmul.f32 %v1628, %v1774
      %v1777 = vmul.f32 %v1629, %v1774
      %v1778 = vmul.f32 %v1630, %v1774
      %v1779 = vmul.f32 %v1631, %v1774
      %v1780 = vmul.f32 %v1632, %v1774
      %v1781 = vmul.f32 %v1633, %v1774
      %v1782 = vmul.f32 %v1634, %v1774
      %v1783 = vmul.f32 %v1635, %v1774
      %v1784 = vmul.f32 %v1636, %v1774
      %v1785 = vmul.f32 %v1637, %v1774
      %v1786 = vmul.f32 %v1638, %v1774
      %v1787 = vadd.f32 %v1761, %v1775
      %v1788 = vadd.f32 %v1762, %v1776
      %v1789 = vadd.f32 %v1763, %v1777
      %v1790 = vadd.f32 %v1764, %v1778
      %v1791 = vadd.f32 %v1765, %v1779
      %v1792 = vadd.f32 %v1766, %v1780
      %v1793 = vadd.f32 %v1767, %v1781
      %v1794 = vadd.f32 %v1768, %v1782
      %v1795 = vadd.f32 %v1769, %v1783
      %v1796 = vadd.f32 %v1770, %v1784
      %v1797 = vadd.f32 %v1771, %v1785
      %v1798 = vadd.f32 %v1772, %v1786
      %v1799 = vld [vmem:[%s393 + $0x6] sm:$0x1]
      %v1800 = vperm.slane %v1799, 0
      %v1801 = vmul.f32 %v1629, %v1800
      %v1802 = vmul.f32 %v1630, %v1800
      %v1803 = vmul.f32 %v1631, %v1800
      %v1804 = vmul.f32 %v1632, %v1800
      %v1805 = vmul.f32 %v1633, %v1800
      %v1806 = vmul.f32 %v1634, %v1800
      %v1807 = vmul.f32 %v1635, %v1800
      %v1808 = vmul.f32 %v1636, %v1800
      %v1809 = vmul.f32 %v1637, %v1800
      %v1810 = vmul.f32 %v1638, %v1800
      %v1811 = vmul.f32 %v1639, %v1800
      %v1812 = vmul.f32 %v1640, %v1800
      %v1813 = vadd.f32 %v1787, %v1801
      %v1814 = vadd.f32 %v1788, %v1802
      %v1815 = vadd.f32 %v1789, %v1803
      %v1816 = vadd.f32 %v1790, %v1804
      %v1817 = vadd.f32 %v1791, %v1805
      %v1818 = vadd.f32 %v1792, %v1806
      %v1819 = vadd.f32 %v1793, %v1807
      %v1820 = vadd.f32 %v1794, %v1808
      %v1821 = vadd.f32 %v1795, %v1809
      %v1822 = vadd.f32 %v1796, %v1810
      %v1823 = vadd.f32 %v1797, %v1811
      %v1824 = vadd.f32 %v1798, %v1812
      %v1825 = vld [vmem:[%s420 + $0x6] sm:$0x1]
      %v1826 = vperm.slane %v1825, 0
      %v1827 = vmul.f32 %v1631, %v1826
      %v1828 = vmul.f32 %v1632, %v1826
      %v1829 = vmul.f32 %v1633, %v1826
      %v1830 = vmul.f32 %v1634, %v1826
      %v1831 = vmul.f32 %v1635, %v1826
      %v1832 = vmul.f32 %v1636, %v1826
      %v1833 = vmul.f32 %v1637, %v1826
      %v1834 = vmul.f32 %v1638, %v1826
      %v1835 = vmul.f32 %v1639, %v1826
      %v1836 = vmul.f32 %v1640, %v1826
      %v1837 = vmul.f32 %v1641, %v1826
      %v1838 = vmul.f32 %v1642, %v1826
      %v1839 = vadd.f32 %v1813, %v1827
      %v1840 = vadd.f32 %v1814, %v1828
      %v1841 = vadd.f32 %v1815, %v1829
      %v1842 = vadd.f32 %v1816, %v1830
      %v1843 = vadd.f32 %v1817, %v1831
      %v1844 = vadd.f32 %v1818, %v1832
      %v1845 = vadd.f32 %v1819, %v1833
      %v1846 = vadd.f32 %v1820, %v1834
      %v1847 = vadd.f32 %v1821, %v1835
      %v1848 = vadd.f32 %v1822, %v1836
      %v1849 = vadd.f32 %v1823, %v1837
      %v1850 = vadd.f32 %v1824, %v1838
      %v1851 = vld [vmem:[%s197 + $0x7] sm:$0xff]
      %v1852 = vld [vmem:[%s197 + $0xf] sm:$0x1]
      %v1853 = vld [vmem:[%s197 + $0x17] sm:$0xff]
      %v1854 = vld [vmem:[%s197 + $0x1f] sm:$0x1]
      %v1855 = vld [vmem:[%s197 + $0x27] sm:$0xff]
      %v1856 = vld [vmem:[%s197 + $0x2f] sm:$0x1]
      %v1857 = vld [vmem:[%s197 + $0x37] sm:$0xff]
      %v1858 = vld [vmem:[%s197 + $0x3f] sm:$0x1]
      %v1859 = vld [vmem:[%s197 + $0x47] sm:$0xff]
      %v1860 = vld [vmem:[%s197 + $0x4f] sm:$0x1]
      %v1861 = vld [vmem:[%s197 + $0x57] sm:$0xff]
      %v1862 = vld [vmem:[%s197 + $0x5f] sm:$0x1]
      %v1863 = vld [vmem:[%s197 + $0x67] sm:$0xff]
      %v1864 = vld [vmem:[%s197 + $0x6f] sm:$0x1]
      %v1865 = vld [vmem:[%s197 + $0x77] sm:$0xff]
      %v1866 = vld [vmem:[%s197 + $0x7f] sm:$0x1]
      %v1867 = vld [vmem:[%s197 + $0x87] sm:$0xff]
      %v1868 = vld [vmem:[%s197 + $0x8f] sm:$0x1]
      %v1869 = vld [vmem:[%s197 + $0x97] sm:$0xff]
      %v1870 = vld [vmem:[%s197 + $0x9f] sm:$0x1]
      %v1871 = vld [vmem:[%s197 + $0xa7] sm:$0xff]
      %v1872 = vld [vmem:[%s197 + $0xaf] sm:$0x1]
      %v1873 = vld [vmem:[%s197 + $0xb7] sm:$0xff]
      %v1874 = vld [vmem:[%s197 + $0xbf] sm:$0x1]
      %v1875 = vld [vmem:[%s197 + $0xc7] sm:$0xff]
      %v1876 = vld [vmem:[%s197 + $0xcf] sm:$0x1]
      %v1877 = vld [vmem:[%s189 + $0x7] sm:$0x1]
      %v1878 = vperm.slane %v1877, 0
      %v1879 = vmul.f32 %v1851, %v1878
      %v1880 = vmul.f32 %v1852, %v1878
      %v1881 = vmul.f32 %v1853, %v1878
      %v1882 = vmul.f32 %v1854, %v1878
      %v1883 = vmul.f32 %v1855, %v1878
      %v1884 = vmul.f32 %v1856, %v1878
      %v1885 = vmul.f32 %v1857, %v1878
      %v1886 = vmul.f32 %v1858, %v1878
      %v1887 = vmul.f32 %v1859, %v1878
      %v1888 = vmul.f32 %v1860, %v1878
      %v1889 = vmul.f32 %v1861, %v1878
      %v1890 = vmul.f32 %v1862, %v1878
      %v1891 = vadd.f32 %v1839, %v1879
      %v1892 = vadd.f32 %v1840, %v1880
      %v1893 = vadd.f32 %v1841, %v1881
      %v1894 = vadd.f32 %v1842, %v1882
      %v1895 = vadd.f32 %v1843, %v1883
      %v1896 = vadd.f32 %v1844, %v1884
      %v1897 = vadd.f32 %v1845, %v1885
      %v1898 = vadd.f32 %v1846, %v1886
      %v1899 = vadd.f32 %v1847, %v1887
      %v1900 = vadd.f32 %v1848, %v1888
      %v1901 = vadd.f32 %v1849, %v1889
      %v1902 = vadd.f32 %v1850, %v1890
      %v1903 = vld [vmem:[%s258 + $0x7] sm:$0x1]
      %v1904 = vperm.slane %v1903, 0
      %v1905 = vmul.f32 %v1853, %v1904
      %v1906 = vmul.f32 %v1854, %v1904
      %v1907 = vmul.f32 %v1855, %v1904
      %v1908 = vmul.f32 %v1856, %v1904
      %v1909 = vmul.f32 %v1857, %v1904
      %v1910 = vmul.f32 %v1858, %v1904
      %v1911 = vmul.f32 %v1859, %v1904
      %v1912 = vmul.f32 %v1860, %v1904
      %v1913 = vmul.f32 %v1861, %v1904
      %v1914 = vmul.f32 %v1862, %v1904
      %v1915 = vmul.f32 %v1863, %v1904
      %v1916 = vmul.f32 %v1864, %v1904
      %v1917 = vadd.f32 %v1891, %v1905
      %v1918 = vadd.f32 %v1892, %v1906
      %v1919 = vadd.f32 %v1893, %v1907
      %v1920 = vadd.f32 %v1894, %v1908
      %v1921 = vadd.f32 %v1895, %v1909
      %v1922 = vadd.f32 %v1896, %v1910
      %v1923 = vadd.f32 %v1897, %v1911
      %v1924 = vadd.f32 %v1898, %v1912
      %v1925 = vadd.f32 %v1899, %v1913
      %v1926 = vadd.f32 %v1900, %v1914
      %v1927 = vadd.f32 %v1901, %v1915
      %v1928 = vadd.f32 %v1902, %v1916
      %v1929 = vld [vmem:[%s285 + $0x7] sm:$0x1]
      %v1930 = vperm.slane %v1929, 0
      %v1931 = vmul.f32 %v1855, %v1930
      %v1932 = vmul.f32 %v1856, %v1930
      %v1933 = vmul.f32 %v1857, %v1930
      %v1934 = vmul.f32 %v1858, %v1930
      %v1935 = vmul.f32 %v1859, %v1930
      %v1936 = vmul.f32 %v1860, %v1930
      %v1937 = vmul.f32 %v1861, %v1930
      %v1938 = vmul.f32 %v1862, %v1930
      %v1939 = vmul.f32 %v1863, %v1930
      %v1940 = vmul.f32 %v1864, %v1930
      %v1941 = vmul.f32 %v1865, %v1930
      %v1942 = vmul.f32 %v1866, %v1930
      %v1943 = vadd.f32 %v1917, %v1931
      %v1944 = vadd.f32 %v1918, %v1932
      %v1945 = vadd.f32 %v1919, %v1933
      %v1946 = vadd.f32 %v1920, %v1934
      %v1947 = vadd.f32 %v1921, %v1935
      %v1948 = vadd.f32 %v1922, %v1936
      %v1949 = vadd.f32 %v1923, %v1937
      %v1950 = vadd.f32 %v1924, %v1938
      %v1951 = vadd.f32 %v1925, %v1939
      %v1952 = vadd.f32 %v1926, %v1940
      %v1953 = vadd.f32 %v1927, %v1941
      %v1954 = vadd.f32 %v1928, %v1942
      %v1955 = vld [vmem:[%s312 + $0x7] sm:$0x1]
      %v1956 = vperm.slane %v1955, 0
      %v1957 = vmul.f32 %v1857, %v1956
      %v1958 = vmul.f32 %v1858, %v1956
      %v1959 = vmul.f32 %v1859, %v1956
      %v1960 = vmul.f32 %v1860, %v1956
      %v1961 = vmul.f32 %v1861, %v1956
      %v1962 = vmul.f32 %v1862, %v1956
      %v1963 = vmul.f32 %v1863, %v1956
      %v1964 = vmul.f32 %v1864, %v1956
      %v1965 = vmul.f32 %v1865, %v1956
      %v1966 = vmul.f32 %v1866, %v1956
      %v1967 = vmul.f32 %v1867, %v1956
      %v1968 = vmul.f32 %v1868, %v1956
      %v1969 = vadd.f32 %v1943, %v1957
      %v1970 = vadd.f32 %v1944, %v1958
      %v1971 = vadd.f32 %v1945, %v1959
      %v1972 = vadd.f32 %v1946, %v1960
      %v1973 = vadd.f32 %v1947, %v1961
      %v1974 = vadd.f32 %v1948, %v1962
      %v1975 = vadd.f32 %v1949, %v1963
      %v1976 = vadd.f32 %v1950, %v1964
      %v1977 = vadd.f32 %v1951, %v1965
      %v1978 = vadd.f32 %v1952, %v1966
      %v1979 = vadd.f32 %v1953, %v1967
      %v1980 = vadd.f32 %v1954, %v1968
      %v1981 = vld [vmem:[%s339 + $0x7] sm:$0x1]
      %v1982 = vperm.slane %v1981, 0
      %v1983 = vmul.f32 %v1859, %v1982
      %v1984 = vmul.f32 %v1860, %v1982
      %v1985 = vmul.f32 %v1861, %v1982
      %v1986 = vmul.f32 %v1862, %v1982
      %v1987 = vmul.f32 %v1863, %v1982
      %v1988 = vmul.f32 %v1864, %v1982
      %v1989 = vmul.f32 %v1865, %v1982
      %v1990 = vmul.f32 %v1866, %v1982
      %v1991 = vmul.f32 %v1867, %v1982
      %v1992 = vmul.f32 %v1868, %v1982
      %v1993 = vmul.f32 %v1869, %v1982
      %v1994 = vmul.f32 %v1870, %v1982
      %v1995 = vadd.f32 %v1969, %v1983
      %v1996 = vadd.f32 %v1970, %v1984
      %v1997 = vadd.f32 %v1971, %v1985
      %v1998 = vadd.f32 %v1972, %v1986
      %v1999 = vadd.f32 %v1973, %v1987
      %v2000 = vadd.f32 %v1974, %v1988
      %v2001 = vadd.f32 %v1975, %v1989
      %v2002 = vadd.f32 %v1976, %v1990
      %v2003 = vadd.f32 %v1977, %v1991
      %v2004 = vadd.f32 %v1978, %v1992
      %v2005 = vadd.f32 %v1979, %v1993
      %v2006 = vadd.f32 %v1980, %v1994
      %v2007 = vld [vmem:[%s366 + $0x7] sm:$0x1]
      %v2008 = vperm.slane %v2007, 0
      %v2009 = vmul.f32 %v1861, %v2008
      %v2010 = vmul.f32 %v1862, %v2008
      %v2011 = vmul.f32 %v1863, %v2008
      %v2012 = vmul.f32 %v1864, %v2008
      %v2013 = vmul.f32 %v1865, %v2008
      %v2014 = vmul.f32 %v1866, %v2008
      %v2015 = vmul.f32 %v1867, %v2008
      %v2016 = vmul.f32 %v1868, %v2008
      %v2017 = vmul.f32 %v1869, %v2008
      %v2018 = vmul.f32 %v1870, %v2008
      %v2019 = vmul.f32 %v1871, %v2008
      %v2020 = vmul.f32 %v1872, %v2008
      %v2021 = vadd.f32 %v1995, %v2009
      %v2022 = vadd.f32 %v1996, %v2010
      %v2023 = vadd.f32 %v1997, %v2011
      %v2024 = vadd.f32 %v1998, %v2012
      %v2025 = vadd.f32 %v1999, %v2013
      %v2026 = vadd.f32 %v2000, %v2014
      %v2027 = vadd.f32 %v2001, %v2015
      %v2028 = vadd.f32 %v2002, %v2016
      %v2029 = vadd.f32 %v2003, %v2017
      %v2030 = vadd.f32 %v2004, %v2018
      %v2031 = vadd.f32 %v2005, %v2019
      %v2032 = vadd.f32 %v2006, %v2020
      %v2033 = vld [vmem:[%s393 + $0x7] sm:$0x1]
      %v2034 = vperm.slane %v2033, 0
      %v2035 = vmul.f32 %v1863, %v2034
      %v2036 = vmul.f32 %v1864, %v2034
      %v2037 = vmul.f32 %v1865, %v2034
      %v2038 = vmul.f32 %v1866, %v2034
      %v2039 = vmul.f32 %v1867, %v2034
      %v2040 = vmul.f32 %v1868, %v2034
      %v2041 = vmul.f32 %v1869, %v2034
      %v2042 = vmul.f32 %v1870, %v2034
      %v2043 = vmul.f32 %v1871, %v2034
      %v2044 = vmul.f32 %v1872, %v2034
      %v2045 = vmul.f32 %v1873, %v2034
      %v2046 = vmul.f32 %v1874, %v2034
      %v2047 = vadd.f32 %v2021, %v2035
      %v2048 = vadd.f32 %v2022, %v2036
      %v2049 = vadd.f32 %v2023, %v2037
      %v2050 = vadd.f32 %v2024, %v2038
      %v2051 = vadd.f32 %v2025, %v2039
      %v2052 = vadd.f32 %v2026, %v2040
      %v2053 = vadd.f32 %v2027, %v2041
      %v2054 = vadd.f32 %v2028, %v2042
      %v2055 = vadd.f32 %v2029, %v2043
      %v2056 = vadd.f32 %v2030, %v2044
      %v2057 = vadd.f32 %v2031, %v2045
      %v2058 = vadd.f32 %v2032, %v2046
      %v2059 = vld [vmem:[%s420 + $0x7] sm:$0x1]
      %v2060 = vperm.slane %v2059, 0
      %v2061 = vmul.f32 %v1865, %v2060
      %v2062 = vmul.f32 %v1866, %v2060
      %v2063 = vmul.f32 %v1867, %v2060
      %v2064 = vmul.f32 %v1868, %v2060
      %v2065 = vmul.f32 %v1869, %v2060
      %v2066 = vmul.f32 %v1870, %v2060
      %v2067 = vmul.f32 %v1871, %v2060
      %v2068 = vmul.f32 %v1872, %v2060
      %v2069 = vmul.f32 %v1873, %v2060
      %v2070 = vmul.f32 %v1874, %v2060
      %v2071 = vmul.f32 %v1875, %v2060
      %v2072 = vmul.f32 %v1876, %v2060
      %v2073 = vadd.f32 %v2047, %v2061
      %v2074 = vadd.f32 %v2048, %v2062
      %v2075 = vadd.f32 %v2049, %v2063
      %v2076 = vadd.f32 %v2050, %v2064
      %v2077 = vadd.f32 %v2051, %v2065
      %v2078 = vadd.f32 %v2052, %v2066
      %v2079 = vadd.f32 %v2053, %v2067
      %v2080 = vadd.f32 %v2054, %v2068
      %v2081 = vadd.f32 %v2055, %v2069
      %v2082 = vadd.f32 %v2056, %v2070
      %v2083 = vadd.f32 %v2057, %v2071
      %v2084 = vadd.f32 %v2058, %v2072
      %2085 = vst [vmem:[%s205] sm:$0xff] %v2073
      %2086 = vst [vmem:[%s205 + $0x8] sm:$0x1] %v2074
      %2087 = vst [vmem:[%s205 + $0x10] sm:$0xff] %v2075
      %2088 = vst [vmem:[%s205 + $0x18] sm:$0x1] %v2076
      %2089 = vst [vmem:[%s205 + $0x20] sm:$0xff] %v2077
      %2090 = vst [vmem:[%s205 + $0x28] sm:$0x1] %v2078
      %2091 = vst [vmem:[%s205 + $0x30] sm:$0xff] %v2079
      %2092 = vst [vmem:[%s205 + $0x38] sm:$0x1] %v2080
      %2093 = vst [vmem:[%s205 + $0x40] sm:$0xff] %v2081
      %2094 = vst [vmem:[%s205 + $0x48] sm:$0x1] %v2082
      %2095 = vst [vmem:[%s205 + $0x50] sm:$0xff] %v2083
      %2096 = vst [vmem:[%s205 + $0x58] sm:$0x1] %v2084
      %s2097 = scalar_lea.vmem %s197, 96
      %v2098 = vld [vmem:[%s2097] sm:$0xff]
      %v2099 = vld [vmem:[%s2097 + $0x8] sm:$0x1]
      %v2100 = vld [vmem:[%s2097 + $0x10] sm:$0xff]
      %v2101 = vld [vmem:[%s2097 + $0x18] sm:$0x1]
      %v2102 = vld [vmem:[%s2097 + $0x20] sm:$0xff]
      %v2103 = vld [vmem:[%s2097 + $0x28] sm:$0x1]
      %v2104 = vld [vmem:[%s2097 + $0x30] sm:$0xff]
      %v2105 = vld [vmem:[%s2097 + $0x38] sm:$0x1]
      %v2106 = vld [vmem:[%s2097 + $0x40] sm:$0xff]
      %v2107 = vld [vmem:[%s2097 + $0x48] sm:$0x1]
      %v2108 = vld [vmem:[%s2097 + $0x50] sm:$0xff]
      %v2109 = vld [vmem:[%s2097 + $0x58] sm:$0x1]
      %v2110 = vld [vmem:[%s2097 + $0x60] sm:$0xff]
      %v2111 = vld [vmem:[%s2097 + $0x68] sm:$0x1]
      %v2112 = vld [vmem:[%s2097 + $0x70] sm:$0xff]
      %v2113 = vld [vmem:[%s2097 + $0x78] sm:$0x1]
      %v2114 = vld [vmem:[%s2097 + $0x80] sm:$0xff]
      %v2115 = vld [vmem:[%s2097 + $0x88] sm:$0x1]
      %v2116 = vld [vmem:[%s2097 + $0x90] sm:$0xff]
      %v2117 = vld [vmem:[%s2097 + $0x98] sm:$0x1]
      %v2118 = vld [vmem:[%s189] sm:$0x1]
      %v2119 = vperm.slane %v2118, 0
      %v2120 = vmul.f32 %v2098, %v2119
      %v2121 = vmul.f32 %v2099, %v2119
      %v2122 = vmul.f32 %v2100, %v2119
      %v2123 = vmul.f32 %v2101, %v2119
      %v2124 = vmul.f32 %v2102, %v2119
      %v2125 = vmul.f32 %v2103, %v2119
      %v2126 = vadd.f32 %v2120, 0.0
      %v2127 = vadd.f32 %v2121, 0.0
      %v2128 = vadd.f32 %v2122, 0.0
      %v2129 = vadd.f32 %v2123, 0.0
      %v2130 = vadd.f32 %v2124, 0.0
      %v2131 = vadd.f32 %v2125, 0.0
      %v2132 = vld [vmem:[%s258] sm:$0x1]
      %v2133 = vperm.slane %v2132, 0
      %v2134 = vmul.f32 %v2100, %v2133
      %v2135 = vmul.f32 %v2101, %v2133
      %v2136 = vmul.f32 %v2102, %v2133
      %v2137 = vmul.f32 %v2103, %v2133
      %v2138 = vmul.f32 %v2104, %v2133
      %v2139 = vmul.f32 %v2105, %v2133
      %v2140 = vadd.f32 %v2126, %v2134
      %v2141 = vadd.f32 %v2127, %v2135
      %v2142 = vadd.f32 %v2128, %v2136
      %v2143 = vadd.f32 %v2129, %v2137
      %v2144 = vadd.f32 %v2130, %v2138
      %v2145 = vadd.f32 %v2131, %v2139
      %v2146 = vld [vmem:[%s285] sm:$0x1]
      %v2147 = vperm.slane %v2146, 0
      %v2148 = vmul.f32 %v2102, %v2147
      %v2149 = vmul.f32 %v2103, %v2147
      %v2150 = vmul.f32 %v2104, %v2147
      %v2151 = vmul.f32 %v2105, %v2147
      %v2152 = vmul.f32 %v2106, %v2147
      %v2153 = vmul.f32 %v2107, %v2147
      %v2154 = vadd.f32 %v2140, %v2148
      %v2155 = vadd.f32 %v2141, %v2149
      %v2156 = vadd.f32 %v2142, %v2150
      %v2157 = vadd.f32 %v2143, %v2151
      %v2158 = vadd.f32 %v2144, %v2152
      %v2159 = vadd.f32 %v2145, %v2153
      %v2160 = vld [vmem:[%s312] sm:$0x1]
      %v2161 = vperm.slane %v2160, 0
      %v2162 = vmul.f32 %v2104, %v2161
      %v2163 = vmul.f32 %v2105, %v2161
      %v2164 = vmul.f32 %v2106, %v2161
      %v2165 = vmul.f32 %v2107, %v2161
      %v2166 = vmul.f32 %v2108, %v2161
      %v2167 = vmul.f32 %v2109, %v2161
      %v2168 = vadd.f32 %v2154, %v2162
      %v2169 = vadd.f32 %v2155, %v2163
      %v2170 = vadd.f32 %v2156, %v2164
      %v2171 = vadd.f32 %v2157, %v2165
      %v2172 = vadd.f32 %v2158, %v2166
      %v2173 = vadd.f32 %v2159, %v2167
      %v2174 = vld [vmem:[%s339] sm:$0x1]
      %v2175 = vperm.slane %v2174, 0
      %v2176 = vmul.f32 %v2106, %v2175
      %v2177 = vmul.f32 %v2107, %v2175
      %v2178 = vmul.f32 %v2108, %v2175
      %v2179 = vmul.f32 %v2109, %v2175
      %v2180 = vmul.f32 %v2110, %v2175
      %v2181 = vmul.f32 %v2111, %v2175
      %v2182 = vadd.f32 %v2168, %v2176
      %v2183 = vadd.f32 %v2169, %v2177
      %v2184 = vadd.f32 %v2170, %v2178
      %v2185 = vadd.f32 %v2171, %v2179
      %v2186 = vadd.f32 %v2172, %v2180
      %v2187 = vadd.f32 %v2173, %v2181
      %v2188 = vld [vmem:[%s366] sm:$0x1]
      %v2189 = vperm.slane %v2188, 0
      %v2190 = vmul.f32 %v2108, %v2189
      %v2191 = vmul.f32 %v2109, %v2189
      %v2192 = vmul.f32 %v2110, %v2189
      %v2193 = vmul.f32 %v2111, %v2189
      %v2194 = vmul.f32 %v2112, %v2189
      %v2195 = vmul.f32 %v2113, %v2189
      %v2196 = vadd.f32 %v2182, %v2190
      %v2197 = vadd.f32 %v2183, %v2191
      %v2198 = vadd.f32 %v2184, %v2192
      %v2199 = vadd.f32 %v2185, %v2193
      %v2200 = vadd.f32 %v2186, %v2194
      %v2201 = vadd.f32 %v2187, %v2195
      %v2202 = vld [vmem:[%s393] sm:$0x1]
      %v2203 = vperm.slane %v2202, 0
      %v2204 = vmul.f32 %v2110, %v2203
      %v2205 = vmul.f32 %v2111, %v2203
      %v2206 = vmul.f32 %v2112, %v2203
      %v2207 = vmul.f32 %v2113, %v2203
      %v2208 = vmul.f32 %v2114, %v2203
      %v2209 = vmul.f32 %v2115, %v2203
      %v2210 = vadd.f32 %v2196, %v2204
      %v2211 = vadd.f32 %v2197, %v2205
      %v2212 = vadd.f32 %v2198, %v2206
      %v2213 = vadd.f32 %v2199, %v2207
      %v2214 = vadd.f32 %v2200, %v2208
      %v2215 = vadd.f32 %v2201, %v2209
      %v2216 = vld [vmem:[%s420] sm:$0x1]
      %v2217 = vperm.slane %v2216, 0
      %v2218 = vmul.f32 %v2112, %v2217
      %v2219 = vmul.f32 %v2113, %v2217
      %v2220 = vmul.f32 %v2114, %v2217
      %v2221 = vmul.f32 %v2115, %v2217
      %v2222 = vmul.f32 %v2116, %v2217
      %v2223 = vmul.f32 %v2117, %v2217
      %v2224 = vadd.f32 %v2210, %v2218
      %v2225 = vadd.f32 %v2211, %v2219
      %v2226 = vadd.f32 %v2212, %v2220
      %v2227 = vadd.f32 %v2213, %v2221
      %v2228 = vadd.f32 %v2214, %v2222
      %v2229 = vadd.f32 %v2215, %v2223
      %v2230 = vld [vmem:[%s2097 + $0x1] sm:$0xff]
      %v2231 = vld [vmem:[%s2097 + $0x9] sm:$0x1]
      %v2232 = vld [vmem:[%s2097 + $0x11] sm:$0xff]
      %v2233 = vld [vmem:[%s2097 + $0x19] sm:$0x1]
      %v2234 = vld [vmem:[%s2097 + $0x21] sm:$0xff]
      %v2235 = vld [vmem:[%s2097 + $0x29] sm:$0x1]
      %v2236 = vld [vmem:[%s2097 + $0x31] sm:$0xff]
      %v2237 = vld [vmem:[%s2097 + $0x39] sm:$0x1]
      %v2238 = vld [vmem:[%s2097 + $0x41] sm:$0xff]
      %v2239 = vld [vmem:[%s2097 + $0x49] sm:$0x1]
      %v2240 = vld [vmem:[%s2097 + $0x51] sm:$0xff]
      %v2241 = vld [vmem:[%s2097 + $0x59] sm:$0x1]
      %v2242 = vld [vmem:[%s2097 + $0x61] sm:$0xff]
      %v2243 = vld [vmem:[%s2097 + $0x69] sm:$0x1]
      %v2244 = vld [vmem:[%s2097 + $0x71] sm:$0xff]
      %v2245 = vld [vmem:[%s2097 + $0x79] sm:$0x1]
      %v2246 = vld [vmem:[%s2097 + $0x81] sm:$0xff]
      %v2247 = vld [vmem:[%s2097 + $0x89] sm:$0x1]
      %v2248 = vld [vmem:[%s2097 + $0x91] sm:$0xff]
      %v2249 = vld [vmem:[%s2097 + $0x99] sm:$0x1]
      %v2250 = vld [vmem:[%s189 + $0x1] sm:$0x1]
      %v2251 = vperm.slane %v2250, 0
      %v2252 = vmul.f32 %v2230, %v2251
      %v2253 = vmul.f32 %v2231, %v2251
      %v2254 = vmul.f32 %v2232, %v2251
      %v2255 = vmul.f32 %v2233, %v2251
      %v2256 = vmul.f32 %v2234, %v2251
      %v2257 = vmul.f32 %v2235, %v2251
      %v2258 = vadd.f32 %v2224, %v2252
      %v2259 = vadd.f32 %v2225, %v2253
      %v2260 = vadd.f32 %v2226, %v2254
      %v2261 = vadd.f32 %v2227, %v2255
      %v2262 = vadd.f32 %v2228, %v2256
      %v2263 = vadd.f32 %v2229, %v2257
      %v2264 = vld [vmem:[%s258 + $0x1] sm:$0x1]
      %v2265 = vperm.slane %v2264, 0
      %v2266 = vmul.f32 %v2232, %v2265
      %v2267 = vmul.f32 %v2233, %v2265
      %v2268 = vmul.f32 %v2234, %v2265
      %v2269 = vmul.f32 %v2235, %v2265
      %v2270 = vmul.f32 %v2236, %v2265
      %v2271 = vmul.f32 %v2237, %v2265
      %v2272 = vadd.f32 %v2258, %v2266
      %v2273 = vadd.f32 %v2259, %v2267
      %v2274 = vadd.f32 %v2260, %v2268
      %v2275 = vadd.f32 %v2261, %v2269
      %v2276 = vadd.f32 %v2262, %v2270
      %v2277 = vadd.f32 %v2263, %v2271
      %v2278 = vld [vmem:[%s285 + $0x1] sm:$0x1]
      %v2279 = vperm.slane %v2278, 0
      %v2280 = vmul.f32 %v2234, %v2279
      %v2281 = vmul.f32 %v2235, %v2279
      %v2282 = vmul.f32 %v2236, %v2279
      %v2283 = vmul.f32 %v2237, %v2279
      %v2284 = vmul.f32 %v2238, %v2279
      %v2285 = vmul.f32 %v2239, %v2279
      %v2286 = vadd.f32 %v2272, %v2280
      %v2287 = vadd.f32 %v2273, %v2281
      %v2288 = vadd.f32 %v2274, %v2282
      %v2289 = vadd.f32 %v2275, %v2283
      %v2290 = vadd.f32 %v2276, %v2284
      %v2291 = vadd.f32 %v2277, %v2285
      %v2292 = vld [vmem:[%s312 + $0x1] sm:$0x1]
      %v2293 = vperm.slane %v2292, 0
      %v2294 = vmul.f32 %v2236, %v2293
      %v2295 = vmul.f32 %v2237, %v2293
      %v2296 = vmul.f32 %v2238, %v2293
      %v2297 = vmul.f32 %v2239, %v2293
      %v2298 = vmul.f32 %v2240, %v2293
      %v2299 = vmul.f32 %v2241, %v2293
      %v2300 = vadd.f32 %v2286, %v2294
      %v2301 = vadd.f32 %v2287, %v2295
      %v2302 = vadd.f32 %v2288, %v2296
      %v2303 = vadd.f32 %v2289, %v2297
      %v2304 = vadd.f32 %v2290, %v2298
      %v2305 = vadd.f32 %v2291, %v2299
      %v2306 = vld [vmem:[%s339 + $0x1] sm:$0x1]
      %v2307 = vperm.slane %v2306, 0
      %v2308 = vmul.f32 %v2238, %v2307
      %v2309 = vmul.f32 %v2239, %v2307
      %v2310 = vmul.f32 %v2240, %v2307
      %v2311 = vmul.f32 %v2241, %v2307
      %v2312 = vmul.f32 %v2242, %v2307
      %v2313 = vmul.f32 %v2243, %v2307
      %v2314 = vadd.f32 %v2300, %v2308
      %v2315 = vadd.f32 %v2301, %v2309
      %v2316 = vadd.f32 %v2302, %v2310
      %v2317 = vadd.f32 %v2303, %v2311
      %v2318 = vadd.f32 %v2304, %v2312
      %v2319 = vadd.f32 %v2305, %v2313
      %v2320 = vld [vmem:[%s366 + $0x1] sm:$0x1]
      %v2321 = vperm.slane %v2320, 0
      %v2322 = vmul.f32 %v2240, %v2321
      %v2323 = vmul.f32 %v2241, %v2321
      %v2324 = vmul.f32 %v2242, %v2321
      %v2325 = vmul.f32 %v2243, %v2321
      %v2326 = vmul.f32 %v2244, %v2321
      %v2327 = vmul.f32 %v2245, %v2321
      %v2328 = vadd.f32 %v2314, %v2322
      %v2329 = vadd.f32 %v2315, %v2323
      %v2330 = vadd.f32 %v2316, %v2324
      %v2331 = vadd.f32 %v2317, %v2325
      %v2332 = vadd.f32 %v2318, %v2326
      %v2333 = vadd.f32 %v2319, %v2327
      %v2334 = vld [vmem:[%s393 + $0x1] sm:$0x1]
      %v2335 = vperm.slane %v2334, 0
      %v2336 = vmul.f32 %v2242, %v2335
      %v2337 = vmul.f32 %v2243, %v2335
      %v2338 = vmul.f32 %v2244, %v2335
      %v2339 = vmul.f32 %v2245, %v2335
      %v2340 = vmul.f32 %v2246, %v2335
      %v2341 = vmul.f32 %v2247, %v2335
      %v2342 = vadd.f32 %v2328, %v2336
      %v2343 = vadd.f32 %v2329, %v2337
      %v2344 = vadd.f32 %v2330, %v2338
      %v2345 = vadd.f32 %v2331, %v2339
      %v2346 = vadd.f32 %v2332, %v2340
      %v2347 = vadd.f32 %v2333, %v2341
      %v2348 = vld [vmem:[%s420 + $0x1] sm:$0x1]
      %v2349 = vperm.slane %v2348, 0
      %v2350 = vmul.f32 %v2244, %v2349
      %v2351 = vmul.f32 %v2245, %v2349
      %v2352 = vmul.f32 %v2246, %v2349
      %v2353 = vmul.f32 %v2247, %v2349
      %v2354 = vmul.f32 %v2248, %v2349
      %v2355 = vmul.f32 %v2249, %v2349
      %v2356 = vadd.f32 %v2342, %v2350
      %v2357 = vadd.f32 %v2343, %v2351
      %v2358 = vadd.f32 %v2344, %v2352
      %v2359 = vadd.f32 %v2345, %v2353
      %v2360 = vadd.f32 %v2346, %v2354
      %v2361 = vadd.f32 %v2347, %v2355
      %v2362 = vld [vmem:[%s2097 + $0x2] sm:$0xff]
      %v2363 = vld [vmem:[%s2097 + $0xa] sm:$0x1]
      %v2364 = vld [vmem:[%s2097 + $0x12] sm:$0xff]
      %v2365 = vld [vmem:[%s2097 + $0x1a] sm:$0x1]
      %v2366 = vld [vmem:[%s2097 + $0x22] sm:$0xff]
      %v2367 = vld [vmem:[%s2097 + $0x2a] sm:$0x1]
      %v2368 = vld [vmem:[%s2097 + $0x32] sm:$0xff]
      %v2369 = vld [vmem:[%s2097 + $0x3a] sm:$0x1]
      %v2370 = vld [vmem:[%s2097 + $0x42] sm:$0xff]
      %v2371 = vld [vmem:[%s2097 + $0x4a] sm:$0x1]
      %v2372 = vld [vmem:[%s2097 + $0x52] sm:$0xff]
      %v2373 = vld [vmem:[%s2097 + $0x5a] sm:$0x1]
      %v2374 = vld [vmem:[%s2097 + $0x62] sm:$0xff]
      %v2375 = vld [vmem:[%s2097 + $0x6a] sm:$0x1]
      %v2376 = vld [vmem:[%s2097 + $0x72] sm:$0xff]
      %v2377 = vld [vmem:[%s2097 + $0x7a] sm:$0x1]
      %v2378 = vld [vmem:[%s2097 + $0x82] sm:$0xff]
      %v2379 = vld [vmem:[%s2097 + $0x8a] sm:$0x1]
      %v2380 = vld [vmem:[%s2097 + $0x92] sm:$0xff]
      %v2381 = vld [vmem:[%s2097 + $0x9a] sm:$0x1]
      %v2382 = vld [vmem:[%s189 + $0x2] sm:$0x1]
      %v2383 = vperm.slane %v2382, 0
      %v2384 = vmul.f32 %v2362, %v2383
      %v2385 = vmul.f32 %v2363, %v2383
      %v2386 = vmul.f32 %v2364, %v2383
      %v2387 = vmul.f32 %v2365, %v2383
      %v2388 = vmul.f32 %v2366, %v2383
      %v2389 = vmul.f32 %v2367, %v2383
      %v2390 = vadd.f32 %v2356, %v2384
      %v2391 = vadd.f32 %v2357, %v2385
      %v2392 = vadd.f32 %v2358, %v2386
      %v2393 = vadd.f32 %v2359, %v2387
      %v2394 = vadd.f32 %v2360, %v2388
      %v2395 = vadd.f32 %v2361, %v2389
      %v2396 = vld [vmem:[%s258 + $0x2] sm:$0x1]
      %v2397 = vperm.slane %v2396, 0
      %v2398 = vmul.f32 %v2364, %v2397
      %v2399 = vmul.f32 %v2365, %v2397
      %v2400 = vmul.f32 %v2366, %v2397
      %v2401 = vmul.f32 %v2367, %v2397
      %v2402 = vmul.f32 %v2368, %v2397
      %v2403 = vmul.f32 %v2369, %v2397
      %v2404 = vadd.f32 %v2390, %v2398
      %v2405 = vadd.f32 %v2391, %v2399
      %v2406 = vadd.f32 %v2392, %v2400
      %v2407 = vadd.f32 %v2393, %v2401
      %v2408 = vadd.f32 %v2394, %v2402
      %v2409 = vadd.f32 %v2395, %v2403
      %v2410 = vld [vmem:[%s285 + $0x2] sm:$0x1]
      %v2411 = vperm.slane %v2410, 0
      %v2412 = vmul.f32 %v2366, %v2411
      %v2413 = vmul.f32 %v2367, %v2411
      %v2414 = vmul.f32 %v2368, %v2411
      %v2415 = vmul.f32 %v2369, %v2411
      %v2416 = vmul.f32 %v2370, %v2411
      %v2417 = vmul.f32 %v2371, %v2411
      %v2418 = vadd.f32 %v2404, %v2412
      %v2419 = vadd.f32 %v2405, %v2413
      %v2420 = vadd.f32 %v2406, %v2414
      %v2421 = vadd.f32 %v2407, %v2415
      %v2422 = vadd.f32 %v2408, %v2416
      %v2423 = vadd.f32 %v2409, %v2417
      %v2424 = vld [vmem:[%s312 + $0x2] sm:$0x1]
      %v2425 = vperm.slane %v2424, 0
      %v2426 = vmul.f32 %v2368, %v2425
      %v2427 = vmul.f32 %v2369, %v2425
      %v2428 = vmul.f32 %v2370, %v2425
      %v2429 = vmul.f32 %v2371, %v2425
      %v2430 = vmul.f32 %v2372, %v2425
      %v2431 = vmul.f32 %v2373, %v2425
      %v2432 = vadd.f32 %v2418, %v2426
      %v2433 = vadd.f32 %v2419, %v2427
      %v2434 = vadd.f32 %v2420, %v2428
      %v2435 = vadd.f32 %v2421, %v2429
      %v2436 = vadd.f32 %v2422, %v2430
      %v2437 = vadd.f32 %v2423, %v2431
      %v2438 = vld [vmem:[%s339 + $0x2] sm:$0x1]
      %v2439 = vperm.slane %v2438, 0
      %v2440 = vmul.f32 %v2370, %v2439
      %v2441 = vmul.f32 %v2371, %v2439
      %v2442 = vmul.f32 %v2372, %v2439
      %v2443 = vmul.f32 %v2373, %v2439
      %v2444 = vmul.f32 %v2374, %v2439
      %v2445 = vmul.f32 %v2375, %v2439
      %v2446 = vadd.f32 %v2432, %v2440
      %v2447 = vadd.f32 %v2433, %v2441
      %v2448 = vadd.f32 %v2434, %v2442
      %v2449 = vadd.f32 %v2435, %v2443
      %v2450 = vadd.f32 %v2436, %v2444
      %v2451 = vadd.f32 %v2437, %v2445
      %v2452 = vld [vmem:[%s366 + $0x2] sm:$0x1]
      %v2453 = vperm.slane %v2452, 0
      %v2454 = vmul.f32 %v2372, %v2453
      %v2455 = vmul.f32 %v2373, %v2453
      %v2456 = vmul.f32 %v2374, %v2453
      %v2457 = vmul.f32 %v2375, %v2453
      %v2458 = vmul.f32 %v2376, %v2453
      %v2459 = vmul.f32 %v2377, %v2453
      %v2460 = vadd.f32 %v2446, %v2454
      %v2461 = vadd.f32 %v2447, %v2455
      %v2462 = vadd.f32 %v2448, %v2456
      %v2463 = vadd.f32 %v2449, %v2457
      %v2464 = vadd.f32 %v2450, %v2458
      %v2465 = vadd.f32 %v2451, %v2459
      %v2466 = vld [vmem:[%s393 + $0x2] sm:$0x1]
      %v2467 = vperm.slane %v2466, 0
      %v2468 = vmul.f32 %v2374, %v2467
      %v2469 = vmul.f32 %v2375, %v2467
      %v2470 = vmul.f32 %v2376, %v2467
      %v2471 = vmul.f32 %v2377, %v2467
      %v2472 = vmul.f32 %v2378, %v2467
      %v2473 = vmul.f32 %v2379, %v2467
      %v2474 = vadd.f32 %v2460, %v2468
      %v2475 = vadd.f32 %v2461, %v2469
      %v2476 = vadd.f32 %v2462, %v2470
      %v2477 = vadd.f32 %v2463, %v2471
      %v2478 = vadd.f32 %v2464, %v2472
      %v2479 = vadd.f32 %v2465, %v2473
      %v2480 = vld [vmem:[%s420 + $0x2] sm:$0x1]
      %v2481 = vperm.slane %v2480, 0
      %v2482 = vmul.f32 %v2376, %v2481
      %v2483 = vmul.f32 %v2377, %v2481
      %v2484 = vmul.f32 %v2378, %v2481
      %v2485 = vmul.f32 %v2379, %v2481
      %v2486 = vmul.f32 %v2380, %v2481
      %v2487 = vmul.f32 %v2381, %v2481
      %v2488 = vadd.f32 %v2474, %v2482
      %v2489 = vadd.f32 %v2475, %v2483
      %v2490 = vadd.f32 %v2476, %v2484
      %v2491 = vadd.f32 %v2477, %v2485
      %v2492 = vadd.f32 %v2478, %v2486
      %v2493 = vadd.f32 %v2479, %v2487
      %v2494 = vld [vmem:[%s2097 + $0x3] sm:$0xff]
      %v2495 = vld [vmem:[%s2097 + $0xb] sm:$0x1]
      %v2496 = vld [vmem:[%s2097 + $0x13] sm:$0xff]
      %v2497 = vld [vmem:[%s2097 + $0x1b] sm:$0x1]
      %v2498 = vld [vmem:[%s2097 + $0x23] sm:$0xff]
      %v2499 = vld [vmem:[%s2097 + $0x2b] sm:$0x1]
      %v2500 = vld [vmem:[%s2097 + $0x33] sm:$0xff]
      %v2501 = vld [vmem:[%s2097 + $0x3b] sm:$0x1]
      %v2502 = vld [vmem:[%s2097 + $0x43] sm:$0xff]
      %v2503 = vld [vmem:[%s2097 + $0x4b] sm:$0x1]
      %v2504 = vld [vmem:[%s2097 + $0x53] sm:$0xff]
      %v2505 = vld [vmem:[%s2097 + $0x5b] sm:$0x1]
      %v2506 = vld [vmem:[%s2097 + $0x63] sm:$0xff]
      %v2507 = vld [vmem:[%s2097 + $0x6b] sm:$0x1]
      %v2508 = vld [vmem:[%s2097 + $0x73] sm:$0xff]
      %v2509 = vld [vmem:[%s2097 + $0x7b] sm:$0x1]
      %v2510 = vld [vmem:[%s2097 + $0x83] sm:$0xff]
      %v2511 = vld [vmem:[%s2097 + $0x8b] sm:$0x1]
      %v2512 = vld [vmem:[%s2097 + $0x93] sm:$0xff]
      %v2513 = vld [vmem:[%s2097 + $0x9b] sm:$0x1]
      %v2514 = vld [vmem:[%s189 + $0x3] sm:$0x1]
      %v2515 = vperm.slane %v2514, 0
      %v2516 = vmul.f32 %v2494, %v2515
      %v2517 = vmul.f32 %v2495, %v2515
      %v2518 = vmul.f32 %v2496, %v2515
      %v2519 = vmul.f32 %v2497, %v2515
      %v2520 = vmul.f32 %v2498, %v2515
      %v2521 = vmul.f32 %v2499, %v2515
      %v2522 = vadd.f32 %v2488, %v2516
      %v2523 = vadd.f32 %v2489, %v2517
      %v2524 = vadd.f32 %v2490, %v2518
      %v2525 = vadd.f32 %v2491, %v2519
      %v2526 = vadd.f32 %v2492, %v2520
      %v2527 = vadd.f32 %v2493, %v2521
      %v2528 = vld [vmem:[%s258 + $0x3] sm:$0x1]
      %v2529 = vperm.slane %v2528, 0
      %v2530 = vmul.f32 %v2496, %v2529
      %v2531 = vmul.f32 %v2497, %v2529
      %v2532 = vmul.f32 %v2498, %v2529
      %v2533 = vmul.f32 %v2499, %v2529
      %v2534 = vmul.f32 %v2500, %v2529
      %v2535 = vmul.f32 %v2501, %v2529
      %v2536 = vadd.f32 %v2522, %v2530
      %v2537 = vadd.f32 %v2523, %v2531
      %v2538 = vadd.f32 %v2524, %v2532
      %v2539 = vadd.f32 %v2525, %v2533
      %v2540 = vadd.f32 %v2526, %v2534
      %v2541 = vadd.f32 %v2527, %v2535
      %v2542 = vld [vmem:[%s285 + $0x3] sm:$0x1]
      %v2543 = vperm.slane %v2542, 0
      %v2544 = vmul.f32 %v2498, %v2543
      %v2545 = vmul.f32 %v2499, %v2543
      %v2546 = vmul.f32 %v2500, %v2543
      %v2547 = vmul.f32 %v2501, %v2543
      %v2548 = vmul.f32 %v2502, %v2543
      %v2549 = vmul.f32 %v2503, %v2543
      %v2550 = vadd.f32 %v2536, %v2544
      %v2551 = vadd.f32 %v2537, %v2545
      %v2552 = vadd.f32 %v2538, %v2546
      %v2553 = vadd.f32 %v2539, %v2547
      %v2554 = vadd.f32 %v2540, %v2548
      %v2555 = vadd.f32 %v2541, %v2549
      %v2556 = vld [vmem:[%s312 + $0x3] sm:$0x1]
      %v2557 = vperm.slane %v2556, 0
      %v2558 = vmul.f32 %v2500, %v2557
      %v2559 = vmul.f32 %v2501, %v2557
      %v2560 = vmul.f32 %v2502, %v2557
      %v2561 = vmul.f32 %v2503, %v2557
      %v2562 = vmul.f32 %v2504, %v2557
      %v2563 = vmul.f32 %v2505, %v2557
      %v2564 = vadd.f32 %v2550, %v2558
      %v2565 = vadd.f32 %v2551, %v2559
      %v2566 = vadd.f32 %v2552, %v2560
      %v2567 = vadd.f32 %v2553, %v2561
      %v2568 = vadd.f32 %v2554, %v2562
      %v2569 = vadd.f32 %v2555, %v2563
      %v2570 = vld [vmem:[%s339 + $0x3] sm:$0x1]
      %v2571 = vperm.slane %v2570, 0
      %v2572 = vmul.f32 %v2502, %v2571
      %v2573 = vmul.f32 %v2503, %v2571
      %v2574 = vmul.f32 %v2504, %v2571
      %v2575 = vmul.f32 %v2505, %v2571
      %v2576 = vmul.f32 %v2506, %v2571
      %v2577 = vmul.f32 %v2507, %v2571
      %v2578 = vadd.f32 %v2564, %v2572
      %v2579 = vadd.f32 %v2565, %v2573
      %v2580 = vadd.f32 %v2566, %v2574
      %v2581 = vadd.f32 %v2567, %v2575
      %v2582 = vadd.f32 %v2568, %v2576
      %v2583 = vadd.f32 %v2569, %v2577
      %v2584 = vld [vmem:[%s366 + $0x3] sm:$0x1]
      %v2585 = vperm.slane %v2584, 0
      %v2586 = vmul.f32 %v2504, %v2585
      %v2587 = vmul.f32 %v2505, %v2585
      %v2588 = vmul.f32 %v2506, %v2585
      %v2589 = vmul.f32 %v2507, %v2585
      %v2590 = vmul.f32 %v2508, %v2585
      %v2591 = vmul.f32 %v2509, %v2585
      %v2592 = vadd.f32 %v2578, %v2586
      %v2593 = vadd.f32 %v2579, %v2587
      %v2594 = vadd.f32 %v2580, %v2588
      %v2595 = vadd.f32 %v2581, %v2589
      %v2596 = vadd.f32 %v2582, %v2590
      %v2597 = vadd.f32 %v2583, %v2591
      %v2598 = vld [vmem:[%s393 + $0x3] sm:$0x1]
      %v2599 = vperm.slane %v2598, 0
      %v2600 = vmul.f32 %v2506, %v2599
      %v2601 = vmul.f32 %v2507, %v2599
      %v2602 = vmul.f32 %v2508, %v2599
      %v2603 = vmul.f32 %v2509, %v2599
      %v2604 = vmul.f32 %v2510, %v2599
      %v2605 = vmul.f32 %v2511, %v2599
      %v2606 = vadd.f32 %v2592, %v2600
      %v2607 = vadd.f32 %v2593, %v2601
      %v2608 = vadd.f32 %v2594, %v2602
      %v2609 = vadd.f32 %v2595, %v2603
      %v2610 = vadd.f32 %v2596, %v2604
      %v2611 = vadd.f32 %v2597, %v2605
      %v2612 = vld [vmem:[%s420 + $0x3] sm:$0x1]
      %v2613 = vperm.slane %v2612, 0
      %v2614 = vmul.f32 %v2508, %v2613
      %v2615 = vmul.f32 %v2509, %v2613
      %v2616 = vmul.f32 %v2510, %v2613
      %v2617 = vmul.f32 %v2511, %v2613
      %v2618 = vmul.f32 %v2512, %v2613
      %v2619 = vmul.f32 %v2513, %v2613
      %v2620 = vadd.f32 %v2606, %v2614
      %v2621 = vadd.f32 %v2607, %v2615
      %v2622 = vadd.f32 %v2608, %v2616
      %v2623 = vadd.f32 %v2609, %v2617
      %v2624 = vadd.f32 %v2610, %v2618
      %v2625 = vadd.f32 %v2611, %v2619
      %v2626 = vld [vmem:[%s2097 + $0x4] sm:$0xff]
      %v2627 = vld [vmem:[%s2097 + $0xc] sm:$0x1]
      %v2628 = vld [vmem:[%s2097 + $0x14] sm:$0xff]
      %v2629 = vld [vmem:[%s2097 + $0x1c] sm:$0x1]
      %v2630 = vld [vmem:[%s2097 + $0x24] sm:$0xff]
      %v2631 = vld [vmem:[%s2097 + $0x2c] sm:$0x1]
      %v2632 = vld [vmem:[%s2097 + $0x34] sm:$0xff]
      %v2633 = vld [vmem:[%s2097 + $0x3c] sm:$0x1]
      %v2634 = vld [vmem:[%s2097 + $0x44] sm:$0xff]
      %v2635 = vld [vmem:[%s2097 + $0x4c] sm:$0x1]
      %v2636 = vld [vmem:[%s2097 + $0x54] sm:$0xff]
      %v2637 = vld [vmem:[%s2097 + $0x5c] sm:$0x1]
      %v2638 = vld [vmem:[%s2097 + $0x64] sm:$0xff]
      %v2639 = vld [vmem:[%s2097 + $0x6c] sm:$0x1]
      %v2640 = vld [vmem:[%s2097 + $0x74] sm:$0xff]
      %v2641 = vld [vmem:[%s2097 + $0x7c] sm:$0x1]
      %v2642 = vld [vmem:[%s2097 + $0x84] sm:$0xff]
      %v2643 = vld [vmem:[%s2097 + $0x8c] sm:$0x1]
      %v2644 = vld [vmem:[%s2097 + $0x94] sm:$0xff]
      %v2645 = vld [vmem:[%s2097 + $0x9c] sm:$0x1]
      %v2646 = vld [vmem:[%s189 + $0x4] sm:$0x1]
      %v2647 = vperm.slane %v2646, 0
      %v2648 = vmul.f32 %v2626, %v2647
      %v2649 = vmul.f32 %v2627, %v2647
      %v2650 = vmul.f32 %v2628, %v2647
      %v2651 = vmul.f32 %v2629, %v2647
      %v2652 = vmul.f32 %v2630, %v2647
      %v2653 = vmul.f32 %v2631, %v2647
      %v2654 = vadd.f32 %v2620, %v2648
      %v2655 = vadd.f32 %v2621, %v2649
      %v2656 = vadd.f32 %v2622, %v2650
      %v2657 = vadd.f32 %v2623, %v2651
      %v2658 = vadd.f32 %v2624, %v2652
      %v2659 = vadd.f32 %v2625, %v2653
      %v2660 = vld [vmem:[%s258 + $0x4] sm:$0x1]
      %v2661 = vperm.slane %v2660, 0
      %v2662 = vmul.f32 %v2628, %v2661
      %v2663 = vmul.f32 %v2629, %v2661
      %v2664 = vmul.f32 %v2630, %v2661
      %v2665 = vmul.f32 %v2631, %v2661
      %v2666 = vmul.f32 %v2632, %v2661
      %v2667 = vmul.f32 %v2633, %v2661
      %v2668 = vadd.f32 %v2654, %v2662
      %v2669 = vadd.f32 %v2655, %v2663
      %v2670 = vadd.f32 %v2656, %v2664
      %v2671 = vadd.f32 %v2657, %v2665
      %v2672 = vadd.f32 %v2658, %v2666
      %v2673 = vadd.f32 %v2659, %v2667
      %v2674 = vld [vmem:[%s285 + $0x4] sm:$0x1]
      %v2675 = vperm.slane %v2674, 0
      %v2676 = vmul.f32 %v2630, %v2675
      %v2677 = vmul.f32 %v2631, %v2675
      %v2678 = vmul.f32 %v2632, %v2675
      %v2679 = vmul.f32 %v2633, %v2675
      %v2680 = vmul.f32 %v2634, %v2675
      %v2681 = vmul.f32 %v2635, %v2675
      %v2682 = vadd.f32 %v2668, %v2676
      %v2683 = vadd.f32 %v2669, %v2677
      %v2684 = vadd.f32 %v2670, %v2678
      %v2685 = vadd.f32 %v2671, %v2679
      %v2686 = vadd.f32 %v2672, %v2680
      %v2687 = vadd.f32 %v2673, %v2681
      %v2688 = vld [vmem:[%s312 + $0x4] sm:$0x1]
      %v2689 = vperm.slane %v2688, 0
      %v2690 = vmul.f32 %v2632, %v2689
      %v2691 = vmul.f32 %v2633, %v2689
      %v2692 = vmul.f32 %v2634, %v2689
      %v2693 = vmul.f32 %v2635, %v2689
      %v2694 = vmul.f32 %v2636, %v2689
      %v2695 = vmul.f32 %v2637, %v2689
      %v2696 = vadd.f32 %v2682, %v2690
      %v2697 = vadd.f32 %v2683, %v2691
      %v2698 = vadd.f32 %v2684, %v2692
      %v2699 = vadd.f32 %v2685, %v2693
      %v2700 = vadd.f32 %v2686, %v2694
      %v2701 = vadd.f32 %v2687, %v2695
      %v2702 = vld [vmem:[%s339 + $0x4] sm:$0x1]
      %v2703 = vperm.slane %v2702, 0
      %v2704 = vmul.f32 %v2634, %v2703
      %v2705 = vmul.f32 %v2635, %v2703
      %v2706 = vmul.f32 %v2636, %v2703
      %v2707 = vmul.f32 %v2637, %v2703
      %v2708 = vmul.f32 %v2638, %v2703
      %v2709 = vmul.f32 %v2639, %v2703
      %v2710 = vadd.f32 %v2696, %v2704
      %v2711 = vadd.f32 %v2697, %v2705
      %v2712 = vadd.f32 %v2698, %v2706
      %v2713 = vadd.f32 %v2699, %v2707
      %v2714 = vadd.f32 %v2700, %v2708
      %v2715 = vadd.f32 %v2701, %v2709
      %v2716 = vld [vmem:[%s366 + $0x4] sm:$0x1]
      %v2717 = vperm.slane %v2716, 0
      %v2718 = vmul.f32 %v2636, %v2717
      %v2719 = vmul.f32 %v2637, %v2717
      %v2720 = vmul.f32 %v2638, %v2717
      %v2721 = vmul.f32 %v2639, %v2717
      %v2722 = vmul.f32 %v2640, %v2717
      %v2723 = vmul.f32 %v2641, %v2717
      %v2724 = vadd.f32 %v2710, %v2718
      %v2725 = vadd.f32 %v2711, %v2719
      %v2726 = vadd.f32 %v2712, %v2720
      %v2727 = vadd.f32 %v2713, %v2721
      %v2728 = vadd.f32 %v2714, %v2722
      %v2729 = vadd.f32 %v2715, %v2723
      %v2730 = vld [vmem:[%s393 + $0x4] sm:$0x1]
      %v2731 = vperm.slane %v2730, 0
      %v2732 = vmul.f32 %v2638, %v2731
      %v2733 = vmul.f32 %v2639, %v2731
      %v2734 = vmul.f32 %v2640, %v2731
      %v2735 = vmul.f32 %v2641, %v2731
      %v2736 = vmul.f32 %v2642, %v2731
      %v2737 = vmul.f32 %v2643, %v2731
      %v2738 = vadd.f32 %v2724, %v2732
      %v2739 = vadd.f32 %v2725, %v2733
      %v2740 = vadd.f32 %v2726, %v2734
      %v2741 = vadd.f32 %v2727, %v2735
      %v2742 = vadd.f32 %v2728, %v2736
      %v2743 = vadd.f32 %v2729, %v2737
      %v2744 = vld [vmem:[%s420 + $0x4] sm:$0x1]
      %v2745 = vperm.slane %v2744, 0
      %v2746 = vmul.f32 %v2640, %v2745
      %v2747 = vmul.f32 %v2641, %v2745
      %v2748 = vmul.f32 %v2642, %v2745
      %v2749 = vmul.f32 %v2643, %v2745
      %v2750 = vmul.f32 %v2644, %v2745
      %v2751 = vmul.f32 %v2645, %v2745
      %v2752 = vadd.f32 %v2738, %v2746
      %v2753 = vadd.f32 %v2739, %v2747
      %v2754 = vadd.f32 %v2740, %v2748
      %v2755 = vadd.f32 %v2741, %v2749
      %v2756 = vadd.f32 %v2742, %v2750
      %v2757 = vadd.f32 %v2743, %v2751
      %v2758 = vld [vmem:[%s2097 + $0x5] sm:$0xff]
      %v2759 = vld [vmem:[%s2097 + $0xd] sm:$0x1]
      %v2760 = vld [vmem:[%s2097 + $0x15] sm:$0xff]
      %v2761 = vld [vmem:[%s2097 + $0x1d] sm:$0x1]
      %v2762 = vld [vmem:[%s2097 + $0x25] sm:$0xff]
      %v2763 = vld [vmem:[%s2097 + $0x2d] sm:$0x1]
      %v2764 = vld [vmem:[%s2097 + $0x35] sm:$0xff]
      %v2765 = vld [vmem:[%s2097 + $0x3d] sm:$0x1]
      %v2766 = vld [vmem:[%s2097 + $0x45] sm:$0xff]
      %v2767 = vld [vmem:[%s2097 + $0x4d] sm:$0x1]
      %v2768 = vld [vmem:[%s2097 + $0x55] sm:$0xff]
      %v2769 = vld [vmem:[%s2097 + $0x5d] sm:$0x1]
      %v2770 = vld [vmem:[%s2097 + $0x65] sm:$0xff]
      %v2771 = vld [vmem:[%s2097 + $0x6d] sm:$0x1]
      %v2772 = vld [vmem:[%s2097 + $0x75] sm:$0xff]
      %v2773 = vld [vmem:[%s2097 + $0x7d] sm:$0x1]
      %v2774 = vld [vmem:[%s2097 + $0x85] sm:$0xff]
      %v2775 = vld [vmem:[%s2097 + $0x8d] sm:$0x1]
      %v2776 = vld [vmem:[%s2097 + $0x95] sm:$0xff]
      %v2777 = vld [vmem:[%s2097 + $0x9d] sm:$0x1]
      %v2778 = vld [vmem:[%s189 + $0x5] sm:$0x1]
      %v2779 = vperm.slane %v2778, 0
      %v2780 = vmul.f32 %v2758, %v2779
      %v2781 = vmul.f32 %v2759, %v2779
      %v2782 = vmul.f32 %v2760, %v2779
      %v2783 = vmul.f32 %v2761, %v2779
      %v2784 = vmul.f32 %v2762, %v2779
      %v2785 = vmul.f32 %v2763, %v2779
      %v2786 = vadd.f32 %v2752, %v2780
      %v2787 = vadd.f32 %v2753, %v2781
      %v2788 = vadd.f32 %v2754, %v2782
      %v2789 = vadd.f32 %v2755, %v2783
      %v2790 = vadd.f32 %v2756, %v2784
      %v2791 = vadd.f32 %v2757, %v2785
      %v2792 = vld [vmem:[%s258 + $0x5] sm:$0x1]
      %v2793 = vperm.slane %v2792, 0
      %v2794 = vmul.f32 %v2760, %v2793
      %v2795 = vmul.f32 %v2761, %v2793
      %v2796 = vmul.f32 %v2762, %v2793
      %v2797 = vmul.f32 %v2763, %v2793
      %v2798 = vmul.f32 %v2764, %v2793
      %v2799 = vmul.f32 %v2765, %v2793
      %v2800 = vadd.f32 %v2786, %v2794
      %v2801 = vadd.f32 %v2787, %v2795
      %v2802 = vadd.f32 %v2788, %v2796
      %v2803 = vadd.f32 %v2789, %v2797
      %v2804 = vadd.f32 %v2790, %v2798
      %v2805 = vadd.f32 %v2791, %v2799
      %v2806 = vld [vmem:[%s285 + $0x5] sm:$0x1]
      %v2807 = vperm.slane %v2806, 0
      %v2808 = vmul.f32 %v2762, %v2807
      %v2809 = vmul.f32 %v2763, %v2807
      %v2810 = vmul.f32 %v2764, %v2807
      %v2811 = vmul.f32 %v2765, %v2807
      %v2812 = vmul.f32 %v2766, %v2807
      %v2813 = vmul.f32 %v2767, %v2807
      %v2814 = vadd.f32 %v2800, %v2808
      %v2815 = vadd.f32 %v2801, %v2809
      %v2816 = vadd.f32 %v2802, %v2810
      %v2817 = vadd.f32 %v2803, %v2811
      %v2818 = vadd.f32 %v2804, %v2812
      %v2819 = vadd.f32 %v2805, %v2813
      %v2820 = vld [vmem:[%s312 + $0x5] sm:$0x1]
      %v2821 = vperm.slane %v2820, 0
      %v2822 = vmul.f32 %v2764, %v2821
      %v2823 = vmul.f32 %v2765, %v2821
      %v2824 = vmul.f32 %v2766, %v2821
      %v2825 = vmul.f32 %v2767, %v2821
      %v2826 = vmul.f32 %v2768, %v2821
      %v2827 = vmul.f32 %v2769, %v2821
      %v2828 = vadd.f32 %v2814, %v2822
      %v2829 = vadd.f32 %v2815, %v2823
      %v2830 = vadd.f32 %v2816, %v2824
      %v2831 = vadd.f32 %v2817, %v2825
      %v2832 = vadd.f32 %v2818, %v2826
      %v2833 = vadd.f32 %v2819, %v2827
      %v2834 = vld [vmem:[%s339 + $0x5] sm:$0x1]
      %v2835 = vperm.slane %v2834, 0
      %v2836 = vmul.f32 %v2766, %v2835
      %v2837 = vmul.f32 %v2767, %v2835
      %v2838 = vmul.f32 %v2768, %v2835
      %v2839 = vmul.f32 %v2769, %v2835
      %v2840 = vmul.f32 %v2770, %v2835
      %v2841 = vmul.f32 %v2771, %v2835
      %v2842 = vadd.f32 %v2828, %v2836
      %v2843 = vadd.f32 %v2829, %v2837
      %v2844 = vadd.f32 %v2830, %v2838
      %v2845 = vadd.f32 %v2831, %v2839
      %v2846 = vadd.f32 %v2832, %v2840
      %v2847 = vadd.f32 %v2833, %v2841
      %v2848 = vld [vmem:[%s366 + $0x5] sm:$0x1]
      %v2849 = vperm.slane %v2848, 0
      %v2850 = vmul.f32 %v2768, %v2849
      %v2851 = vmul.f32 %v2769, %v2849
      %v2852 = vmul.f32 %v2770, %v2849
      %v2853 = vmul.f32 %v2771, %v2849
      %v2854 = vmul.f32 %v2772, %v2849
      %v2855 = vmul.f32 %v2773, %v2849
      %v2856 = vadd.f32 %v2842, %v2850
      %v2857 = vadd.f32 %v2843, %v2851
      %v2858 = vadd.f32 %v2844, %v2852
      %v2859 = vadd.f32 %v2845, %v2853
      %v2860 = vadd.f32 %v2846, %v2854
      %v2861 = vadd.f32 %v2847, %v2855
      %v2862 = vld [vmem:[%s393 + $0x5] sm:$0x1]
      %v2863 = vperm.slane %v2862, 0
      %v2864 = vmul.f32 %v2770, %v2863
      %v2865 = vmul.f32 %v2771, %v2863
      %v2866 = vmul.f32 %v2772, %v2863
      %v2867 = vmul.f32 %v2773, %v2863
      %v2868 = vmul.f32 %v2774, %v2863
      %v2869 = vmul.f32 %v2775, %v2863
      %v2870 = vadd.f32 %v2856, %v2864
      %v2871 = vadd.f32 %v2857, %v2865
      %v2872 = vadd.f32 %v2858, %v2866
      %v2873 = vadd.f32 %v2859, %v2867
      %v2874 = vadd.f32 %v2860, %v2868
      %v2875 = vadd.f32 %v2861, %v2869
      %v2876 = vld [vmem:[%s420 + $0x5] sm:$0x1]
      %v2877 = vperm.slane %v2876, 0
      %v2878 = vmul.f32 %v2772, %v2877
      %v2879 = vmul.f32 %v2773, %v2877
      %v2880 = vmul.f32 %v2774, %v2877
      %v2881 = vmul.f32 %v2775, %v2877
      %v2882 = vmul.f32 %v2776, %v2877
      %v2883 = vmul.f32 %v2777, %v2877
      %v2884 = vadd.f32 %v2870, %v2878
      %v2885 = vadd.f32 %v2871, %v2879
      %v2886 = vadd.f32 %v2872, %v2880
      %v2887 = vadd.f32 %v2873, %v2881
      %v2888 = vadd.f32 %v2874, %v2882
      %v2889 = vadd.f32 %v2875, %v2883
      %v2890 = vld [vmem:[%s2097 + $0x6] sm:$0xff]
      %v2891 = vld [vmem:[%s2097 + $0xe] sm:$0x1]
      %v2892 = vld [vmem:[%s2097 + $0x16] sm:$0xff]
      %v2893 = vld [vmem:[%s2097 + $0x1e] sm:$0x1]
      %v2894 = vld [vmem:[%s2097 + $0x26] sm:$0xff]
      %v2895 = vld [vmem:[%s2097 + $0x2e] sm:$0x1]
      %v2896 = vld [vmem:[%s2097 + $0x36] sm:$0xff]
      %v2897 = vld [vmem:[%s2097 + $0x3e] sm:$0x1]
      %v2898 = vld [vmem:[%s2097 + $0x46] sm:$0xff]
      %v2899 = vld [vmem:[%s2097 + $0x4e] sm:$0x1]
      %v2900 = vld [vmem:[%s2097 + $0x56] sm:$0xff]
      %v2901 = vld [vmem:[%s2097 + $0x5e] sm:$0x1]
      %v2902 = vld [vmem:[%s2097 + $0x66] sm:$0xff]
      %v2903 = vld [vmem:[%s2097 + $0x6e] sm:$0x1]
      %v2904 = vld [vmem:[%s2097 + $0x76] sm:$0xff]
      %v2905 = vld [vmem:[%s2097 + $0x7e] sm:$0x1]
      %v2906 = vld [vmem:[%s2097 + $0x86] sm:$0xff]
      %v2907 = vld [vmem:[%s2097 + $0x8e] sm:$0x1]
      %v2908 = vld [vmem:[%s2097 + $0x96] sm:$0xff]
      %v2909 = vld [vmem:[%s2097 + $0x9e] sm:$0x1]
      %v2910 = vld [vmem:[%s189 + $0x6] sm:$0x1]
      %v2911 = vperm.slane %v2910, 0
      %v2912 = vmul.f32 %v2890, %v2911
      %v2913 = vmul.f32 %v2891, %v2911
      %v2914 = vmul.f32 %v2892, %v2911
      %v2915 = vmul.f32 %v2893, %v2911
      %v2916 = vmul.f32 %v2894, %v2911
      %v2917 = vmul.f32 %v2895, %v2911
      %v2918 = vadd.f32 %v2884, %v2912
      %v2919 = vadd.f32 %v2885, %v2913
      %v2920 = vadd.f32 %v2886, %v2914
      %v2921 = vadd.f32 %v2887, %v2915
      %v2922 = vadd.f32 %v2888, %v2916
      %v2923 = vadd.f32 %v2889, %v2917
      %v2924 = vld [vmem:[%s258 + $0x6] sm:$0x1]
      %v2925 = vperm.slane %v2924, 0
      %v2926 = vmul.f32 %v2892, %v2925
      %v2927 = vmul.f32 %v2893, %v2925
      %v2928 = vmul.f32 %v2894, %v2925
      %v2929 = vmul.f32 %v2895, %v2925
      %v2930 = vmul.f32 %v2896, %v2925
      %v2931 = vmul.f32 %v2897, %v2925
      %v2932 = vadd.f32 %v2918, %v2926
      %v2933 = vadd.f32 %v2919, %v2927
      %v2934 = vadd.f32 %v2920, %v2928
      %v2935 = vadd.f32 %v2921, %v2929
      %v2936 = vadd.f32 %v2922, %v2930
      %v2937 = vadd.f32 %v2923, %v2931
      %v2938 = vld [vmem:[%s285 + $0x6] sm:$0x1]
      %v2939 = vperm.slane %v2938, 0
      %v2940 = vmul.f32 %v2894, %v2939
      %v2941 = vmul.f32 %v2895, %v2939
      %v2942 = vmul.f32 %v2896, %v2939
      %v2943 = vmul.f32 %v2897, %v2939
      %v2944 = vmul.f32 %v2898, %v2939
      %v2945 = vmul.f32 %v2899, %v2939
      %v2946 = vadd.f32 %v2932, %v2940
      %v2947 = vadd.f32 %v2933, %v2941
      %v2948 = vadd.f32 %v2934, %v2942
      %v2949 = vadd.f32 %v2935, %v2943
      %v2950 = vadd.f32 %v2936, %v2944
      %v2951 = vadd.f32 %v2937, %v2945
      %v2952 = vld [vmem:[%s312 + $0x6] sm:$0x1]
      %v2953 = vperm.slane %v2952, 0
      %v2954 = vmul.f32 %v2896, %v2953
      %v2955 = vmul.f32 %v2897, %v2953
      %v2956 = vmul.f32 %v2898, %v2953
      %v2957 = vmul.f32 %v2899, %v2953
      %v2958 = vmul.f32 %v2900, %v2953
      %v2959 = vmul.f32 %v2901, %v2953
      %v2960 = vadd.f32 %v2946, %v2954
      %v2961 = vadd.f32 %v2947, %v2955
      %v2962 = vadd.f32 %v2948, %v2956
      %v2963 = vadd.f32 %v2949, %v2957
      %v2964 = vadd.f32 %v2950, %v2958
      %v2965 = vadd.f32 %v2951, %v2959
      %v2966 = vld [vmem:[%s339 + $0x6] sm:$0x1]
      %v2967 = vperm.slane %v2966, 0
      %v2968 = vmul.f32 %v2898, %v2967
      %v2969 = vmul.f32 %v2899, %v2967
      %v2970 = vmul.f32 %v2900, %v2967
      %v2971 = vmul.f32 %v2901, %v2967
      %v2972 = vmul.f32 %v2902, %v2967
      %v2973 = vmul.f32 %v2903, %v2967
      %v2974 = vadd.f32 %v2960, %v2968
      %v2975 = vadd.f32 %v2961, %v2969
      %v2976 = vadd.f32 %v2962, %v2970
      %v2977 = vadd.f32 %v2963, %v2971
      %v2978 = vadd.f32 %v2964, %v2972
      %v2979 = vadd.f32 %v2965, %v2973
      %v2980 = vld [vmem:[%s366 + $0x6] sm:$0x1]
      %v2981 = vperm.slane %v2980, 0
      %v2982 = vmul.f32 %v2900, %v2981
      %v2983 = vmul.f32 %v2901, %v2981
      %v2984 = vmul.f32 %v2902, %v2981
      %v2985 = vmul.f32 %v2903, %v2981
      %v2986 = vmul.f32 %v2904, %v2981
      %v2987 = vmul.f32 %v2905, %v2981
      %v2988 = vadd.f32 %v2974, %v2982
      %v2989 = vadd.f32 %v2975, %v2983
      %v2990 = vadd.f32 %v2976, %v2984
      %v2991 = vadd.f32 %v2977, %v2985
      %v2992 = vadd.f32 %v2978, %v2986
      %v2993 = vadd.f32 %v2979, %v2987
      %v2994 = vld [vmem:[%s393 + $0x6] sm:$0x1]
      %v2995 = vperm.slane %v2994, 0
      %v2996 = vmul.f32 %v2902, %v2995
      %v2997 = vmul.f32 %v2903, %v2995
      %v2998 = vmul.f32 %v2904, %v2995
      %v2999 = vmul.f32 %v2905, %v2995
      %v3000 = vmul.f32 %v2906, %v2995
      %v3001 = vmul.f32 %v2907, %v2995
      %v3002 = vadd.f32 %v2988, %v2996
      %v3003 = vadd.f32 %v2989, %v2997
      %v3004 = vadd.f32 %v2990, %v2998
      %v3005 = vadd.f32 %v2991, %v2999
      %v3006 = vadd.f32 %v2992, %v3000
      %v3007 = vadd.f32 %v2993, %v3001
      %v3008 = vld [vmem:[%s420 + $0x6] sm:$0x1]
      %v3009 = vperm.slane %v3008, 0
      %v3010 = vmul.f32 %v2904, %v3009
      %v3011 = vmul.f32 %v2905, %v3009
      %v3012 = vmul.f32 %v2906, %v3009
      %v3013 = vmul.f32 %v2907, %v3009
      %v3014 = vmul.f32 %v2908, %v3009
      %v3015 = vmul.f32 %v2909, %v3009
      %v3016 = vadd.f32 %v3002, %v3010
      %v3017 = vadd.f32 %v3003, %v3011
      %v3018 = vadd.f32 %v3004, %v3012
      %v3019 = vadd.f32 %v3005, %v3013
      %v3020 = vadd.f32 %v3006, %v3014
      %v3021 = vadd.f32 %v3007, %v3015
      %v3022 = vld [vmem:[%s2097 + $0x7] sm:$0xff]
      %v3023 = vld [vmem:[%s2097 + $0xf] sm:$0x1]
      %v3024 = vld [vmem:[%s2097 + $0x17] sm:$0xff]
      %v3025 = vld [vmem:[%s2097 + $0x1f] sm:$0x1]
      %v3026 = vld [vmem:[%s2097 + $0x27] sm:$0xff]
      %v3027 = vld [vmem:[%s2097 + $0x2f] sm:$0x1]
      %v3028 = vld [vmem:[%s2097 + $0x37] sm:$0xff]
      %v3029 = vld [vmem:[%s2097 + $0x3f] sm:$0x1]
      %v3030 = vld [vmem:[%s2097 + $0x47] sm:$0xff]
      %v3031 = vld [vmem:[%s2097 + $0x4f] sm:$0x1]
      %v3032 = vld [vmem:[%s2097 + $0x57] sm:$0xff]
      %v3033 = vld [vmem:[%s2097 + $0x5f] sm:$0x1]
      %v3034 = vld [vmem:[%s2097 + $0x67] sm:$0xff]
      %v3035 = vld [vmem:[%s2097 + $0x6f] sm:$0x1]
      %v3036 = vld [vmem:[%s2097 + $0x77] sm:$0xff]
      %v3037 = vld [vmem:[%s2097 + $0x7f] sm:$0x1]
      %v3038 = vld [vmem:[%s2097 + $0x87] sm:$0xff]
      %v3039 = vld [vmem:[%s2097 + $0x8f] sm:$0x1]
      %v3040 = vld [vmem:[%s2097 + $0x97] sm:$0xff]
      %v3041 = vld [vmem:[%s2097 + $0x9f] sm:$0x1]
      %v3042 = vld [vmem:[%s189 + $0x7] sm:$0x1]
      %v3043 = vperm.slane %v3042, 0
      %v3044 = vmul.f32 %v3022, %v3043
      %v3045 = vmul.f32 %v3023, %v3043
      %v3046 = vmul.f32 %v3024, %v3043
      %v3047 = vmul.f32 %v3025, %v3043
      %v3048 = vmul.f32 %v3026, %v3043
      %v3049 = vmul.f32 %v3027, %v3043
      %v3050 = vadd.f32 %v3016, %v3044
      %v3051 = vadd.f32 %v3017, %v3045
      %v3052 = vadd.f32 %v3018, %v3046
      %v3053 = vadd.f32 %v3019, %v3047
      %v3054 = vadd.f32 %v3020, %v3048
      %v3055 = vadd.f32 %v3021, %v3049
      %v3056 = vld [vmem:[%s258 + $0x7] sm:$0x1]
      %v3057 = vperm.slane %v3056, 0
      %v3058 = vmul.f32 %v3024, %v3057
      %v3059 = vmul.f32 %v3025, %v3057
      %v3060 = vmul.f32 %v3026, %v3057
      %v3061 = vmul.f32 %v3027, %v3057
      %v3062 = vmul.f32 %v3028, %v3057
      %v3063 = vmul.f32 %v3029, %v3057
      %v3064 = vadd.f32 %v3050, %v3058
      %v3065 = vadd.f32 %v3051, %v3059
      %v3066 = vadd.f32 %v3052, %v3060
      %v3067 = vadd.f32 %v3053, %v3061
      %v3068 = vadd.f32 %v3054, %v3062
      %v3069 = vadd.f32 %v3055, %v3063
      %v3070 = vld [vmem:[%s285 + $0x7] sm:$0x1]
      %v3071 = vperm.slane %v3070, 0
      %v3072 = vmul.f32 %v3026, %v3071
      %v3073 = vmul.f32 %v3027, %v3071
      %v3074 = vmul.f32 %v3028, %v3071
      %v3075 = vmul.f32 %v3029, %v3071
      %v3076 = vmul.f32 %v3030, %v3071
      %v3077 = vmul.f32 %v3031, %v3071
      %v3078 = vadd.f32 %v3064, %v3072
      %v3079 = vadd.f32 %v3065, %v3073
      %v3080 = vadd.f32 %v3066, %v3074
      %v3081 = vadd.f32 %v3067, %v3075
      %v3082 = vadd.f32 %v3068, %v3076
      %v3083 = vadd.f32 %v3069, %v3077
      %v3084 = vld [vmem:[%s312 + $0x7] sm:$0x1]
      %v3085 = vperm.slane %v3084, 0
      %v3086 = vmul.f32 %v3028, %v3085
      %v3087 = vmul.f32 %v3029, %v3085
      %v3088 = vmul.f32 %v3030, %v3085
      %v3089 = vmul.f32 %v3031, %v3085
      %v3090 = vmul.f32 %v3032, %v3085
      %v3091 = vmul.f32 %v3033, %v3085
      %v3092 = vadd.f32 %v3078, %v3086
      %v3093 = vadd.f32 %v3079, %v3087
      %v3094 = vadd.f32 %v3080, %v3088
      %v3095 = vadd.f32 %v3081, %v3089
      %v3096 = vadd.f32 %v3082, %v3090
      %v3097 = vadd.f32 %v3083, %v3091
      %v3098 = vld [vmem:[%s339 + $0x7] sm:$0x1]
      %v3099 = vperm.slane %v3098, 0
      %v3100 = vmul.f32 %v3030, %v3099
      %v3101 = vmul.f32 %v3031, %v3099
      %v3102 = vmul.f32 %v3032, %v3099
      %v3103 = vmul.f32 %v3033, %v3099
      %v3104 = vmul.f32 %v3034, %v3099
      %v3105 = vmul.f32 %v3035, %v3099
      %v3106 = vadd.f32 %v3092, %v3100
      %v3107 = vadd.f32 %v3093, %v3101
      %v3108 = vadd.f32 %v3094, %v3102
      %v3109 = vadd.f32 %v3095, %v3103
      %v3110 = vadd.f32 %v3096, %v3104
      %v3111 = vadd.f32 %v3097, %v3105
      %v3112 = vld [vmem:[%s366 + $0x7] sm:$0x1]
      %v3113 = vperm.slane %v3112, 0
      %v3114 = vmul.f32 %v3032, %v3113
      %v3115 = vmul.f32 %v3033, %v3113
      %v3116 = vmul.f32 %v3034, %v3113
      %v3117 = vmul.f32 %v3035, %v3113
      %v3118 = vmul.f32 %v3036, %v3113
      %v3119 = vmul.f32 %v3037, %v3113
      %v3120 = vadd.f32 %v3106, %v3114
      %v3121 = vadd.f32 %v3107, %v3115
      %v3122 = vadd.f32 %v3108, %v3116
      %v3123 = vadd.f32 %v3109, %v3117
      %v3124 = vadd.f32 %v3110, %v3118
      %v3125 = vadd.f32 %v3111, %v3119
      %v3126 = vld [vmem:[%s393 + $0x7] sm:$0x1]
      %v3127 = vperm.slane %v3126, 0
      %v3128 = vmul.f32 %v3034, %v3127
      %v3129 = vmul.f32 %v3035, %v3127
      %v3130 = vmul.f32 %v3036, %v3127
      %v3131 = vmul.f32 %v3037, %v3127
      %v3132 = vmul.f32 %v3038, %v3127
      %v3133 = vmul.f32 %v3039, %v3127
      %v3134 = vadd.f32 %v3120, %v3128
      %v3135 = vadd.f32 %v3121, %v3129
      %v3136 = vadd.f32 %v3122, %v3130
      %v3137 = vadd.f32 %v3123, %v3131
      %v3138 = vadd.f32 %v3124, %v3132
      %v3139 = vadd.f32 %v3125, %v3133
      %v3140 = vld [vmem:[%s420 + $0x7] sm:$0x1]
      %v3141 = vperm.slane %v3140, 0
      %v3142 = vmul.f32 %v3036, %v3141
      %v3143 = vmul.f32 %v3037, %v3141
      %v3144 = vmul.f32 %v3038, %v3141
      %v3145 = vmul.f32 %v3039, %v3141
      %v3146 = vmul.f32 %v3040, %v3141
      %v3147 = vmul.f32 %v3041, %v3141
      %v3148 = vadd.f32 %v3134, %v3142
      %v3149 = vadd.f32 %v3135, %v3143
      %v3150 = vadd.f32 %v3136, %v3144
      %v3151 = vadd.f32 %v3137, %v3145
      %v3152 = vadd.f32 %v3138, %v3146
      %v3153 = vadd.f32 %v3139, %v3147
      %s3154 = scalar_lea.vmem %s205, 96
      %3155 = vst [vmem:[%s3154] sm:$0xff] %v3148
      %3156 = vst [vmem:[%s3154 + $0x8] sm:$0x1] %v3149
      %3157 = vst [vmem:[%s3154 + $0x10] sm:$0xff] %v3150
      %3158 = vst [vmem:[%s3154 + $0x18] sm:$0x1] %v3151
      %3159 = vst [vmem:[%s3154 + $0x20] sm:$0xff] %v3152
      %3160 = vst [vmem:[%s3154 + $0x28] sm:$0x1] %v3153
      %p3161 = scmp.lt.s32.totalorder %s17, 1
      %s3162 = scalar_select %p3161, %s17, 1
      %p3163 = scmp.lt.s32.totalorder %s18, 0
      %s3164 = scalar_select %p3163, %s18, 0
      %s3165 = smul.addr %s3162, 18
      %s3166 = sadd.s32 %s3164, %s3165
      %s3167 = smul.addr %s3166, 8
      %s3168 = scalar_lea.vmem %s2, %s3167
      // Predicated region
      $region29: #{_irca_xcorr_impl.1} parent=27 // pred_check
        %p3169 = pneg %p101
      $region30: #{_irca_xcorr_impl.1} parent=27 // pred_check_branch
        %3171 = sbr.rel (%p3169) target = $region32
      $region31: #{_irca_xcorr_impl.1} parent=27 // pred_region
        _
      $region32: #{_irca_xcorr_impl.1} parent=27 // pred_fallthru
        _
    $region28: #{_irca_xcorr_impl.1} parent=5 // pred_fallthru
      _
    %p3172 = scmp.le.s32.totalorder 2, %s8
    // Predicated region
    $region33: #{_irca_xcorr_impl.1} parent=5 // pred_check
      %p3173 = pneg %p3172
    $region34: #{_irca_xcorr_impl.1} parent=5 // pred_check_branch
      %3175 = sbr.rel (%p3173) target = $region36
    $region35: #{_irca_xcorr_impl.1} parent=5 // pred_region
      %s3176 = ssub.s32 %s8, 2
      // Predicated region
      $region37: #{_irca_xcorr_impl.1} parent=35 // pred_check
        %p3177 = pneg %p107
      $region38: #{_irca_xcorr_impl.1} parent=35 // pred_check_branch
        %3179 = sbr.rel (%p3177) target = $region40
      $region39: #{_irca_xcorr_impl.1} parent=35 // pred_region
        %p3180 = scmp.lt.s32.totalorder %s19, 1
        %s3181 = scalar_select %p3180, %s19, 1
        %p3182 = scmp.lt.s32.totalorder %s20, 0
        %s3183 = scalar_select %p3182, %s20, 0
        %s3184 = smul.addr %s3181, 18
        %s3185 = sadd.s32 %s3183, %s3184
        %s3186 = smul.addr %s3185, 8
        %s3187 = scalar_lea.vmem %s2, %s3186
      $region40: #{_irca_xcorr_impl.1} parent=35 // pred_fallthru
        _
    $region36: #{_irca_xcorr_impl.1} parent=5 // pred_fallthru
      _
  $region6: #{_irca_xcorr_impl.1} parent=0 // loop_footer
    %s12 = sadd.s32 1, %s8
  $region7: #{_irca_xcorr_impl.1} parent=0 // loop_footer_branch
    %7 = sbr.rel target = $region3
  $region8: #{_irca_xcorr_impl.1} parent=0 // loop_exit
    _

</llo_original>
